<compile_context>
chip_gen: v5e
topology: v5e:2x2
jax: 0.10.0
libtpu: 0.0.40
codegen_flags: <defaults>
</compile_context>

<pallas_src>
import functools

import jax
import jax.numpy as jnp
from jax import lax
from jax.experimental import pallas as pl
from jax.experimental.pallas import tpu as pltpu


def _edge_enhance_kernel(Wp, W, x_ref, h_ref, w1_ref, w2_ref, w3_ref, b_ref,
                         out_ref, pad_ref):
    """One (batch, H-strip) tile per grid step.

    x_ref  : (TH*Wp, C)   strip rows, fused q = r*Wp + w, cols [W, Wp) are zero
    h_ref  : (4*Wp, C)    halo rows [h0-2, h0-1, h0+TH, h0+TH+1] (zero if OOB)
    w1_ref : (9, Cin, Cout) dense 3x3 taps, BN1 scale folded (f32 or bf16)
    w2_ref : (9, C)       depthwise 3x3 taps, BN2 scale folded (f32)
    w3_ref : (Cin, Cout)  1x1 conv, BN3 scale folded (f32 or bf16)
    b_ref  : (8, C)       rows = [b1, b2, b3', 0...]
    out_ref: (TH*Wp, C)   output in the fused layout (wrapper crops pad cols)
    pad_ref: (16 + (TH+4)*Wp, C) f32 scratch: padded x, then padded y1
    """
    BASE = 8                                  # top zero region, sublane aligned
    C = x_ref.shape[-1]
    r_out = x_ref.shape[0]                    # TH * Wp
    th = r_out // Wp
    r1 = r_out + 2 * Wp                       # y1 rows: strip + 1 halo row/side
    cdt = w1_ref.dtype                        # MXU operand dtype (f32 or bf16)

    s = pl.program_id(1)
    last = pl.num_programs(1) - 1

    # ---- assemble the zero-padded strip image in scratch --------------------
    pad_ref[pl.ds(0, BASE), :] = jnp.zeros((BASE, C), jnp.float32)
    pad_ref[pl.ds(BASE, 2 * Wp), :] = h_ref[pl.ds(0, 2 * Wp), :]          # top halo
    pad_ref[pl.ds(BASE + 2 * Wp, r_out), :] = x_ref[...]                  # strip
    pad_ref[pl.ds(BASE + 2 * Wp + r_out, 2 * Wp), :] = h_ref[pl.ds(2 * Wp, 2 * Wp), :]

    b = b_ref[...]                            # (8, C)
    w2 = w2_ref[...]                          # (9, C)

    # ---- conv1: dense 3x3 as 9 contiguous-slice matmuls (BN1 folded) --------
    def x_tap(dy, dx):
        return pad_ref[pl.ds(BASE - 1 + dy * Wp + dx, r1), :].astype(cdt)

    acc1 = jnp.dot(x_tap(0, 0), w1_ref[0], preferred_element_type=jnp.float32)
    for t in range(1, 9):
        dy, dx = divmod(t, 3)
        acc1 = acc1 + jnp.dot(x_tap(dy, dx), w1_ref[t],
                              preferred_element_type=jnp.float32)
    y1 = jnp.maximum(acc1 + b[0:1], 0.0)

    # Zero the pad columns (w >= W) so conv2's left/right taps read zeros; the
    # select also discards the single one-past-end tap read (possible NaNs).
    col = lax.broadcasted_iota(jnp.int32, (r1, 1), 0) % Wp
    y1 = jnp.where(col < W, y1, 0.0)

    # ---- re-pad y1 over the (no longer needed) x region of the scratch ------
    pad_ref[pl.ds(BASE, r1), :] = y1

    # First / last strip: the y1 halo row outside the image is conv2 padding.
    @pl.when(s == 0)
    def _():
        pad_ref[pl.ds(BASE, Wp), :] = jnp.zeros((Wp, C), jnp.float32)

    @pl.when(s == last)
    def _():
        pad_ref[pl.ds(BASE + (th + 1) * Wp, Wp), :] = jnp.zeros((Wp, C), jnp.float32)

    # ---- conv2: depthwise 3x3 on the VPU (BN2 folded) ------------------------
    def y1_tap(dy, dx):
        return pad_ref[pl.ds(BASE - 1 + dy * Wp + dx, r_out), :]

    acc2 = y1_tap(0, 0) * w2[0:1]
    for t in range(1, 9):
        dy, dx = divmod(t, 3)
        acc2 = acc2 + y1_tap(dy, dx) * w2[t:t + 1]
    y2 = jnp.maximum(acc2 + b[1:2], 0.0)

    # ---- conv3 (1x1) + folded BN3 + residual (re-read from input block) -----
    y3 = jnp.dot(y2.astype(cdt), w3_ref[...],
                 preferred_element_type=jnp.float32) + b[2:3]
    out_ref[...] = jnp.maximum(y3 + x_ref[...], 0.0)


def _round_up(x, m):
    return ((x + m - 1) // m) * m


def _vmem_bytes(th, wp, c):
    """Per-step VMEM footprint estimate (f32, double-buffered I/O + scratch)."""
    r_in = (th + 4) * wp
    r1 = (th + 2) * wp
    r_out = th * wp
    io = 2 * (r_in + 4 * wp + r_out) * c * 4
    wts = 2 * (9 * c * c + 9 * c + c * c + 8 * c) * 4
    scratch = (16 + r_in) * c * 4
    temps = 5 * r1 * c * 4                    # live f32 acc / y temporaries
    return io + wts + scratch + temps


def _pick_strip_h(H, wp, c, budget=40 << 20):
    """Largest divisor of H whose strip footprint fits the budget (v7x-safe)."""
    for th in sorted((d for d in range(1, H + 1) if H % d == 0), reverse=True):
        if _vmem_bytes(th, wp, c) <= budget:
            return th
    return 1


def edge_aware_feature_enhancement(x_nchw, params, *, strip_h=None,
                                   use_bf16_matmul=False):
    """NCHW in / NCHW out, matching the PyTorch module with eval-mode BN."""
    N, C, H, W = x_nchw.shape
    Wp = _round_up(W + 2, 8)          # >= 2 zero pad cols, sublane-aligned rows

    if strip_h is None:
        strip_h = _pick_strip_h(H, Wp, C)
    if H % strip_h != 0:
        raise ValueError(f"strip_h={strip_h} must divide H={H}")
    TH, S = strip_h, H // strip_h

    # ---- fold eval-mode BN into the conv weights / biases -------------------
    eps1 = 1e-3    # ConvBNReLU: BatchNorm2d(..., eps=0.001)
    eps3 = 1e-5    # final BatchNorm2d default eps

    def fold_bn(gamma, beta, mean, var, eps):
        scale = gamma * lax.rsqrt(var + eps)
        return scale, beta - mean * scale

    s1, b1 = fold_bn(params['bn1_gamma'], params['bn1_beta'],
                     params['bn1_mean'], params['bn1_var'], eps1)
    s2, b2 = fold_bn(params['bn2_gamma'], params['bn2_beta'],
                     params['bn2_mean'], params['bn2_var'], eps1)
    s3, t3 = fold_bn(params['bn3_gamma'], params['bn3_beta'],
                     params['bn3_mean'], params['bn3_var'], eps3)

    mm_dtype = jnp.bfloat16 if use_bf16_matmul else jnp.float32
    # PyTorch OIHW -> tap-major matmul / per-channel forms, BN scales folded in.
    w1 = (jnp.transpose(params['w1'], (2, 3, 1, 0)) * s1).reshape(9, C, C)
    w2 = jnp.transpose(params['w2'][:, 0], (1, 2, 0)).reshape(9, C) * s2
    w3 = jnp.transpose(params['w3'][:, :, 0, 0]) * s3
    b3 = params['b3'] * s3 + t3
    w1 = w1.astype(mm_dtype)
    w3 = w3.astype(mm_dtype)
    bias = jnp.concatenate([jnp.stack([b1, b2, b3], axis=0),
                            jnp.zeros((5, C), jnp.float32)], axis=0)   # (8, C)

    # ---- lay the input out as padded fused rows + per-strip halo rows -------
    x = jnp.transpose(x_nchw, (0, 2, 3, 1)).astype(jnp.float32)        # NHWC
    x = jnp.pad(x, ((0, 0), (0, 0), (0, Wp - W), (0, 0)))              # (N,H,Wp,C)
    x_main = x.reshape(N, S, TH * Wp, C)
    z2 = jnp.zeros((N, 2, Wp, C), jnp.float32)
    xh = jnp.concatenate([z2, x, z2], axis=1)                          # (N,H+4,Wp,C)
    halos = [jnp.concatenate([xh[:, s * TH:s * TH + 2],
                              xh[:, s * TH + TH + 2:s * TH + TH + 4]], axis=1)
             for s in range(S)]
    x_halo = jnp.stack(halos, axis=1).reshape(N, S, 4 * Wp, C)

    vmem_limit = int(min(96 << 20, max(32 << 20, int(1.5 * _vmem_bytes(TH, Wp, C)))))

    kernel = functools.partial(_edge_enhance_kernel, Wp, W)
    out = pl.pallas_call(
        kernel,
        out_shape=jax.ShapeDtypeStruct((N, S, TH * Wp, C), jnp.float32),
        grid=(N, S),
        in_specs=[
            pl.BlockSpec((None, None, TH * Wp, C), lambda n, s: (n, s, 0, 0)),
            pl.BlockSpec((None, None, 4 * Wp, C), lambda n, s: (n, s, 0, 0)),
            pl.BlockSpec((9, C, C), lambda n, s: (0, 0, 0)),
            pl.BlockSpec((9, C), lambda n, s: (0, 0)),
            pl.BlockSpec((C, C), lambda n, s: (0, 0)),
            pl.BlockSpec((8, C), lambda n, s: (0, 0)),
        ],
        out_specs=pl.BlockSpec((None, None, TH * Wp, C), lambda n, s: (n, s, 0, 0)),
        scratch_shapes=[pltpu.VMEM((16 + (TH + 4) * Wp, C), jnp.float32)],
        compiler_params=pltpu.CompilerParams(
            dimension_semantics=("parallel", "parallel"),
            vmem_limit_bytes=vmem_limit),
    )(x_main, x_halo, w1, w2, w3, bias)

    out = out.reshape(N, H, Wp, C)[:, :, :W, :]     # drop the pad columns
    return jnp.transpose(out, (0, 3, 1, 2))         # back to NCHW


def _reference_forward(x, p):
    """Pure-JAX reference (XLA convs), NCHW, eval-mode BN."""
    eps1, eps3 = 1e-3, 1e-5
    dn = ('NCHW', 'OIHW', 'NCHW')

    def bn(y, g, b, m, v, eps):
        sh = (1, -1, 1, 1)
        return (y - m.reshape(sh)) * (g * lax.rsqrt(v + eps)).reshape(sh) \
            + b.reshape(sh)

    y = lax.conv_general_dilated(x, p['w1'], (1, 1), ((1, 1), (1, 1)),
                                 dimension_numbers=dn)
    y = jnp.maximum(bn(y, p['bn1_gamma'], p['bn1_beta'],
                       p['bn1_mean'], p['bn1_var'], eps1), 0.0)
    y = lax.conv_general_dilated(y, p['w2'], (1, 1), ((1, 1), (1, 1)),
                                 dimension_numbers=dn,
                                 feature_group_count=x.shape[1])
    y = jnp.maximum(bn(y, p['bn2_gamma'], p['bn2_beta'],
                       p['bn2_mean'], p['bn2_var'], eps1), 0.0)
    y = lax.conv_general_dilated(y, p['w3'], (1, 1), ((0, 0), (0, 0)),
                                 dimension_numbers=dn)
    y = y + p['b3'].reshape(1, -1, 1, 1)
    y = bn(y, p['bn3_gamma'], p['bn3_beta'], p['bn3_mean'], p['bn3_var'], eps3)
    return jnp.maximum(y + x, 0.0)


def _make_params(key, C):
    ks = jax.random.split(key, 16)
    u = lambda k, shape: jax.random.uniform(k, shape, jnp.float32, 0.5, 1.5)
    n = lambda k, shape, s: s * jax.random.normal(k, shape, jnp.float32)
    return dict(
        w1=n(ks[0], (C, C, 3, 3), 0.2),
        w2=n(ks[1], (C, 1, 3, 3), 0.2),
        w3=n(ks[2], (C, C, 1, 1), 0.2),
        b3=n(ks[3], (C,), 0.1),
        bn1_gamma=u(ks[4], (C,)), bn1_beta=n(ks[5], (C,), 0.1),
        bn1_mean=n(ks[6], (C,), 0.1), bn1_var=u(ks[7], (C,)),
        bn2_gamma=u(ks[8], (C,)), bn2_beta=n(ks[9], (C,), 0.1),
        bn2_mean=n(ks[10], (C,), 0.1), bn2_var=u(ks[11], (C,)),
        bn3_gamma=u(ks[12], (C,)), bn3_beta=n(ks[13], (C,), 0.1),
        bn3_mean=n(ks[14], (C,), 0.1), bn3_var=u(ks[15], (C,)),
    )


if __name__ == "__main__":
    key = jax.random.PRNGKey(0)
    k_param, k_x = jax.random.split(key)
    N, C, H, W = 2, 4, 16, 16
    params = _make_params(k_param, C)
    x = jax.random.normal(k_x, (N, C, H, W), jnp.float32)

    ref = jax.block_until_ready(_reference_forward(x, params))

    # f32 MXU path, explicit multi-strip tiling (2 strips of 8 rows).
    out = jax.block_until_ready(
        edge_aware_feature_enhancement(x, params, strip_h=8))
    if not jnp.allclose(out, ref, rtol=1e-4, atol=1e-4):
        raise AssertionError(
            f"f32/strip=8 mismatch, max_err={float(jnp.max(jnp.abs(out - ref)))}")

    # f32 path with auto strip pick (single strip at this tiny shape).
    out2 = jax.block_until_ready(edge_aware_feature_enhancement(x, params))
    if not jnp.allclose(out2, ref, rtol=1e-4, atol=1e-4):
        raise AssertionError(
            f"f32/auto mismatch, max_err={float(jnp.max(jnp.abs(out2 - ref)))}")

    # bf16 MXU-operand path (f32 accumulation) — looser tolerance.
    out3 = jax.block_until_ready(
        edge_aware_feature_enhancement(x, params, strip_h=4, use_bf16_matmul=True))
    if not jnp.allclose(out3, ref, rtol=5e-2, atol=5e-2):
        raise AssertionError(
            f"bf16/strip=4 mismatch, max_err={float(jnp.max(jnp.abs(out3 - ref)))}")

    print("KERNEL_OK")
</pallas_src>

<mosaic_0001>
module attributes {stable_mosaic.version = 11 : i64} {
  func.func @_edge_enhance_kernel(%arg0: i32, %arg1: i32, %arg2: memref<1x1x192x4xf32, #tpu.memory_space<vmem>>, %arg3: memref<1x1x96x4xf32, #tpu.memory_space<vmem>>, %arg4: memref<9x4x4xf32, #tpu.memory_space<vmem>>, %arg5: memref<9x4xf32, #tpu.memory_space<vmem>>, %arg6: memref<4x4xf32, #tpu.memory_space<vmem>>, %arg7: memref<8x4xf32, #tpu.memory_space<vmem>>, %arg8: memref<1x1x192x4xf32, #tpu.memory_space<vmem>>, %arg9: memref<304x4xf32, #tpu.memory_space<vmem>>) attributes {dimension_semantics = [#tpu.dimension_semantics<parallel>, #tpu.dimension_semantics<parallel>], iteration_bounds = array<i64: 2, 2>, scalar_prefetch = 0 : i64, scratch_operands = 1 : i64, tpu.core_type = #tpu.core_type<tc>, window_params = [{transform_indices = @transform_0, window_bounds = array<i64: 1, 1, 192, 4>}, {transform_indices = @transform_1, window_bounds = array<i64: 1, 1, 96, 4>}, {pipeline_mode = #tpu.pipeline_mode<synchronous>, transform_indices = @transform_2, window_bounds = array<i64: 9, 4, 4>}, {pipeline_mode = #tpu.pipeline_mode<synchronous>, transform_indices = @transform_3, window_bounds = array<i64: 9, 4>}, {pipeline_mode = #tpu.pipeline_mode<synchronous>, transform_indices = @transform_4, window_bounds = array<i64: 4, 4>}, {pipeline_mode = #tpu.pipeline_mode<synchronous>, transform_indices = @transform_5, window_bounds = array<i64: 8, 4>}, {transform_indices = @transform_6, window_bounds = array<i64: 1, 1, 192, 4>}]} {
    %cst = arith.constant 0.000000e+00 : f32
    %0 = vector.broadcast %cst : f32 to vector<8x4xf32>
    %c0 = arith.constant 0 : index
    %c0_0 = arith.constant 0 : index
    %1 = vector.load %arg9[%c0, %c0_0] : memref<304x4xf32, #tpu.memory_space<vmem>>, vector<8x4xf32>
    tpu.vector_store %arg9[%c0, %c0_0], %0 {strides = array<i32>} : memref<304x4xf32, #tpu.memory_space<vmem>>, vector<8x4xf32>,
    %c0_1 = arith.constant 0 : index
    %c0_2 = arith.constant 0 : index
    %c0_3 = arith.constant 0 : index
    %c0_4 = arith.constant 0 : index
    %2 = vector.load %arg3[%c0_1, %c0_2, %c0_3, %c0_4] : memref<1x1x96x4xf32, #tpu.memory_space<vmem>>, vector<1x1x48x4xf32>
    %3 = vector.shape_cast %2 : vector<1x1x48x4xf32> to vector<48x4xf32>
    %c8 = arith.constant 8 : index
    %c0_5 = arith.constant 0 : index
    %4 = vector.load %arg9[%c8, %c0_5] : memref<304x4xf32, #tpu.memory_space<vmem>>, vector<48x4xf32>
    tpu.vector_store %arg9[%c8, %c0_5], %3 {strides = array<i32>} : memref<304x4xf32, #tpu.memory_space<vmem>>, vector<48x4xf32>,
    %c0_6 = arith.constant 0 : index
    %c0_7 = arith.constant 0 : index
    %c0_8 = arith.constant 0 : index
    %c0_9 = arith.constant 0 : index
    %5 = vector.load %arg2[%c0_6, %c0_7, %c0_8, %c0_9] : memref<1x1x192x4xf32, #tpu.memory_space<vmem>>, vector<1x1x192x4xf32>
    %6 = vector.shape_cast %5 : vector<1x1x192x4xf32> to vector<192x4xf32>
    %c56 = arith.constant 56 : index
    %c0_10 = arith.constant 0 : index
    %7 = vector.load %arg9[%c56, %c0_10] : memref<304x4xf32, #tpu.memory_space<vmem>>, vector<192x4xf32>
    tpu.vector_store %arg9[%c56, %c0_10], %6 {strides = array<i32>} : memref<304x4xf32, #tpu.memory_space<vmem>>, vector<192x4xf32>,
    %c0_11 = arith.constant 0 : index
    %c0_12 = arith.constant 0 : index
    %c48 = arith.constant 48 : index
    %c0_13 = arith.constant 0 : index
    %8 = vector.load %arg3[%c0_11, %c0_12, %c48, %c0_13] : memref<1x1x96x4xf32, #tpu.memory_space<vmem>>, vector<1x1x48x4xf32>
    %9 = vector.shape_cast %8 : vector<1x1x48x4xf32> to vector<48x4xf32>
    %c248 = arith.constant 248 : index
    %c0_14 = arith.constant 0 : index
    %10 = vector.load %arg9[%c248, %c0_14] : memref<304x4xf32, #tpu.memory_space<vmem>>, vector<48x4xf32>
    tpu.vector_store %arg9[%c248, %c0_14], %9 {strides = array<i32>} : memref<304x4xf32, #tpu.memory_space<vmem>>, vector<48x4xf32>,
    %c0_15 = arith.constant 0 : index
    %c0_16 = arith.constant 0 : index
    %11 = vector.load %arg7[%c0_15, %c0_16] : memref<8x4xf32, #tpu.memory_space<vmem>>, vector<8x4xf32>
    %c0_17 = arith.constant 0 : index
    %c0_18 = arith.constant 0 : index
    %12 = vector.load %arg5[%c0_17, %c0_18] : memref<9x4xf32, #tpu.memory_space<vmem>>, vector<9x4xf32>
    %c7 = arith.constant 7 : index
    %c0_19 = arith.constant 0 : index
    %13 = vector.load %arg9[%c7, %c0_19] : memref<304x4xf32, #tpu.memory_space<vmem>>, vector<240x4xf32>
    %c0_20 = arith.constant 0 : index
    %c0_21 = arith.constant 0 : index
    %c0_22 = arith.constant 0 : index
    %14 = vector.load %arg4[%c0_20, %c0_21, %c0_22] : memref<9x4x4xf32, #tpu.memory_space<vmem>>, vector<1x4x4xf32>
    %15 = vector.shape_cast %14 : vector<1x4x4xf32> to vector<4x4xf32>
    %cst_23 = arith.constant dense<0.000000e+00> : vector<240x4xf32>
    %16 = tpu.matmul %13, %15, %cst_23 {dimension_numbers = #tpu.dot_dimension_numbers<[1], [0], [0], [1], [0, 0, 1, 1], [], []>} : vector<240x4xf32>, vector<4x4xf32>, vector<240x4xf32> -> vector<240x4xf32>
    %c8_24 = arith.constant 8 : index
    %c0_25 = arith.constant 0 : index
    %17 = vector.load %arg9[%c8_24, %c0_25] : memref<304x4xf32, #tpu.memory_space<vmem>>, vector<240x4xf32>
    %c1 = arith.constant 1 : index
    %c0_26 = arith.constant 0 : index
    %c0_27 = arith.constant 0 : index
    %18 = vector.load %arg4[%c1, %c0_26, %c0_27] : memref<9x4x4xf32, #tpu.memory_space<vmem>>, vector<1x4x4xf32>
    %19 = vector.shape_cast %18 : vector<1x4x4xf32> to vector<4x4xf32>
    %cst_28 = arith.constant dense<0.000000e+00> : vector<240x4xf32>
    %20 = tpu.matmul %17, %19, %cst_28 {dimension_numbers = #tpu.dot_dimension_numbers<[1], [0], [0], [1], [0, 0, 1, 1], [], []>} : vector<240x4xf32>, vector<4x4xf32>, vector<240x4xf32> -> vector<240x4xf32>
    %21 = arith.addf %16, %20 : vector<240x4xf32>
    %c9 = arith.constant 9 : index
    %c0_29 = arith.constant 0 : index
    %22 = vector.load %arg9[%c9, %c0_29] : memref<304x4xf32, #tpu.memory_space<vmem>>, vector<240x4xf32>
    %c2 = arith.constant 2 : index
    %c0_30 = arith.constant 0 : index
    %c0_31 = arith.constant 0 : index
    %23 = vector.load %arg4[%c2, %c0_30, %c0_31] : memref<9x4x4xf32, #tpu.memory_space<vmem>>, vector<1x4x4xf32>
    %24 = vector.shape_cast %23 : vector<1x4x4xf32> to vector<4x4xf32>
    %cst_32 = arith.constant dense<0.000000e+00> : vector<240x4xf32>
    %25 = tpu.matmul %22, %24, %cst_32 {dimension_numbers = #tpu.dot_dimension_numbers<[1], [0], [0], [1], [0, 0, 1, 1], [], []>} : vector<240x4xf32>, vector<4x4xf32>, vector<240x4xf32> -> vector<240x4xf32>
    %26 = arith.addf %21, %25 : vector<240x4xf32>
    %c31 = arith.constant 31 : index
    %c0_33 = arith.constant 0 : index
    %27 = vector.load %arg9[%c31, %c0_33] : memref<304x4xf32, #tpu.memory_space<vmem>>, vector<240x4xf32>
    %c3 = arith.constant 3 : index
    %c0_34 = arith.constant 0 : index
    %c0_35 = arith.constant 0 : index
    %28 = vector.load %arg4[%c3, %c0_34, %c0_35] : memref<9x4x4xf32, #tpu.memory_space<vmem>>, vector<1x4x4xf32>
    %29 = vector.shape_cast %28 : vector<1x4x4xf32> to vector<4x4xf32>
    %cst_36 = arith.constant dense<0.000000e+00> : vector<240x4xf32>
    %30 = tpu.matmul %27, %29, %cst_36 {dimension_numbers = #tpu.dot_dimension_numbers<[1], [0], [0], [1], [0, 0, 1, 1], [], []>} : vector<240x4xf32>, vector<4x4xf32>, vector<240x4xf32> -> vector<240x4xf32>
    %31 = arith.addf %26, %30 : vector<240x4xf32>
    %c32 = arith.constant 32 : index
    %c0_37 = arith.constant 0 : index
    %32 = vector.load %arg9[%c32, %c0_37] : memref<304x4xf32, #tpu.memory_space<vmem>>, vector<240x4xf32>
    %c4 = arith.constant 4 : index
    %c0_38 = arith.constant 0 : index
    %c0_39 = arith.constant 0 : index
    %33 = vector.load %arg4[%c4, %c0_38, %c0_39] : memref<9x4x4xf32, #tpu.memory_space<vmem>>, vector<1x4x4xf32>
    %34 = vector.shape_cast %33 : vector<1x4x4xf32> to vector<4x4xf32>
    %cst_40 = arith.constant dense<0.000000e+00> : vector<240x4xf32>
    %35 = tpu.matmul %32, %34, %cst_40 {dimension_numbers = #tpu.dot_dimension_numbers<[1], [0], [0], [1], [0, 0, 1, 1], [], []>} : vector<240x4xf32>, vector<4x4xf32>, vector<240x4xf32> -> vector<240x4xf32>
    %36 = arith.addf %31, %35 : vector<240x4xf32>
    %c33 = arith.constant 33 : index
    %c0_41 = arith.constant 0 : index
    %37 = vector.load %arg9[%c33, %c0_41] : memref<304x4xf32, #tpu.memory_space<vmem>>, vector<240x4xf32>
    %c5 = arith.constant 5 : index
    %c0_42 = arith.constant 0 : index
    %c0_43 = arith.constant 0 : index
    %38 = vector.load %arg4[%c5, %c0_42, %c0_43] : memref<9x4x4xf32, #tpu.memory_space<vmem>>, vector<1x4x4xf32>
    %39 = vector.shape_cast %38 : vector<1x4x4xf32> to vector<4x4xf32>
    %cst_44 = arith.constant dense<0.000000e+00> : vector<240x4xf32>
    %40 = tpu.matmul %37, %39, %cst_44 {dimension_numbers = #tpu.dot_dimension_numbers<[1], [0], [0], [1], [0, 0, 1, 1], [], []>} : vector<240x4xf32>, vector<4x4xf32>, vector<240x4xf32> -> vector<240x4xf32>
    %41 = arith.addf %36, %40 : vector<240x4xf32>
    %c55 = arith.constant 55 : index
    %c0_45 = arith.constant 0 : index
    %42 = vector.load %arg9[%c55, %c0_45] : memref<304x4xf32, #tpu.memory_space<vmem>>, vector<240x4xf32>
    %c6 = arith.constant 6 : index
    %c0_46 = arith.constant 0 : index
    %c0_47 = arith.constant 0 : index
    %43 = vector.load %arg4[%c6, %c0_46, %c0_47] : memref<9x4x4xf32, #tpu.memory_space<vmem>>, vector<1x4x4xf32>
    %44 = vector.shape_cast %43 : vector<1x4x4xf32> to vector<4x4xf32>
    %cst_48 = arith.constant dense<0.000000e+00> : vector<240x4xf32>
    %45 = tpu.matmul %42, %44, %cst_48 {dimension_numbers = #tpu.dot_dimension_numbers<[1], [0], [0], [1], [0, 0, 1, 1], [], []>} : vector<240x4xf32>, vector<4x4xf32>, vector<240x4xf32> -> vector<240x4xf32>
    %46 = arith.addf %41, %45 : vector<240x4xf32>
    %c56_49 = arith.constant 56 : index
    %c0_50 = arith.constant 0 : index
    %47 = vector.load %arg9[%c56_49, %c0_50] : memref<304x4xf32, #tpu.memory_space<vmem>>, vector<240x4xf32>
    %c7_51 = arith.constant 7 : index
    %c0_52 = arith.constant 0 : index
    %c0_53 = arith.constant 0 : index
    %48 = vector.load %arg4[%c7_51, %c0_52, %c0_53] : memref<9x4x4xf32, #tpu.memory_space<vmem>>, vector<1x4x4xf32>
    %49 = vector.shape_cast %48 : vector<1x4x4xf32> to vector<4x4xf32>
    %cst_54 = arith.constant dense<0.000000e+00> : vector<240x4xf32>
    %50 = tpu.matmul %47, %49, %cst_54 {dimension_numbers = #tpu.dot_dimension_numbers<[1], [0], [0], [1], [0, 0, 1, 1], [], []>} : vector<240x4xf32>, vector<4x4xf32>, vector<240x4xf32> -> vector<240x4xf32>
    %51 = arith.addf %46, %50 : vector<240x4xf32>
    %c57 = arith.constant 57 : index
    %c0_55 = arith.constant 0 : index
    %52 = vector.load %arg9[%c57, %c0_55] : memref<304x4xf32, #tpu.memory_space<vmem>>, vector<240x4xf32>
    %c8_56 = arith.constant 8 : index
    %c0_57 = arith.constant 0 : index
    %c0_58 = arith.constant 0 : index
    %53 = vector.load %arg4[%c8_56, %c0_57, %c0_58] : memref<9x4x4xf32, #tpu.memory_space<vmem>>, vector<1x4x4xf32>
    %54 = vector.shape_cast %53 : vector<1x4x4xf32> to vector<4x4xf32>
    %cst_59 = arith.constant dense<0.000000e+00> : vector<240x4xf32>
    %55 = tpu.matmul %52, %54, %cst_59 {dimension_numbers = #tpu.dot_dimension_numbers<[1], [0], [0], [1], [0, 0, 1, 1], [], []>} : vector<240x4xf32>, vector<4x4xf32>, vector<240x4xf32> -> vector<240x4xf32>
    %56 = arith.addf %51, %55 : vector<240x4xf32>
    %57 = vector.extract_strided_slice %11 {offsets = [0, 0], sizes = [1, 4], strides = [1, 1]} : vector<8x4xf32> to vector<1x4xf32>
    %58 = vector.broadcast %57 : vector<1x4xf32> to vector<240x4xf32>
    %59 = arith.addf %56, %58 : vector<240x4xf32>
    %cst_60 = arith.constant 0.000000e+00 : f32
    %60 = vector.broadcast %cst_60 : f32 to vector<240x4xf32>
    %61 = arith.maximumf %59, %60 : vector<240x4xf32>
    %62 = tpu.iota {dimensions = array<i32: 0>} : vector<240x1xi32>
    %c24_i32 = arith.constant 24 : i32
    %c0_i32 = arith.constant 0 : i32
    %63 = arith.cmpi eq, %c24_i32, %c0_i32 : i32
    %c1_i32 = arith.constant 1 : i32
    %64 = arith.select %63, %c1_i32, %c24_i32 : i32
    %65 = vector.broadcast %64 : i32 to vector<240x1xi32>
    %66 = arith.remsi %62, %65 : vector<240x1xi32>
    %c0_i32_61 = arith.constant 0 : i32
    %67 = vector.broadcast %c0_i32_61 : i32 to vector<240x1xi32>
    %68 = arith.cmpi ne, %66, %67 : vector<240x1xi32>
    %c0_i32_62 = arith.constant 0 : i32
    %69 = vector.broadcast %c0_i32_62 : i32 to vector<240x1xi32>
    %70 = arith.cmpi slt, %66, %69 : vector<240x1xi32>
    %c0_i32_63 = arith.constant 0 : i32
    %71 = arith.cmpi slt, %64, %c0_i32_63 : i32
    %72 = vector.broadcast %71 : i1 to vector<240x1xi1>
    %73 = vector.broadcast %72 : vector<240x1xi1> to vector<240x1xi1>
    %74 = arith.xori %70, %73 : vector<240x1xi1>
    %75 = arith.andi %74, %68 : vector<240x1xi1>
    %76 = vector.broadcast %64 : i32 to vector<240x1xi32>
    %77 = arith.addi %66, %76 : vector<240x1xi32>
    %78 = arith.select %75, %77, %66 : vector<240x1xi1>, vector<240x1xi32>
    %c16_i32 = arith.constant 16 : i32
    %79 = vector.broadcast %c16_i32 : i32 to vector<240x1xi32>
    %80 = arith.cmpi slt, %78, %79 : vector<240x1xi32>
    %cst_64 = arith.constant 0.000000e+00 : f32
    %81 = vector.shape_cast %80 : vector<240x1xi1> to vector<240x1xi1>
    %82 = vector.broadcast %81 : vector<240x1xi1> to vector<240x4xi1>
    %83 = vector.broadcast %cst_64 : f32 to vector<240x4xf32>
    %84 = arith.select %82, %61, %83 : vector<240x4xi1>, vector<240x4xf32>
    %c8_65 = arith.constant 8 : index
    %c0_66 = arith.constant 0 : index
    %85 = vector.load %arg9[%c8_65, %c0_66] : memref<304x4xf32, #tpu.memory_space<vmem>>, vector<240x4xf32>
    tpu.vector_store %arg9[%c8_65, %c0_66], %84 {strides = array<i32>} : memref<304x4xf32, #tpu.memory_space<vmem>>, vector<240x4xf32>,
    %c0_i32_67 = arith.constant 0 : i32
    %86 = arith.cmpi eq, %arg1, %c0_i32_67 : i32
    %87 = arith.extui %86 : i1 to i32
    %c0_i32_68 = arith.constant 0 : i32
    %88 = arith.cmpi ne, %87, %c0_i32_68 : i32
    scf.if %88 {
      %cst_102 = arith.constant 0.000000e+00 : f32
      %154 = vector.broadcast %cst_102 : f32 to vector<24x4xf32>
      %c8_103 = arith.constant 8 : index
      %c0_104 = arith.constant 0 : index
      %155 = vector.load %arg9[%c8_103, %c0_104] : memref<304x4xf32, #tpu.memory_space<vmem>>, vector<24x4xf32>
      tpu.vector_store %arg9[%c8_103, %c0_104], %154 {strides = array<i32>} : memref<304x4xf32, #tpu.memory_space<vmem>>, vector<24x4xf32>,
    } else {
    }
    %c1_i32_69 = arith.constant 1 : i32
    %89 = arith.cmpi eq, %arg1, %c1_i32_69 : i32
    %90 = arith.extui %89 : i1 to i32
    %c0_i32_70 = arith.constant 0 : i32
    %91 = arith.cmpi ne, %90, %c0_i32_70 : i32
    scf.if %91 {
      %cst_102 = arith.constant 0.000000e+00 : f32
      %154 = vector.broadcast %cst_102 : f32 to vector<24x4xf32>
      %c224 = arith.constant 224 : index
      %c0_103 = arith.constant 0 : index
      %155 = vector.load %arg9[%c224, %c0_103] : memref<304x4xf32, #tpu.memory_space<vmem>>, vector<24x4xf32>
      tpu.vector_store %arg9[%c224, %c0_103], %154 {strides = array<i32>} : memref<304x4xf32, #tpu.memory_space<vmem>>, vector<24x4xf32>,
    } else {
    }
    %c7_71 = arith.constant 7 : index
    %c0_72 = arith.constant 0 : index
    %92 = vector.load %arg9[%c7_71, %c0_72] : memref<304x4xf32, #tpu.memory_space<vmem>>, vector<192x4xf32>
    %93 = vector.extract_strided_slice %12 {offsets = [0, 0], sizes = [1, 4], strides = [1, 1]} : vector<9x4xf32> to vector<1x4xf32>
    %94 = vector.broadcast %93 : vector<1x4xf32> to vector<192x4xf32>
    %95 = arith.mulf %92, %94 : vector<192x4xf32>
    %c8_73 = arith.constant 8 : index
    %c0_74 = arith.constant 0 : index
    %96 = vector.load %arg9[%c8_73, %c0_74] : memref<304x4xf32, #tpu.memory_space<vmem>>, vector<192x4xf32>
    %97 = vector.extract_strided_slice %12 {offsets = [1, 0], sizes = [1, 4], strides = [1, 1]} : vector<9x4xf32> to vector<1x4xf32>
    %98 = vector.broadcast %97 : vector<1x4xf32> to vector<192x4xf32>
    %99 = arith.mulf %96, %98 : vector<192x4xf32>
    %100 = arith.addf %95, %99 : vector<192x4xf32>
    %c9_75 = arith.constant 9 : index
    %c0_76 = arith.constant 0 : index
    %101 = vector.load %arg9[%c9_75, %c0_76] : memref<304x4xf32, #tpu.memory_space<vmem>>, vector<192x4xf32>
    %102 = vector.extract_strided_slice %12 {offsets = [2, 0], sizes = [1, 4], strides = [1, 1]} : vector<9x4xf32> to vector<1x4xf32>
    %103 = vector.broadcast %102 : vector<1x4xf32> to vector<192x4xf32>
    %104 = arith.mulf %101, %103 : vector<192x4xf32>
    %105 = arith.addf %100, %104 : vector<192x4xf32>
    %c31_77 = arith.constant 31 : index
    %c0_78 = arith.constant 0 : index
    %106 = vector.load %arg9[%c31_77, %c0_78] : memref<304x4xf32, #tpu.memory_space<vmem>>, vector<192x4xf32>
    %107 = vector.extract_strided_slice %12 {offsets = [3, 0], sizes = [1, 4], strides = [1, 1]} : vector<9x4xf32> to vector<1x4xf32>
    %108 = vector.broadcast %107 : vector<1x4xf32> to vector<192x4xf32>
    %109 = arith.mulf %106, %108 : vector<192x4xf32>
    %110 = arith.addf %105, %109 : vector<192x4xf32>
    %c32_79 = arith.constant 32 : index
    %c0_80 = arith.constant 0 : index
    %111 = vector.load %arg9[%c32_79, %c0_80] : memref<304x4xf32, #tpu.memory_space<vmem>>, vector<192x4xf32>
    %112 = vector.extract_strided_slice %12 {offsets = [4, 0], sizes = [1, 4], strides = [1, 1]} : vector<9x4xf32> to vector<1x4xf32>
    %113 = vector.broadcast %112 : vector<1x4xf32> to vector<192x4xf32>
    %114 = arith.mulf %111, %113 : vector<192x4xf32>
    %115 = arith.addf %110, %114 : vector<192x4xf32>
    %c33_81 = arith.constant 33 : index
    %c0_82 = arith.constant 0 : index
    %116 = vector.load %arg9[%c33_81, %c0_82] : memref<304x4xf32, #tpu.memory_space<vmem>>, vector<192x4xf32>
    %117 = vector.extract_strided_slice %12 {offsets = [5, 0], sizes = [1, 4], strides = [1, 1]} : vector<9x4xf32> to vector<1x4xf32>
    %118 = vector.broadcast %117 : vector<1x4xf32> to vector<192x4xf32>
    %119 = arith.mulf %116, %118 : vector<192x4xf32>
    %120 = arith.addf %115, %119 : vector<192x4xf32>
    %c55_83 = arith.constant 55 : index
    %c0_84 = arith.constant 0 : index
    %121 = vector.load %arg9[%c55_83, %c0_84] : memref<304x4xf32, #tpu.memory_space<vmem>>, vector<192x4xf32>
    %122 = vector.extract_strided_slice %12 {offsets = [6, 0], sizes = [1, 4], strides = [1, 1]} : vector<9x4xf32> to vector<1x4xf32>
    %123 = vector.broadcast %122 : vector<1x4xf32> to vector<192x4xf32>
    %124 = arith.mulf %121, %123 : vector<192x4xf32>
    %125 = arith.addf %120, %124 : vector<192x4xf32>
    %c56_85 = arith.constant 56 : index
    %c0_86 = arith.constant 0 : index
    %126 = vector.load %arg9[%c56_85, %c0_86] : memref<304x4xf32, #tpu.memory_space<vmem>>, vector<192x4xf32>
    %127 = vector.extract_strided_slice %12 {offsets = [7, 0], sizes = [1, 4], strides = [1, 1]} : vector<9x4xf32> to vector<1x4xf32>
    %128 = vector.broadcast %127 : vector<1x4xf32> to vector<192x4xf32>
    %129 = arith.mulf %126, %128 : vector<192x4xf32>
    %130 = arith.addf %125, %129 : vector<192x4xf32>
    %c57_87 = arith.constant 57 : index
    %c0_88 = arith.constant 0 : index
    %131 = vector.load %arg9[%c57_87, %c0_88] : memref<304x4xf32, #tpu.memory_space<vmem>>, vector<192x4xf32>
    %132 = vector.extract_strided_slice %12 {offsets = [8, 0], sizes = [1, 4], strides = [1, 1]} : vector<9x4xf32> to vector<1x4xf32>
    %133 = vector.broadcast %132 : vector<1x4xf32> to vector<192x4xf32>
    %134 = arith.mulf %131, %133 : vector<192x4xf32>
    %135 = arith.addf %130, %134 : vector<192x4xf32>
    %136 = vector.extract_strided_slice %11 {offsets = [1, 0], sizes = [1, 4], strides = [1, 1]} : vector<8x4xf32> to vector<1x4xf32>
    %137 = vector.broadcast %136 : vector<1x4xf32> to vector<192x4xf32>
    %138 = arith.addf %135, %137 : vector<192x4xf32>
    %cst_89 = arith.constant 0.000000e+00 : f32
    %139 = vector.broadcast %cst_89 : f32 to vector<192x4xf32>
    %140 = arith.maximumf %138, %139 : vector<192x4xf32>
    %c0_90 = arith.constant 0 : index
    %c0_91 = arith.constant 0 : index
    %141 = vector.load %arg6[%c0_90, %c0_91] : memref<4x4xf32, #tpu.memory_space<vmem>>, vector<4x4xf32>
    %cst_92 = arith.constant dense<0.000000e+00> : vector<192x4xf32>
    %142 = tpu.matmul %140, %141, %cst_92 {dimension_numbers = #tpu.dot_dimension_numbers<[1], [0], [0], [1], [0, 0, 1, 1], [], []>} : vector<192x4xf32>, vector<4x4xf32>, vector<192x4xf32> -> vector<192x4xf32>
    %143 = vector.extract_strided_slice %11 {offsets = [2, 0], sizes = [1, 4], strides = [1, 1]} : vector<8x4xf32> to vector<1x4xf32>
    %144 = vector.broadcast %143 : vector<1x4xf32> to vector<192x4xf32>
    %145 = arith.addf %142, %144 : vector<192x4xf32>
    %c0_93 = arith.constant 0 : index
    %c0_94 = arith.constant 0 : index
    %c0_95 = arith.constant 0 : index
    %c0_96 = arith.constant 0 : index
    %146 = vector.load %arg2[%c0_93, %c0_94, %c0_95, %c0_96] : memref<1x1x192x4xf32, #tpu.memory_space<vmem>>, vector<1x1x192x4xf32>
    %147 = vector.shape_cast %146 : vector<1x1x192x4xf32> to vector<192x4xf32>
    %148 = arith.addf %145, %147 : vector<192x4xf32>
    %cst_97 = arith.constant 0.000000e+00 : f32
    %149 = vector.broadcast %cst_97 : f32 to vector<192x4xf32>
    %150 = arith.maximumf %148, %149 : vector<192x4xf32>
    %c0_98 = arith.constant 0 : index
    %c0_99 = arith.constant 0 : index
    %c0_100 = arith.constant 0 : index
    %c0_101 = arith.constant 0 : index
    %151 = vector.load %arg8[%c0_98, %c0_99, %c0_100, %c0_101] : memref<1x1x192x4xf32, #tpu.memory_space<vmem>>, vector<1x1x192x4xf32>
    %152 = vector.shape_cast %151 : vector<1x1x192x4xf32> to vector<192x4xf32>
    %153 = vector.shape_cast %150 : vector<192x4xf32> to vector<1x1x192x4xf32>
    tpu.vector_store %arg8[%c0_98, %c0_99, %c0_100, %c0_101], %153 {strides = array<i32>} : memref<1x1x192x4xf32, #tpu.memory_space<vmem>>, vector<1x1x192x4xf32>,
    return
  }
  func.func @transform_0(%arg0: i32, %arg1: i32) -> (i32, i32, i32, i32) {
    %c0_i32 = arith.constant 0 : i32
    %c0_i32_0 = arith.constant 0 : i32
    %c0_i32_1 = arith.constant 0 : i32
    return %arg0, %arg1, %c0_i32, %c0_i32_0 : i32, i32, i32, i32
  }
  func.func @transform_1(%arg0: i32, %arg1: i32) -> (i32, i32, i32, i32) {
    %c0_i32 = arith.constant 0 : i32
    %c0_i32_0 = arith.constant 0 : i32
    %c0_i32_1 = arith.constant 0 : i32
    return %arg0, %arg1, %c0_i32, %c0_i32_0 : i32, i32, i32, i32
  }
  func.func @transform_2(%arg0: i32, %arg1: i32) -> (i32, i32, i32) {
    %c0_i32 = arith.constant 0 : i32
    %c0_i32_0 = arith.constant 0 : i32
    %c0_i32_1 = arith.constant 0 : i32
    %c0_i32_2 = arith.constant 0 : i32
    return %c0_i32, %c0_i32_0, %c0_i32_1 : i32, i32, i32
  }
  func.func @transform_3(%arg0: i32, %arg1: i32) -> (i32, i32) {
    %c0_i32 = arith.constant 0 : i32
    %c0_i32_0 = arith.constant 0 : i32
    %c0_i32_1 = arith.constant 0 : i32
    return %c0_i32, %c0_i32_0 : i32, i32
  }
  func.func @transform_4(%arg0: i32, %arg1: i32) -> (i32, i32) {
    %c0_i32 = arith.constant 0 : i32
    %c0_i32_0 = arith.constant 0 : i32
    %c0_i32_1 = arith.constant 0 : i32
    return %c0_i32, %c0_i32_0 : i32, i32
  }
  func.func @transform_5(%arg0: i32, %arg1: i32) -> (i32, i32) {
    %c0_i32 = arith.constant 0 : i32
    %c0_i32_0 = arith.constant 0 : i32
    %c0_i32_1 = arith.constant 0 : i32
    return %c0_i32, %c0_i32_0 : i32, i32
  }
  func.func @transform_6(%arg0: i32, %arg1: i32) -> (i32, i32, i32, i32) {
    %c0_i32 = arith.constant 0 : i32
    %c0_i32_0 = arith.constant 0 : i32
    %c0_i32_1 = arith.constant 0 : i32
    return %arg0, %arg1, %c0_i32, %c0_i32_0 : i32, i32, i32, i32
  }
}

</mosaic_0001>

<llo_original>
// kernel: tpu_custom_call.1
$region0: #{tpu_custom_call.1}
  #allocation0 [shape = 'u32[]', space=smem, size = 0x4, offset = 0x4, fixed_abs, tag = 'smem constant byte address 0x4 - core index']
  #allocation1 [shape = 'u32[72,128]{1,0:T(1,128)}', space=vmem, size = 0x9000, scoped, tag = 'internal scratch']
  #allocation2 [shape = 'f32[304,4]{1,0:T(8,128)}', space=vmem, size = 0x26000, scoped, tag = 'scratch operand']
  %s0 = inlined_call_operand.vmem [shape: f32[2,2,192,4], index: 0, kind: input, shape index: {}]
  %s1 = inlined_call_operand.vmem [shape: f32[2,2,96,4], index: 1, kind: input, shape index: {}]
  %s2 = inlined_call_operand.vmem [shape: f32[9,4,4], index: 2, kind: input, shape index: {}]
  %s3 = inlined_call_operand.vmem [shape: f32[9,4], index: 3, kind: input, shape index: {}]
  %s4 = inlined_call_operand.vmem [shape: f32[4,4], index: 4, kind: input, shape index: {}]
  %s5 = inlined_call_operand.vmem [shape: f32[8,4], index: 5, kind: input, shape index: {}]
  %s6 = inlined_call_operand.vmem [shape: f32[2,2,192,4], index: 6, kind: output, shape index: {}]
  %s7 = sld [smem:[#allocation0]]
  $region65: #{tpu_custom_call.1} parent=0
    _
  %s9 = ssub.s32 1, %s7
  %s10 = scalar_select 0, %s9, %s7
  loop: start=0, step=1, limit=6
  $region2: #{tpu_custom_call.1} parent=0 // loop_pre_header
    _
  $region3: #{tpu_custom_call.1} parent=0 // loop_header
    %s12 = sphi 0, %s16
    %p13 = scmp.ge.s32.totalorder %s12, 6
    %s19 = sphi 0, %s31
    %s20 = sphi 0, %s27
    %s21 = sphi 0, %s19
    %s22 = sphi 0, %s20
    %s23 = sphi 0, %s21
    %s24 = sphi 0, %s22
    %s36 = sphi 0, %s38
    %s39 = sphi 0, %s36
    %s40 = sphi 0, %s39
    %s56 = sphi 0, %s40
    %s64 = sphi 0, %s66
    %s67 = sphi 0, %s64
    %s68 = sphi 0, %s67
    %s84 = sphi 0, %s68
    %s88 = sphi 0, %s88
    %s90 = sphi 0, %s88
    %s91 = sphi 0, %s90
    %s105 = sphi 0, %s91
    %s109 = sphi 0, %s109
    %s111 = sphi 0, %s109
    %s112 = sphi 0, %s111
    %s126 = sphi 0, %s112
    %s130 = sphi 0, %s130
    %s132 = sphi 0, %s130
    %s133 = sphi 0, %s132
    %s147 = sphi 0, %s133
    %s151 = sphi 0, %s151
    %s153 = sphi 0, %s151
    %s154 = sphi 0, %s153
    %s168 = sphi 0, %s154
    %s176 = sphi 0, %s178
    %s179 = sphi 0, %s176
    %s180 = sphi 0, %s179
    %s196 = sphi 0, %s180
  $region4: #{tpu_custom_call.1} parent=0 // loop_header_branch
    %15 = sbr.rel (%p13) target = $region8
  $region5: #{tpu_custom_call.1} parent=0 // loop_body
    %s17 = ssub.s32 %s12, 1
    %s18 = ssub.s32 %s12, 2
    %s25 = sadd.s32 1, %s20
    %p26 = scmp.ge.s32.totalorder %s25, 2
    %s27 = scalar_select %p26, 0, %s25
    %s28 = sadd.s32 1, %s19
    %s29 = scalar_select %p26, %s28, %s19
    %p30 = scmp.ge.s32.totalorder %s29, 2
    %s31 = scalar_select %p30, 0, %s29
    %s32 = ssub.s32 %s19, %s31
    %s33 = ssub.s32 %s20, %s27
    %s34 = sor.u32 %s32, %s33
    %p35 = scmp.eq.s32.totalorder %s34, 0
    %s37 = sadd.s32 %s36, 1
    %s38 = scalar_select %p35, %s36, %s37
    %p41 = pneg %p35
    %p42 = scmp.eq.s32.totalorder %s12, 3
    %p43 = por %p41, %p42
    %p44 = scmp.ne.s32.totalorder %s36, %s39
    %p45 = scmp.eq.s32.totalorder %s12, 0
    %p46 = por %p44, %p45
    %p47 = scmp.ne.s32.totalorder %s36, %s39
    %p48 = scmp.eq.s32.totalorder %s17, 3
    %p49 = por %p47, %p48
    %p50 = scmp.ne.s32.totalorder %s39, %s40
    %p51 = scmp.eq.s32.totalorder %s17, 0
    %p52 = por %p50, %p51
    %p53 = scmp.ne.s32.totalorder %s39, %s40
    %p54 = scmp.eq.s32.totalorder %s18, 3
    %p55 = por %p53, %p54
    %p57 = scmp.ne.s32.totalorder %s40, %s56
    %p58 = scmp.eq.s32.totalorder %s18, 0
    %p59 = por %p57, %p58
    %s60 = ssub.s32 %s19, %s31
    %s61 = ssub.s32 %s20, %s27
    %s62 = sor.u32 %s60, %s61
    %p63 = scmp.eq.s32.totalorder %s62, 0
    %s65 = sadd.s32 %s64, 1
    %s66 = scalar_select %p63, %s64, %s65
    %p69 = pneg %p63
    %p70 = scmp.eq.s32.totalorder %s12, 3
    %p71 = por %p69, %p70
    %p72 = scmp.ne.s32.totalorder %s64, %s67
    %p73 = scmp.eq.s32.totalorder %s12, 0
    %p74 = por %p72, %p73
    %p75 = scmp.ne.s32.totalorder %s64, %s67
    %p76 = scmp.eq.s32.totalorder %s17, 3
    %p77 = por %p75, %p76
    %p78 = scmp.ne.s32.totalorder %s67, %s68
    %p79 = scmp.eq.s32.totalorder %s17, 0
    %p80 = por %p78, %p79
    %p81 = scmp.ne.s32.totalorder %s67, %s68
    %p82 = scmp.eq.s32.totalorder %s18, 3
    %p83 = por %p81, %p82
    %p85 = scmp.ne.s32.totalorder %s68, %s84
    %p86 = scmp.eq.s32.totalorder %s18, 0
    %p87 = por %p85, %p86
    %s89 = sadd.s32 %s88, 1
    %p92 = scmp.eq.s32.totalorder %s12, 3
    %p93 = scmp.ne.s32.totalorder %s88, %s90
    %p94 = scmp.eq.s32.totalorder %s12, 0
    %p95 = por %p93, %p94
    %p96 = scmp.ne.s32.totalorder %s88, %s90
    %p97 = scmp.eq.s32.totalorder %s17, 3
    %p98 = por %p96, %p97
    %p99 = scmp.ne.s32.totalorder %s90, %s91
    %p100 = scmp.eq.s32.totalorder %s17, 0
    %p101 = por %p99, %p100
    %p102 = scmp.ne.s32.totalorder %s90, %s91
    %p103 = scmp.eq.s32.totalorder %s18, 3
    %p104 = por %p102, %p103
    %p106 = scmp.ne.s32.totalorder %s91, %s105
    %p107 = scmp.eq.s32.totalorder %s18, 0
    %p108 = por %p106, %p107
    %s110 = sadd.s32 %s109, 1
    %p113 = scmp.eq.s32.totalorder %s12, 3
    %p114 = scmp.ne.s32.totalorder %s109, %s111
    %p115 = scmp.eq.s32.totalorder %s12, 0
    %p116 = por %p114, %p115
    %p117 = scmp.ne.s32.totalorder %s109, %s111
    %p118 = scmp.eq.s32.totalorder %s17, 3
    %p119 = por %p117, %p118
    %p120 = scmp.ne.s32.totalorder %s111, %s112
    %p121 = scmp.eq.s32.totalorder %s17, 0
    %p122 = por %p120, %p121
    %p123 = scmp.ne.s32.totalorder %s111, %s112
    %p124 = scmp.eq.s32.totalorder %s18, 3
    %p125 = por %p123, %p124
    %p127 = scmp.ne.s32.totalorder %s112, %s126
    %p128 = scmp.eq.s32.totalorder %s18, 0
    %p129 = por %p127, %p128
    %s131 = sadd.s32 %s130, 1
    %p134 = scmp.eq.s32.totalorder %s12, 3
    %p135 = scmp.ne.s32.totalorder %s130, %s132
    %p136 = scmp.eq.s32.totalorder %s12, 0
    %p137 = por %p135, %p136
    %p138 = scmp.ne.s32.totalorder %s130, %s132
    %p139 = scmp.eq.s32.totalorder %s17, 3
    %p140 = por %p138, %p139
    %p141 = scmp.ne.s32.totalorder %s132, %s133
    %p142 = scmp.eq.s32.totalorder %s17, 0
    %p143 = por %p141, %p142
    %p144 = scmp.ne.s32.totalorder %s132, %s133
    %p145 = scmp.eq.s32.totalorder %s18, 3
    %p146 = por %p144, %p145
    %p148 = scmp.ne.s32.totalorder %s133, %s147
    %p149 = scmp.eq.s32.totalorder %s18, 0
    %p150 = por %p148, %p149
    %s152 = sadd.s32 %s151, 1
    %p155 = scmp.eq.s32.totalorder %s12, 3
    %p156 = scmp.ne.s32.totalorder %s151, %s153
    %p157 = scmp.eq.s32.totalorder %s12, 0
    %p158 = por %p156, %p157
    %p159 = scmp.ne.s32.totalorder %s151, %s153
    %p160 = scmp.eq.s32.totalorder %s17, 3
    %p161 = por %p159, %p160
    %p162 = scmp.ne.s32.totalorder %s153, %s154
    %p163 = scmp.eq.s32.totalorder %s17, 0
    %p164 = por %p162, %p163
    %p165 = scmp.ne.s32.totalorder %s153, %s154
    %p166 = scmp.eq.s32.totalorder %s18, 3
    %p167 = por %p165, %p166
    %p169 = scmp.ne.s32.totalorder %s154, %s168
    %p170 = scmp.eq.s32.totalorder %s18, 0
    %p171 = por %p169, %p170
    %s172 = ssub.s32 %s19, %s31
    %s173 = ssub.s32 %s20, %s27
    %s174 = sor.u32 %s172, %s173
    %p175 = scmp.eq.s32.totalorder %s174, 0
    %s177 = sadd.s32 %s176, 1
    %s178 = scalar_select %p175, %s176, %s177
    %p181 = pneg %p175
    %p182 = scmp.eq.s32.totalorder %s12, 3
    %p183 = por %p181, %p182
    %p184 = scmp.ne.s32.totalorder %s176, %s179
    %p185 = scmp.eq.s32.totalorder %s12, 0
    %p186 = por %p184, %p185
    %p187 = scmp.ne.s32.totalorder %s176, %s179
    %p188 = scmp.eq.s32.totalorder %s17, 3
    %p189 = por %p187, %p188
    %p190 = scmp.ne.s32.totalorder %s179, %s180
    %p191 = scmp.eq.s32.totalorder %s17, 0
    %p192 = por %p190, %p191
    %p193 = scmp.ne.s32.totalorder %s179, %s180
    %p194 = scmp.eq.s32.totalorder %s18, 3
    %p195 = por %p193, %p194
    %p197 = scmp.ne.s32.totalorder %s180, %s196
    %p198 = scmp.eq.s32.totalorder %s18, 0
    %p199 = por %p197, %p198
    %p200 = scmp.le.s32.totalorder 1, %s12
    %p201 = scmp.lt.s32.totalorder %s12, 5
    %p202 = pnand %p200, %p201
    %p203 = pneg %p202
    // Predicated region
    $region9: #{tpu_custom_call.1} parent=5 // pred_check
      _
    $region10: #{tpu_custom_call.1} parent=5 // pred_check_branch
      %205 = sbr.rel (%p202) target = $region12
    $region11: #{tpu_custom_call.1} parent=5 // pred_region
      %s206 = ssub.s32 %s12, 1
      // Predicated region
      $region13: #{tpu_custom_call.1} parent=11 // pred_check
        %p207 = pneg %p101
      $region14: #{tpu_custom_call.1} parent=11 // pred_check_branch
        %209 = sbr.rel (%p207) target = $region16
      $region15: #{tpu_custom_call.1} parent=11 // pred_region
        _
      $region16: #{tpu_custom_call.1} parent=11 // pred_fallthru
        _
      // Predicated region
      $region17: #{tpu_custom_call.1} parent=11 // pred_check
        %p210 = pneg %p122
      $region18: #{tpu_custom_call.1} parent=11 // pred_check_branch
        %212 = sbr.rel (%p210) target = $region20
      $region19: #{tpu_custom_call.1} parent=11 // pred_region
        _
      $region20: #{tpu_custom_call.1} parent=11 // pred_fallthru
        _
      // Predicated region
      $region21: #{tpu_custom_call.1} parent=11 // pred_check
        %p213 = pneg %p143
      $region22: #{tpu_custom_call.1} parent=11 // pred_check_branch
        %215 = sbr.rel (%p213) target = $region24
      $region23: #{tpu_custom_call.1} parent=11 // pred_region
        _
      $region24: #{tpu_custom_call.1} parent=11 // pred_fallthru
        _
      // Predicated region
      $region25: #{tpu_custom_call.1} parent=11 // pred_check
        %p216 = pneg %p164
      $region26: #{tpu_custom_call.1} parent=11 // pred_check_branch
        %218 = sbr.rel (%p216) target = $region28
      $region27: #{tpu_custom_call.1} parent=11 // pred_region
        _
      $region28: #{tpu_custom_call.1} parent=11 // pred_fallthru
        _
    $region12: #{tpu_custom_call.1} parent=5 // pred_fallthru
      _
    %p219 = scmp.lt.s32.totalorder %s12, 4
    // Predicated region
    $region29: #{tpu_custom_call.1} parent=5 // pred_check
      %p220 = pneg %p219
    $region30: #{tpu_custom_call.1} parent=5 // pred_check_branch
      %222 = sbr.rel (%p220) target = $region32
    $region31: #{tpu_custom_call.1} parent=5 // pred_region
      // Predicated region
      $region33: #{tpu_custom_call.1} parent=31 // pred_check
        %p223 = pneg %p46
      $region34: #{tpu_custom_call.1} parent=31 // pred_check_branch
        %225 = sbr.rel (%p223) target = $region36
      $region35: #{tpu_custom_call.1} parent=31 // pred_region
        %p226 = scmp.lt.s32.totalorder %s19, 1
        %s227 = scalar_select %p226, %s19, 1
        %p228 = scmp.lt.s32.totalorder %s20, 1
        %s229 = scalar_select %p228, %s20, 1
        %s230 = smul.addr %s229, 24
        %s231 = smul.addr %s227, 48
        %s232 = sadd.s32 %s230, %s231
        %s233 = smul.addr %s232, 8
        %s234 = scalar_lea.vmem %s0, %s233
      $region36: #{tpu_custom_call.1} parent=31 // pred_fallthru
        _
      // Predicated region
      $region37: #{tpu_custom_call.1} parent=31 // pred_check
        %p235 = pneg %p74
      $region38: #{tpu_custom_call.1} parent=31 // pred_check_branch
        %237 = sbr.rel (%p235) target = $region40
      $region39: #{tpu_custom_call.1} parent=31 // pred_region
        %p238 = scmp.lt.s32.totalorder %s19, 1
        %s239 = scalar_select %p238, %s19, 1
        %p240 = scmp.lt.s32.totalorder %s20, 1
        %s241 = scalar_select %p240, %s20, 1
        %s242 = smul.addr %s241, 12
        %s243 = smul.addr %s239, 24
        %s244 = sadd.s32 %s242, %s243
        %s245 = smul.addr %s244, 8
        %s246 = scalar_lea.vmem %s1, %s245
      $region40: #{tpu_custom_call.1} parent=31 // pred_fallthru
        _
    $region32: #{tpu_custom_call.1} parent=5 // pred_fallthru
      _
    %p247 = scmp.le.s32.totalorder 1, %s12
    %p248 = scmp.lt.s32.totalorder %s12, 5
    %p249 = pnand %p247, %p248
    %p250 = pneg %p249
    // Predicated region
    $region41: #{tpu_custom_call.1} parent=5 // pred_check
      _
    $region42: #{tpu_custom_call.1} parent=5 // pred_check_branch
      %252 = sbr.rel (%p249) target = $region44
    $region43: #{tpu_custom_call.1} parent=5 // pred_region
      %s253 = ssub.s32 %s12, 1
      %p254 = scmp.lt.s32.totalorder %s21, 1
      %s255 = scalar_select %p254, %s21, 1
      %p256 = scmp.lt.s32.totalorder %s22, 1
      %s257 = scalar_select %p256, %s22, 1
      %s258 = smul.addr %s257, 24
      %s259 = smul.addr %s255, 48
      %s260 = sadd.s32 %s258, %s259
      %s261 = smul.addr %s260, 8
      %s262 = scalar_lea.vmem %s0, %s261
      %p263 = pneg %p52
      %p264 = pneg %p49
      %p265 = scmp.lt.s32.totalorder %s21, 1
      %s266 = scalar_select %p265, %s21, 1
      %p267 = scmp.lt.s32.totalorder %s22, 1
      %s268 = scalar_select %p267, %s22, 1
      %s269 = smul.addr %s268, 12
      %s270 = smul.addr %s266, 24
      %s271 = sadd.s32 %s269, %s270
      %s272 = smul.addr %s271, 8
      %s273 = scalar_lea.vmem %s1, %s272
      %p274 = pneg %p80
      %p275 = pneg %p77
      %p276 = pneg %p101
      %p277 = pneg %p98
      %p278 = pneg %p122
      %p279 = pneg %p119
      %p280 = pneg %p143
      %p281 = pneg %p140
      %p282 = pneg %p164
      %p283 = pneg %p161
      %p284 = pneg %p192
      %p285 = pneg %p189
      %p286 = scmp.lt.s32.totalorder %s21, 1
      %s287 = scalar_select %p286, %s21, 1
      %p288 = scmp.lt.s32.totalorder %s22, 1
      %s289 = scalar_select %p288, %s22, 1
      %s290 = smul.addr %s289, 24
      %s291 = smul.addr %s287, 48
      %s292 = sadd.s32 %s290, %s291
      %s293 = smul.addr %s292, 8
      %s294 = scalar_lea.vmem %s6, %s293
      %p295 = scmp.lt.s32.totalorder %s21, 1
      %s296 = scalar_select %p295, %s21, 1
      %p297 = scmp.lt.s32.totalorder %s22, 1
      %s298 = scalar_select %p297, %s22, 1
      %s299 = smul.addr %s298, 24
      %s300 = smul.addr %s296, 48
      %s301 = sadd.s32 %s299, %s300
      %s302 = smul.addr %s301, 8
      %s303 = scalar_lea.vmem %s0, %s302
      %p304 = scmp.lt.s32.totalorder %s21, 1
      %s305 = scalar_select %p304, %s21, 1
      %p306 = scmp.lt.s32.totalorder %s22, 1
      %s307 = scalar_select %p306, %s22, 1
      %s308 = smul.addr %s307, 12
      %s309 = smul.addr %s305, 24
      %s310 = sadd.s32 %s308, %s309
      %s311 = smul.addr %s310, 8
      %s312 = scalar_lea.vmem %s1, %s311
      %p313 = scmp.lt.s32.totalorder %s21, 1
      %s314 = scalar_select %p313, %s21, 1
      %p315 = scmp.lt.s32.totalorder %s22, 1
      %s316 = scalar_select %p315, %s22, 1
      %s317 = smul.addr %s316, 24
      %s318 = smul.addr %s314, 48
      %s319 = sadd.s32 %s317, %s318
      %s320 = smul.addr %s319, 8
      %s321 = scalar_lea.vmem %s6, %s320
      %vm322 = vcmask 31744
      %323 = vst.msk [vmem:[#allocation2] sm:$0xff] %vm322, 0.0
      %v324 = vld [vmem:[%s312] sm:$0xff]
      %v325 = vld [vmem:[%s312 + $0x8] sm:$0xff]
      %v326 = vld [vmem:[%s312 + $0x10] sm:$0xff]
      %v327 = vld [vmem:[%s312 + $0x18] sm:$0xff]
      %v328 = vld [vmem:[%s312 + $0x20] sm:$0xff]
      %v329 = vld [vmem:[%s312 + $0x28] sm:$0xff]
      %330 = vst.msk [vmem:[#allocation2 + $0x8] sm:$0xff] %vm322, %v324
      %331 = vst.msk [vmem:[#allocation2 + $0x10] sm:$0xff] %vm322, %v325
      %332 = vst.msk [vmem:[#allocation2 + $0x18] sm:$0xff] %vm322, %v326
      %333 = vst.msk [vmem:[#allocation2 + $0x20] sm:$0xff] %vm322, %v327
      %334 = vst.msk [vmem:[#allocation2 + $0x28] sm:$0xff] %vm322, %v328
      %335 = vst.msk [vmem:[#allocation2 + $0x30] sm:$0xff] %vm322, %v329
      %v336 = vld [vmem:[%s303] sm:$0xff]
      %v337 = vld [vmem:[%s303 + $0x8] sm:$0xff]
      %v338 = vld [vmem:[%s303 + $0x10] sm:$0xff]
      %v339 = vld [vmem:[%s303 + $0x18] sm:$0xff]
      %v340 = vld [vmem:[%s303 + $0x20] sm:$0xff]
      %v341 = vld [vmem:[%s303 + $0x28] sm:$0xff]
      %v342 = vld [vmem:[%s303 + $0x30] sm:$0xff]
      %v343 = vld [vmem:[%s303 + $0x38] sm:$0xff]
      %v344 = vld [vmem:[%s303 + $0x40] sm:$0xff]
      %v345 = vld [vmem:[%s303 + $0x48] sm:$0xff]
      %v346 = vld [vmem:[%s303 + $0x50] sm:$0xff]
      %v347 = vld [vmem:[%s303 + $0x58] sm:$0xff]
      %v348 = vld [vmem:[%s303 + $0x60] sm:$0xff]
      %v349 = vld [vmem:[%s303 + $0x68] sm:$0xff]
      %v350 = vld [vmem:[%s303 + $0x70] sm:$0xff]
      %v351 = vld [vmem:[%s303 + $0x78] sm:$0xff]
      %v352 = vld [vmem:[%s303 + $0x80] sm:$0xff]
      %v353 = vld [vmem:[%s303 + $0x88] sm:$0xff]
      %v354 = vld [vmem:[%s303 + $0x90] sm:$0xff]
      %v355 = vld [vmem:[%s303 + $0x98] sm:$0xff]
      %v356 = vld [vmem:[%s303 + $0xa0] sm:$0xff]
      %v357 = vld [vmem:[%s303 + $0xa8] sm:$0xff]
      %v358 = vld [vmem:[%s303 + $0xb0] sm:$0xff]
      %v359 = vld [vmem:[%s303 + $0xb8] sm:$0xff]
      %360 = vst.msk [vmem:[#allocation2 + $0x38] sm:$0xff] %vm322, %v336
      %361 = vst.msk [vmem:[#allocation2 + $0x40] sm:$0xff] %vm322, %v337
      %362 = vst.msk [vmem:[#allocation2 + $0x48] sm:$0xff] %vm322, %v338
      %363 = vst.msk [vmem:[#allocation2 + $0x50] sm:$0xff] %vm322, %v339
      %364 = vst.msk [vmem:[#allocation2 + $0x58] sm:$0xff] %vm322, %v340
      %365 = vst.msk [vmem:[#allocation2 + $0x60] sm:$0xff] %vm322, %v341
      %366 = vst.msk [vmem:[#allocation2 + $0x68] sm:$0xff] %vm322, %v342
      %367 = vst.msk [vmem:[#allocation2 + $0x70] sm:$0xff] %vm322, %v343
      %368 = vst.msk [vmem:[#allocation2 + $0x78] sm:$0xff] %vm322, %v344
      %369 = vst.msk [vmem:[#allocation2 + $0x80] sm:$0xff] %vm322, %v345
      %370 = vst.msk [vmem:[#allocation2 + $0x88] sm:$0xff] %vm322, %v346
      %371 = vst.msk [vmem:[#allocation2 + $0x90] sm:$0xff] %vm322, %v347
      %372 = vst.msk [vmem:[#allocation2 + $0x98] sm:$0xff] %vm322, %v348
      %373 = vst.msk [vmem:[#allocation2 + $0xa0] sm:$0xff] %vm322, %v349
      %374 = vst.msk [vmem:[#allocation2 + $0xa8] sm:$0xff] %vm322, %v350
      %375 = vst.msk [vmem:[#allocation2 + $0xb0] sm:$0xff] %vm322, %v351
      %376 = vst.msk [vmem:[#allocation2 + $0xb8] sm:$0xff] %vm322, %v352
      %377 = vst.msk [vmem:[#allocation2 + $0xc0] sm:$0xff] %vm322, %v353
      %378 = vst.msk [vmem:[#allocation2 + $0xc8] sm:$0xff] %vm322, %v354
      %379 = vst.msk [vmem:[#allocation2 + $0xd0] sm:$0xff] %vm322, %v355
      %380 = vst.msk [vmem:[#allocation2 + $0xd8] sm:$0xff] %vm322, %v356
      %381 = vst.msk [vmem:[#allocation2 + $0xe0] sm:$0xff] %vm322, %v357
      %382 = vst.msk [vmem:[#allocation2 + $0xe8] sm:$0xff] %vm322, %v358
      %383 = vst.msk [vmem:[#allocation2 + $0xf0] sm:$0xff] %vm322, %v359
      %v384 = vld [vmem:[%s312 + $0x30] sm:$0xff]
      %v385 = vld [vmem:[%s312 + $0x38] sm:$0xff]
      %v386 = vld [vmem:[%s312 + $0x40] sm:$0xff]
      %v387 = vld [vmem:[%s312 + $0x48] sm:$0xff]
      %v388 = vld [vmem:[%s312 + $0x50] sm:$0xff]
      %v389 = vld [vmem:[%s312 + $0x58] sm:$0xff]
      %390 = vst.msk [vmem:[#allocation2 + $0xf8] sm:$0xff] %vm322, %v384
      %391 = vst.msk [vmem:[#allocation2 + $0x100] sm:$0xff] %vm322, %v385
      %392 = vst.msk [vmem:[#allocation2 + $0x108] sm:$0xff] %vm322, %v386
      %393 = vst.msk [vmem:[#allocation2 + $0x110] sm:$0xff] %vm322, %v387
      %394 = vst.msk [vmem:[#allocation2 + $0x118] sm:$0xff] %vm322, %v388
      %395 = vst.msk [vmem:[#allocation2 + $0x120] sm:$0xff] %vm322, %v389
      %v396 = vld [vmem:[%s5] sm:$0xff]
      %v397 = vld [vmem:[%s3] sm:$0xff]
      %v398 = vld [vmem:[%s3 + $0x8] sm:$0x1]
      %v399 = vld [vmem:[#allocation2 + $0x7] sm:$0xff]
      %v400 = vld [vmem:[#allocation2 + $0xf] sm:$0xff]
      %v401 = vld [vmem:[#allocation2 + $0x17] sm:$0xff]
      %v402 = vld [vmem:[#allocation2 + $0x1f] sm:$0xff]
      %v403 = vld [vmem:[#allocation2 + $0x27] sm:$0xff]
      %v404 = vld [vmem:[#allocation2 + $0x2f] sm:$0xff]
      %v405 = vld [vmem:[#allocation2 + $0x37] sm:$0xff]
      %v406 = vld [vmem:[#allocation2 + $0x3f] sm:$0xff]
      %v407 = vld [vmem:[#allocation2 + $0x47] sm:$0xff]
      %v408 = vld [vmem:[#allocation2 + $0x4f] sm:$0xff]
      %v409 = vld [vmem:[#allocation2 + $0x57] sm:$0xff]
      %v410 = vld [vmem:[#allocation2 + $0x5f] sm:$0xff]
      %v411 = vld [vmem:[#allocation2 + $0x67] sm:$0xff]
      %v412 = vld [vmem:[#allocation2 + $0x6f] sm:$0xff]
      %v413 = vld [vmem:[#allocation2 + $0x77] sm:$0xff]
      %v414 = vld [vmem:[#allocation2 + $0x7f] sm:$0xff]
      %v415 = vld [vmem:[#allocation2 + $0x87] sm:$0xff]
      %v416 = vld [vmem:[#allocation2 + $0x8f] sm:$0xff]
      %v417 = vld [vmem:[#allocation2 + $0x97] sm:$0xff]
      %v418 = vld [vmem:[#allocation2 + $0x9f] sm:$0xff]
      %v419 = vld [vmem:[#allocation2 + $0xa7] sm:$0xff]
      %v420 = vld [vmem:[#allocation2 + $0xaf] sm:$0xff]
      %v421 = vld [vmem:[#allocation2 + $0xb7] sm:$0xff]
      %v422 = vld [vmem:[#allocation2 + $0xbf] sm:$0xff]
      %v423 = vld [vmem:[#allocation2 + $0xc7] sm:$0xff]
      %v424 = vld [vmem:[#allocation2 + $0xcf] sm:$0xff]
      %v425 = vld [vmem:[#allocation2 + $0xd7] sm:$0xff]
      %v426 = vld [vmem:[#allocation2 + $0xdf] sm:$0xff]
      %v427 = vld [vmem:[#allocation2 + $0xe7] sm:$0xff]
      %v428 = vld [vmem:[#allocation2 + $0xef] sm:$0xff]
      %v429 = vld [vmem:[%s2] sm:$0xf]
      %v430 = vld [vmem:[#allocation2 + $0x8] sm:$0xff]
      %v431 = vld [vmem:[#allocation2 + $0x10] sm:$0xff]
      %v432 = vld [vmem:[#allocation2 + $0x18] sm:$0xff]
      %v433 = vld [vmem:[#allocation2 + $0x20] sm:$0xff]
      %v434 = vld [vmem:[#allocation2 + $0x28] sm:$0xff]
      %v435 = vld [vmem:[#allocation2 + $0x30] sm:$0xff]
      %v436 = vld [vmem:[#allocation2 + $0x38] sm:$0xff]
      %v437 = vld [vmem:[#allocation2 + $0x40] sm:$0xff]
      %v438 = vld [vmem:[#allocation2 + $0x48] sm:$0xff]
      %v439 = vld [vmem:[#allocation2 + $0x50] sm:$0xff]
      %v440 = vld [vmem:[#allocation2 + $0x58] sm:$0xff]
      %v441 = vld [vmem:[#allocation2 + $0x60] sm:$0xff]
      %v442 = vld [vmem:[#allocation2 + $0x68] sm:$0xff]
      %v443 = vld [vmem:[#allocation2 + $0x70] sm:$0xff]
      %v444 = vld [vmem:[#allocation2 + $0x78] sm:$0xff]
      %v445 = vld [vmem:[#allocation2 + $0x80] sm:$0xff]
      %v446 = vld [vmem:[#allocation2 + $0x88] sm:$0xff]
      %v447 = vld [vmem:[#allocation2 + $0x90] sm:$0xff]
      %v448 = vld [vmem:[#allocation2 + $0x98] sm:$0xff]
      %v449 = vld [vmem:[#allocation2 + $0xa0] sm:$0xff]
      %v450 = vld [vmem:[#allocation2 + $0xa8] sm:$0xff]
      %v451 = vld [vmem:[#allocation2 + $0xb0] sm:$0xff]
      %v452 = vld [vmem:[#allocation2 + $0xb8] sm:$0xff]
      %v453 = vld [vmem:[#allocation2 + $0xc0] sm:$0xff]
      %v454 = vld [vmem:[#allocation2 + $0xc8] sm:$0xff]
      %v455 = vld [vmem:[#allocation2 + $0xd0] sm:$0xff]
      %v456 = vld [vmem:[#allocation2 + $0xd8] sm:$0xff]
      %v457 = vld [vmem:[#allocation2 + $0xe0] sm:$0xff]
      %v458 = vld [vmem:[#allocation2 + $0xe8] sm:$0xff]
      %v459 = vld [vmem:[#allocation2 + $0xf0] sm:$0xff]
      %s460 = scalar_lea.vmem %s2, 4
      %v461 = vld [vmem:[%s460] sm:$0xf]
      %v463 = vsel %vm322, %v430, 0
      %v466 = vsel %vm322, %v431, 0
      %v469 = vsel %vm322, %v432, 0
      %v472 = vsel %vm322, %v433, 0
      %v475 = vsel %vm322, %v434, 0
      %v478 = vsel %vm322, %v435, 0
      %v481 = vsel %vm322, %v436, 0
      %v484 = vsel %vm322, %v437, 0
      %v487 = vsel %vm322, %v438, 0
      %v490 = vsel %vm322, %v439, 0
      %v493 = vsel %vm322, %v440, 0
      %v496 = vsel %vm322, %v441, 0
      %v499 = vsel %vm322, %v442, 0
      %v502 = vsel %vm322, %v443, 0
      %v505 = vsel %vm322, %v444, 0
      %v508 = vsel %vm322, %v445, 0
      %v511 = vsel %vm322, %v446, 0
      %v514 = vsel %vm322, %v447, 0
      %v517 = vsel %vm322, %v448, 0
      %v520 = vsel %vm322, %v449, 0
      %v523 = vsel %vm322, %v450, 0
      %v526 = vsel %vm322, %v451, 0
      %v529 = vsel %vm322, %v452, 0
      %v532 = vsel %vm322, %v453, 0
      %v535 = vsel %vm322, %v454, 0
      %v538 = vsel %vm322, %v455, 0
      %v541 = vsel %vm322, %v456, 0
      %v544 = vsel %vm322, %v457, 0
      %v547 = vsel %vm322, %v458, 0
      %v550 = vsel %vm322, %v459, 0
      %vm552 = vcmask 1043456
      %v554 = vsel %vm552, %v461, 0
      %556 = vmatpush.msra.mxu0 0.0
      %557 = vmatpush.msra.mxu0 0.0
      %558 = vmatpush.msra.mxu0 0.0
      %559 = vmatpush.msra.mxu0 0.0
      %560 = vmatpush.msra.mxu0 0.0
      %561 = vmatpush.msra.mxu0 0.0
      %562 = vmatpush.msra.mxu0 0.0
      %563 = vmatpush.msra.mxu0 0.0
      %564 = vmatpush.msra.mxu0 0.0
      %565 = vmatpush.msra.mxu0 0.0
      %566 = vmatpush.msra.mxu0 0.0
      %567 = vmatpush.msra.mxu0 0.0
      %568 = vmatpush.msra.mxu0 0.0
      %569 = vmatpush.msra.mxu0 0.0
      %570 = vmatpush.msra.mxu0 0.0
      %571 = vmatpush.msra.mxu0 %v554
      %572 = vmatmul.f32.gmra.mxu0 %v463
      %v573 = vpop.f32.mrf.mxu0
      %v574 = vadd.f32 0.0, %v573
      %575 = vmatmul.f32.gmra.mxu0 %v466
      %v576 = vpop.f32.mrf.mxu0
      %v577 = vadd.f32 0.0, %v576
      %578 = vmatmul.f32.gmra.mxu0 %v469
      %v579 = vpop.f32.mrf.mxu0
      %v580 = vadd.f32 0.0, %v579
      %581 = vmatmul.f32.gmra.mxu0 %v472
      %v582 = vpop.f32.mrf.mxu0
      %v583 = vadd.f32 0.0, %v582
      %584 = vmatmul.f32.gmra.mxu0 %v475
      %v585 = vpop.f32.mrf.mxu0
      %v586 = vadd.f32 0.0, %v585
      %587 = vmatmul.f32.gmra.mxu0 %v478
      %v588 = vpop.f32.mrf.mxu0
      %v589 = vadd.f32 0.0, %v588
      %590 = vmatmul.f32.gmra.mxu0 %v481
      %v591 = vpop.f32.mrf.mxu0
      %v592 = vadd.f32 0.0, %v591
      %593 = vmatmul.f32.gmra.mxu0 %v484
      %v594 = vpop.f32.mrf.mxu0
      %v595 = vadd.f32 0.0, %v594
      %596 = vmatmul.f32.gmra.mxu0 %v487
      %v597 = vpop.f32.mrf.mxu0
      %v598 = vadd.f32 0.0, %v597
      %599 = vmatmul.f32.gmra.mxu0 %v490
      %v600 = vpop.f32.mrf.mxu0
      %v601 = vadd.f32 0.0, %v600
      %602 = vmatmul.f32.gmra.mxu0 %v493
      %v603 = vpop.f32.mrf.mxu0
      %v604 = vadd.f32 0.0, %v603
      %605 = vmatmul.f32.gmra.mxu0 %v496
      %v606 = vpop.f32.mrf.mxu0
      %v607 = vadd.f32 0.0, %v606
      %608 = vmatmul.f32.gmra.mxu0 %v499
      %v609 = vpop.f32.mrf.mxu0
      %v610 = vadd.f32 0.0, %v609
      %611 = vmatmul.f32.gmra.mxu0 %v502
      %v612 = vpop.f32.mrf.mxu0
      %v613 = vadd.f32 0.0, %v612
      %614 = vmatmul.f32.gmra.mxu0 %v505
      %v615 = vpop.f32.mrf.mxu0
      %v616 = vadd.f32 0.0, %v615
      %617 = vmatmul.f32.gmra.mxu0 %v508
      %v618 = vpop.f32.mrf.mxu0
      %v619 = vadd.f32 0.0, %v618
      %620 = vmatmul.f32.gmra.mxu0 %v511
      %v621 = vpop.f32.mrf.mxu0
      %v622 = vadd.f32 0.0, %v621
      %623 = vmatmul.f32.gmra.mxu0 %v514
      %v624 = vpop.f32.mrf.mxu0
      %v625 = vadd.f32 0.0, %v624
      %626 = vmatmul.f32.gmra.mxu0 %v517
      %v627 = vpop.f32.mrf.mxu0
      %v628 = vadd.f32 0.0, %v627
      %629 = vmatmul.f32.gmra.mxu0 %v520
      %v630 = vpop.f32.mrf.mxu0
      %v631 = vadd.f32 0.0, %v630
      %632 = vmatmul.f32.gmra.mxu0 %v523
      %v633 = vpop.f32.mrf.mxu0
      %v634 = vadd.f32 0.0, %v633
      %635 = vmatmul.f32.gmra.mxu0 %v526
      %v636 = vpop.f32.mrf.mxu0
      %v637 = vadd.f32 0.0, %v636
      %638 = vmatmul.f32.gmra.mxu0 %v529
      %v639 = vpop.f32.mrf.mxu0
      %v640 = vadd.f32 0.0, %v639
      %641 = vmatmul.f32.gmra.mxu0 %v532
      %v642 = vpop.f32.mrf.mxu0
      %v643 = vadd.f32 0.0, %v642
      %644 = vmatmul.f32.gmra.mxu0 %v535
      %v645 = vpop.f32.mrf.mxu0
      %v646 = vadd.f32 0.0, %v645
      %647 = vmatmul.f32.gmra.mxu0 %v538
      %v648 = vpop.f32.mrf.mxu0
      %v649 = vadd.f32 0.0, %v648
      %650 = vmatmul.f32.gmra.mxu0 %v541
      %v651 = vpop.f32.mrf.mxu0
      %v652 = vadd.f32 0.0, %v651
      %653 = vmatmul.f32.gmra.mxu0 %v544
      %v654 = vpop.f32.mrf.mxu0
      %v655 = vadd.f32 0.0, %v654
      %656 = vmatmul.f32.gmra.mxu0 %v547
      %v657 = vpop.f32.mrf.mxu0
      %v658 = vadd.f32 0.0, %v657
      %659 = vmatmul.f32.gmra.mxu0 %v550
      %v660 = vpop.f32.mrf.mxu0
      %v661 = vadd.f32 0.0, %v660
      %662 = vdwg.mxu0
      %v664 = vsel %vm322, %v399, 0
      %v667 = vsel %vm322, %v400, 0
      %v670 = vsel %vm322, %v401, 0
      %v673 = vsel %vm322, %v402, 0
      %v676 = vsel %vm322, %v403, 0
      %v679 = vsel %vm322, %v404, 0
      %v682 = vsel %vm322, %v405, 0
      %v685 = vsel %vm322, %v406, 0
      %v688 = vsel %vm322, %v407, 0
      %v691 = vsel %vm322, %v408, 0
      %v694 = vsel %vm322, %v409, 0
      %v697 = vsel %vm322, %v410, 0
      %v700 = vsel %vm322, %v411, 0
      %v703 = vsel %vm322, %v412, 0
      %v706 = vsel %vm322, %v413, 0
      %v709 = vsel %vm322, %v414, 0
      %v712 = vsel %vm322, %v415, 0
      %v715 = vsel %vm322, %v416, 0
      %v718 = vsel %vm322, %v417, 0
      %v721 = vsel %vm322, %v418, 0
      %v724 = vsel %vm322, %v419, 0
      %v727 = vsel %vm322, %v420, 0
      %v730 = vsel %vm322, %v421, 0
      %v733 = vsel %vm322, %v422, 0
      %v736 = vsel %vm322, %v423, 0
      %v739 = vsel %vm322, %v424, 0
      %v742 = vsel %vm322, %v425, 0
      %v745 = vsel %vm322, %v426, 0
      %v748 = vsel %vm322, %v427, 0
      %v751 = vsel %vm322, %v428, 0
      %v754 = vsel %vm552, %v429, 0
      %756 = vmatpush.msra.mxu0 0.0
      %757 = vmatpush.msra.mxu0 0.0
      %758 = vmatpush.msra.mxu0 0.0
      %759 = vmatpush.msra.mxu0 0.0
      %760 = vmatpush.msra.mxu0 0.0
      %761 = vmatpush.msra.mxu0 0.0
      %762 = vmatpush.msra.mxu0 0.0
      %763 = vmatpush.msra.mxu0 0.0
      %764 = vmatpush.msra.mxu0 0.0
      %765 = vmatpush.msra.mxu0 0.0
      %766 = vmatpush.msra.mxu0 0.0
      %767 = vmatpush.msra.mxu0 0.0
      %768 = vmatpush.msra.mxu0 0.0
      %769 = vmatpush.msra.mxu0 0.0
      %770 = vmatpush.msra.mxu0 0.0
      %771 = vmatpush.msra.mxu0 %v754
      %772 = vmatmul.f32.gmra.mxu0 %v664
      %v773 = vpop.f32.mrf.mxu0
      %v774 = vadd.f32 %v574, %v773
      %775 = vmatmul.f32.gmra.mxu0 %v667
      %v776 = vpop.f32.mrf.mxu0
      %v777 = vadd.f32 %v577, %v776
      %778 = vmatmul.f32.gmra.mxu0 %v670
      %v779 = vpop.f32.mrf.mxu0
      %v780 = vadd.f32 %v580, %v779
      %781 = vmatmul.f32.gmra.mxu0 %v673
      %v782 = vpop.f32.mrf.mxu0
      %v783 = vadd.f32 %v583, %v782
      %784 = vmatmul.f32.gmra.mxu0 %v676
      %v785 = vpop.f32.mrf.mxu0
      %v786 = vadd.f32 %v586, %v785
      %787 = vmatmul.f32.gmra.mxu0 %v679
      %v788 = vpop.f32.mrf.mxu0
      %v789 = vadd.f32 %v589, %v788
      %790 = vmatmul.f32.gmra.mxu0 %v682
      %v791 = vpop.f32.mrf.mxu0
      %v792 = vadd.f32 %v592, %v791
      %793 = vmatmul.f32.gmra.mxu0 %v685
      %v794 = vpop.f32.mrf.mxu0
      %v795 = vadd.f32 %v595, %v794
      %796 = vmatmul.f32.gmra.mxu0 %v688
      %v797 = vpop.f32.mrf.mxu0
      %v798 = vadd.f32 %v598, %v797
      %799 = vmatmul.f32.gmra.mxu0 %v691
      %v800 = vpop.f32.mrf.mxu0
      %v801 = vadd.f32 %v601, %v800
      %802 = vmatmul.f32.gmra.mxu0 %v694
      %v803 = vpop.f32.mrf.mxu0
      %v804 = vadd.f32 %v604, %v803
      %805 = vmatmul.f32.gmra.mxu0 %v697
      %v806 = vpop.f32.mrf.mxu0
      %v807 = vadd.f32 %v607, %v806
      %808 = vmatmul.f32.gmra.mxu0 %v700
      %v809 = vpop.f32.mrf.mxu0
      %v810 = vadd.f32 %v610, %v809
      %811 = vmatmul.f32.gmra.mxu0 %v703
      %v812 = vpop.f32.mrf.mxu0
      %v813 = vadd.f32 %v613, %v812
      %814 = vmatmul.f32.gmra.mxu0 %v706
      %v815 = vpop.f32.mrf.mxu0
      %v816 = vadd.f32 %v616, %v815
      %817 = vmatmul.f32.gmra.mxu0 %v709
      %v818 = vpop.f32.mrf.mxu0
      %v819 = vadd.f32 %v619, %v818
      %820 = vmatmul.f32.gmra.mxu0 %v712
      %v821 = vpop.f32.mrf.mxu0
      %v822 = vadd.f32 %v622, %v821
      %823 = vmatmul.f32.gmra.mxu0 %v715
      %v824 = vpop.f32.mrf.mxu0
      %v825 = vadd.f32 %v625, %v824
      %826 = vmatmul.f32.gmra.mxu0 %v718
      %v827 = vpop.f32.mrf.mxu0
      %v828 = vadd.f32 %v628, %v827
      %829 = vmatmul.f32.gmra.mxu0 %v721
      %v830 = vpop.f32.mrf.mxu0
      %v831 = vadd.f32 %v631, %v830
      %832 = vmatmul.f32.gmra.mxu0 %v724
      %v833 = vpop.f32.mrf.mxu0
      %v834 = vadd.f32 %v634, %v833
      %835 = vmatmul.f32.gmra.mxu0 %v727
      %v836 = vpop.f32.mrf.mxu0
      %v837 = vadd.f32 %v637, %v836
      %838 = vmatmul.f32.gmra.mxu0 %v730
      %v839 = vpop.f32.mrf.mxu0
      %v840 = vadd.f32 %v640, %v839
      %841 = vmatmul.f32.gmra.mxu0 %v733
      %v842 = vpop.f32.mrf.mxu0
      %v843 = vadd.f32 %v643, %v842
      %844 = vmatmul.f32.gmra.mxu0 %v736
      %v845 = vpop.f32.mrf.mxu0
      %v846 = vadd.f32 %v646, %v845
      %847 = vmatmul.f32.gmra.mxu0 %v739
      %v848 = vpop.f32.mrf.mxu0
      %v849 = vadd.f32 %v649, %v848
      %850 = vmatmul.f32.gmra.mxu0 %v742
      %v851 = vpop.f32.mrf.mxu0
      %v852 = vadd.f32 %v652, %v851
      %853 = vmatmul.f32.gmra.mxu0 %v745
      %v854 = vpop.f32.mrf.mxu0
      %v855 = vadd.f32 %v655, %v854
      %856 = vmatmul.f32.gmra.mxu0 %v748
      %v857 = vpop.f32.mrf.mxu0
      %v858 = vadd.f32 %v658, %v857
      %859 = vmatmul.f32.gmra.mxu0 %v751
      %v860 = vpop.f32.mrf.mxu0
      %v861 = vadd.f32 %v661, %v860
      %862 = vdwg.mxu0
      %v863 = vld [vmem:[#allocation2 + $0x9] sm:$0xff]
      %v864 = vld [vmem:[#allocation2 + $0x11] sm:$0xff]
      %v865 = vld [vmem:[#allocation2 + $0x19] sm:$0xff]
      %v866 = vld [vmem:[#allocation2 + $0x21] sm:$0xff]
      %v867 = vld [vmem:[#allocation2 + $0x29] sm:$0xff]
      %v868 = vld [vmem:[#allocation2 + $0x31] sm:$0xff]
      %v869 = vld [vmem:[#allocation2 + $0x39] sm:$0xff]
      %v870 = vld [vmem:[#allocation2 + $0x41] sm:$0xff]
      %v871 = vld [vmem:[#allocation2 + $0x49] sm:$0xff]
      %v872 = vld [vmem:[#allocation2 + $0x51] sm:$0xff]
      %v873 = vld [vmem:[#allocation2 + $0x59] sm:$0xff]
      %v874 = vld [vmem:[#allocation2 + $0x61] sm:$0xff]
      %v875 = vld [vmem:[#allocation2 + $0x69] sm:$0xff]
      %v876 = vld [vmem:[#allocation2 + $0x71] sm:$0xff]
      %v877 = vld [vmem:[#allocation2 + $0x79] sm:$0xff]
      %v878 = vld [vmem:[#allocation2 + $0x81] sm:$0xff]
      %v879 = vld [vmem:[#allocation2 + $0x89] sm:$0xff]
      %v880 = vld [vmem:[#allocation2 + $0x91] sm:$0xff]
      %v881 = vld [vmem:[#allocation2 + $0x99] sm:$0xff]
      %v882 = vld [vmem:[#allocation2 + $0xa1] sm:$0xff]
      %v883 = vld [vmem:[#allocation2 + $0xa9] sm:$0xff]
      %v884 = vld [vmem:[#allocation2 + $0xb1] sm:$0xff]
      %v885 = vld [vmem:[#allocation2 + $0xb9] sm:$0xff]
      %v886 = vld [vmem:[#allocation2 + $0xc1] sm:$0xff]
      %v887 = vld [vmem:[#allocation2 + $0xc9] sm:$0xff]
      %v888 = vld [vmem:[#allocation2 + $0xd1] sm:$0xff]
      %v889 = vld [vmem:[#allocation2 + $0xd9] sm:$0xff]
      %v890 = vld [vmem:[#allocation2 + $0xe1] sm:$0xff]
      %v891 = vld [vmem:[#allocation2 + $0xe9] sm:$0xff]
      %v892 = vld [vmem:[#allocation2 + $0xf1] sm:$0xff]
      %s893 = scalar_lea.vmem %s2, 8
      %v894 = vld [vmem:[%s893] sm:$0xf]
      %v896 = vsel %vm322, %v863, 0
      %v899 = vsel %vm322, %v864, 0
      %v902 = vsel %vm322, %v865, 0
      %v905 = vsel %vm322, %v866, 0
      %v908 = vsel %vm322, %v867, 0
      %v911 = vsel %vm322, %v868, 0
      %v914 = vsel %vm322, %v869, 0
      %v917 = vsel %vm322, %v870, 0
      %v920 = vsel %vm322, %v871, 0
      %v923 = vsel %vm322, %v872, 0
      %v926 = vsel %vm322, %v873, 0
      %v929 = vsel %vm322, %v874, 0
      %v932 = vsel %vm322, %v875, 0
      %v935 = vsel %vm322, %v876, 0
      %v938 = vsel %vm322, %v877, 0
      %v941 = vsel %vm322, %v878, 0
      %v944 = vsel %vm322, %v879, 0
      %v947 = vsel %vm322, %v880, 0
      %v950 = vsel %vm322, %v881, 0
      %v953 = vsel %vm322, %v882, 0
      %v956 = vsel %vm322, %v883, 0
      %v959 = vsel %vm322, %v884, 0
      %v962 = vsel %vm322, %v885, 0
      %v965 = vsel %vm322, %v886, 0
      %v968 = vsel %vm322, %v887, 0
      %v971 = vsel %vm322, %v888, 0
      %v974 = vsel %vm322, %v889, 0
      %v977 = vsel %vm322, %v890, 0
      %v980 = vsel %vm322, %v891, 0
      %v983 = vsel %vm322, %v892, 0
      %v986 = vsel %vm552, %v894, 0
      %988 = vmatpush.msra.mxu0 0.0
      %989 = vmatpush.msra.mxu0 0.0
      %990 = vmatpush.msra.mxu0 0.0
      %991 = vmatpush.msra.mxu0 0.0
      %992 = vmatpush.msra.mxu0 0.0
      %993 = vmatpush.msra.mxu0 0.0
      %994 = vmatpush.msra.mxu0 0.0
      %995 = vmatpush.msra.mxu0 0.0
      %996 = vmatpush.msra.mxu0 0.0
      %997 = vmatpush.msra.mxu0 0.0
      %998 = vmatpush.msra.mxu0 0.0
      %999 = vmatpush.msra.mxu0 0.0
      %1000 = vmatpush.msra.mxu0 0.0
      %1001 = vmatpush.msra.mxu0 0.0
      %1002 = vmatpush.msra.mxu0 0.0
      %1003 = vmatpush.msra.mxu0 %v986
      %1004 = vmatmul.f32.gmra.mxu0 %v896
      %v1005 = vpop.f32.mrf.mxu0
      %v1006 = vadd.f32 0.0, %v1005
      %1007 = vmatmul.f32.gmra.mxu0 %v899
      %v1008 = vpop.f32.mrf.mxu0
      %v1009 = vadd.f32 0.0, %v1008
      %1010 = vmatmul.f32.gmra.mxu0 %v902
      %v1011 = vpop.f32.mrf.mxu0
      %v1012 = vadd.f32 0.0, %v1011
      %1013 = vmatmul.f32.gmra.mxu0 %v905
      %v1014 = vpop.f32.mrf.mxu0
      %v1015 = vadd.f32 0.0, %v1014
      %1016 = vmatmul.f32.gmra.mxu0 %v908
      %v1017 = vpop.f32.mrf.mxu0
      %v1018 = vadd.f32 0.0, %v1017
      %1019 = vmatmul.f32.gmra.mxu0 %v911
      %v1020 = vpop.f32.mrf.mxu0
      %v1021 = vadd.f32 0.0, %v1020
      %1022 = vmatmul.f32.gmra.mxu0 %v914
      %v1023 = vpop.f32.mrf.mxu0
      %v1024 = vadd.f32 0.0, %v1023
      %1025 = vmatmul.f32.gmra.mxu0 %v917
      %v1026 = vpop.f32.mrf.mxu0
      %v1027 = vadd.f32 0.0, %v1026
      %1028 = vmatmul.f32.gmra.mxu0 %v920
      %v1029 = vpop.f32.mrf.mxu0
      %v1030 = vadd.f32 0.0, %v1029
      %1031 = vmatmul.f32.gmra.mxu0 %v923
      %v1032 = vpop.f32.mrf.mxu0
      %v1033 = vadd.f32 0.0, %v1032
      %1034 = vmatmul.f32.gmra.mxu0 %v926
      %v1035 = vpop.f32.mrf.mxu0
      %v1036 = vadd.f32 0.0, %v1035
      %1037 = vmatmul.f32.gmra.mxu0 %v929
      %v1038 = vpop.f32.mrf.mxu0
      %v1039 = vadd.f32 0.0, %v1038
      %1040 = vmatmul.f32.gmra.mxu0 %v932
      %v1041 = vpop.f32.mrf.mxu0
      %v1042 = vadd.f32 0.0, %v1041
      %1043 = vmatmul.f32.gmra.mxu0 %v935
      %v1044 = vpop.f32.mrf.mxu0
      %v1045 = vadd.f32 0.0, %v1044
      %1046 = vmatmul.f32.gmra.mxu0 %v938
      %v1047 = vpop.f32.mrf.mxu0
      %v1048 = vadd.f32 0.0, %v1047
      %1049 = vmatmul.f32.gmra.mxu0 %v941
      %v1050 = vpop.f32.mrf.mxu0
      %v1051 = vadd.f32 0.0, %v1050
      %1052 = vmatmul.f32.gmra.mxu0 %v944
      %v1053 = vpop.f32.mrf.mxu0
      %v1054 = vadd.f32 0.0, %v1053
      %1055 = vmatmul.f32.gmra.mxu0 %v947
      %v1056 = vpop.f32.mrf.mxu0
      %v1057 = vadd.f32 0.0, %v1056
      %1058 = vmatmul.f32.gmra.mxu0 %v950
      %v1059 = vpop.f32.mrf.mxu0
      %v1060 = vadd.f32 0.0, %v1059
      %1061 = vmatmul.f32.gmra.mxu0 %v953
      %v1062 = vpop.f32.mrf.mxu0
      %v1063 = vadd.f32 0.0, %v1062
      %1064 = vmatmul.f32.gmra.mxu0 %v956
      %v1065 = vpop.f32.mrf.mxu0
      %v1066 = vadd.f32 0.0, %v1065
      %1067 = vmatmul.f32.gmra.mxu0 %v959
      %v1068 = vpop.f32.mrf.mxu0
      %v1069 = vadd.f32 0.0, %v1068
      %1070 = vmatmul.f32.gmra.mxu0 %v962
      %v1071 = vpop.f32.mrf.mxu0
      %v1072 = vadd.f32 0.0, %v1071
      %1073 = vmatmul.f32.gmra.mxu0 %v965
      %v1074 = vpop.f32.mrf.mxu0
      %v1075 = vadd.f32 0.0, %v1074
      %1076 = vmatmul.f32.gmra.mxu0 %v968
      %v1077 = vpop.f32.mrf.mxu0
      %v1078 = vadd.f32 0.0, %v1077
      %1079 = vmatmul.f32.gmra.mxu0 %v971
      %v1080 = vpop.f32.mrf.mxu0
      %v1081 = vadd.f32 0.0, %v1080
      %1082 = vmatmul.f32.gmra.mxu0 %v974
      %v1083 = vpop.f32.mrf.mxu0
      %v1084 = vadd.f32 0.0, %v1083
      %1085 = vmatmul.f32.gmra.mxu0 %v977
      %v1086 = vpop.f32.mrf.mxu0
      %v1087 = vadd.f32 0.0, %v1086
      %1088 = vmatmul.f32.gmra.mxu0 %v980
      %v1089 = vpop.f32.mrf.mxu0
      %v1090 = vadd.f32 0.0, %v1089
      %1091 = vmatmul.f32.gmra.mxu0 %v983
      %v1092 = vpop.f32.mrf.mxu0
      %v1093 = vadd.f32 0.0, %v1092
      %1094 = vdwg.mxu0
      %v1095 = vadd.f32 %v774, %v1006
      %v1096 = vadd.f32 %v777, %v1009
      %v1097 = vadd.f32 %v780, %v1012
      %v1098 = vadd.f32 %v783, %v1015
      %v1099 = vadd.f32 %v786, %v1018
      %v1100 = vadd.f32 %v789, %v1021
      %v1101 = vadd.f32 %v792, %v1024
      %v1102 = vadd.f32 %v795, %v1027
      %v1103 = vadd.f32 %v798, %v1030
      %v1104 = vadd.f32 %v801, %v1033
      %v1105 = vadd.f32 %v804, %v1036
      %v1106 = vadd.f32 %v807, %v1039
      %v1107 = vadd.f32 %v810, %v1042
      %v1108 = vadd.f32 %v813, %v1045
      %v1109 = vadd.f32 %v816, %v1048
      %v1110 = vadd.f32 %v819, %v1051
      %v1111 = vadd.f32 %v822, %v1054
      %v1112 = vadd.f32 %v825, %v1057
      %v1113 = vadd.f32 %v828, %v1060
      %v1114 = vadd.f32 %v831, %v1063
      %v1115 = vadd.f32 %v834, %v1066
      %v1116 = vadd.f32 %v837, %v1069
      %v1117 = vadd.f32 %v840, %v1072
      %v1118 = vadd.f32 %v843, %v1075
      %v1119 = vadd.f32 %v846, %v1078
      %v1120 = vadd.f32 %v849, %v1081
      %v1121 = vadd.f32 %v852, %v1084
      %v1122 = vadd.f32 %v855, %v1087
      %v1123 = vadd.f32 %v858, %v1090
      %v1124 = vadd.f32 %v861, %v1093
      %v1125 = vld [vmem:[#allocation2 + $0x1f] sm:$0xff]
      %v1126 = vld [vmem:[#allocation2 + $0x27] sm:$0xff]
      %v1127 = vld [vmem:[#allocation2 + $0x2f] sm:$0xff]
      %v1128 = vld [vmem:[#allocation2 + $0x37] sm:$0xff]
      %v1129 = vld [vmem:[#allocation2 + $0x3f] sm:$0xff]
      %v1130 = vld [vmem:[#allocation2 + $0x47] sm:$0xff]
      %v1131 = vld [vmem:[#allocation2 + $0x4f] sm:$0xff]
      %v1132 = vld [vmem:[#allocation2 + $0x57] sm:$0xff]
      %v1133 = vld [vmem:[#allocation2 + $0x5f] sm:$0xff]
      %v1134 = vld [vmem:[#allocation2 + $0x67] sm:$0xff]
      %v1135 = vld [vmem:[#allocation2 + $0x6f] sm:$0xff]
      %v1136 = vld [vmem:[#allocation2 + $0x77] sm:$0xff]
      %v1137 = vld [vmem:[#allocation2 + $0x7f] sm:$0xff]
      %v1138 = vld [vmem:[#allocation2 + $0x87] sm:$0xff]
      %v1139 = vld [vmem:[#allocation2 + $0x8f] sm:$0xff]
      %v1140 = vld [vmem:[#allocation2 + $0x97] sm:$0xff]
      %v1141 = vld [vmem:[#allocation2 + $0x9f] sm:$0xff]
      %v1142 = vld [vmem:[#allocation2 + $0xa7] sm:$0xff]
      %v1143 = vld [vmem:[#allocation2 + $0xaf] sm:$0xff]
      %v1144 = vld [vmem:[#allocation2 + $0xb7] sm:$0xff]
      %v1145 = vld [vmem:[#allocation2 + $0xbf] sm:$0xff]
      %v1146 = vld [vmem:[#allocation2 + $0xc7] sm:$0xff]
      %v1147 = vld [vmem:[#allocation2 + $0xcf] sm:$0xff]
      %v1148 = vld [vmem:[#allocation2 + $0xd7] sm:$0xff]
      %v1149 = vld [vmem:[#allocation2 + $0xdf] sm:$0xff]
      %v1150 = vld [vmem:[#allocation2 + $0xe7] sm:$0xff]
      %v1151 = vld [vmem:[#allocation2 + $0xef] sm:$0xff]
      %v1152 = vld [vmem:[#allocation2 + $0xf7] sm:$0xff]
      %v1153 = vld [vmem:[#allocation2 + $0xff] sm:$0xff]
      %v1154 = vld [vmem:[#allocation2 + $0x107] sm:$0xff]
      %s1155 = scalar_lea.vmem %s2, 12
      %v1156 = vld [vmem:[%s1155] sm:$0xf]
      %v1158 = vsel %vm322, %v1125, 0
      %v1161 = vsel %vm322, %v1126, 0
      %v1164 = vsel %vm322, %v1127, 0
      %v1167 = vsel %vm322, %v1128, 0
      %v1170 = vsel %vm322, %v1129, 0
      %v1173 = vsel %vm322, %v1130, 0
      %v1176 = vsel %vm322, %v1131, 0
      %v1179 = vsel %vm322, %v1132, 0
      %v1182 = vsel %vm322, %v1133, 0
      %v1185 = vsel %vm322, %v1134, 0
      %v1188 = vsel %vm322, %v1135, 0
      %v1191 = vsel %vm322, %v1136, 0
      %v1194 = vsel %vm322, %v1137, 0
      %v1197 = vsel %vm322, %v1138, 0
      %v1200 = vsel %vm322, %v1139, 0
      %v1203 = vsel %vm322, %v1140, 0
      %v1206 = vsel %vm322, %v1141, 0
      %v1209 = vsel %vm322, %v1142, 0
      %v1212 = vsel %vm322, %v1143, 0
      %v1215 = vsel %vm322, %v1144, 0
      %v1218 = vsel %vm322, %v1145, 0
      %v1221 = vsel %vm322, %v1146, 0
      %v1224 = vsel %vm322, %v1147, 0
      %v1227 = vsel %vm322, %v1148, 0
      %v1230 = vsel %vm322, %v1149, 0
      %v1233 = vsel %vm322, %v1150, 0
      %v1236 = vsel %vm322, %v1151, 0
      %v1239 = vsel %vm322, %v1152, 0
      %v1242 = vsel %vm322, %v1153, 0
      %v1245 = vsel %vm322, %v1154, 0
      %v1248 = vsel %vm552, %v1156, 0
      %1250 = vmatpush.msra.mxu0 0.0
      %1251 = vmatpush.msra.mxu0 0.0
      %1252 = vmatpush.msra.mxu0 0.0
      %1253 = vmatpush.msra.mxu0 0.0
      %1254 = vmatpush.msra.mxu0 0.0
      %1255 = vmatpush.msra.mxu0 0.0
      %1256 = vmatpush.msra.mxu0 0.0
      %1257 = vmatpush.msra.mxu0 0.0
      %1258 = vmatpush.msra.mxu0 0.0
      %1259 = vmatpush.msra.mxu0 0.0
      %1260 = vmatpush.msra.mxu0 0.0
      %1261 = vmatpush.msra.mxu0 0.0
      %1262 = vmatpush.msra.mxu0 0.0
      %1263 = vmatpush.msra.mxu0 0.0
      %1264 = vmatpush.msra.mxu0 0.0
      %1265 = vmatpush.msra.mxu0 %v1248
      %1266 = vmatmul.f32.gmra.mxu0 %v1158
      %v1267 = vpop.f32.mrf.mxu0
      %v1268 = vadd.f32 0.0, %v1267
      %1269 = vmatmul.f32.gmra.mxu0 %v1161
      %v1270 = vpop.f32.mrf.mxu0
      %v1271 = vadd.f32 0.0, %v1270
      %1272 = vmatmul.f32.gmra.mxu0 %v1164
      %v1273 = vpop.f32.mrf.mxu0
      %v1274 = vadd.f32 0.0, %v1273
      %1275 = vmatmul.f32.gmra.mxu0 %v1167
      %v1276 = vpop.f32.mrf.mxu0
      %v1277 = vadd.f32 0.0, %v1276
      %1278 = vmatmul.f32.gmra.mxu0 %v1170
      %v1279 = vpop.f32.mrf.mxu0
      %v1280 = vadd.f32 0.0, %v1279
      %1281 = vmatmul.f32.gmra.mxu0 %v1173
      %v1282 = vpop.f32.mrf.mxu0
      %v1283 = vadd.f32 0.0, %v1282
      %1284 = vmatmul.f32.gmra.mxu0 %v1176
      %v1285 = vpop.f32.mrf.mxu0
      %v1286 = vadd.f32 0.0, %v1285
      %1287 = vmatmul.f32.gmra.mxu0 %v1179
      %v1288 = vpop.f32.mrf.mxu0
      %v1289 = vadd.f32 0.0, %v1288
      %1290 = vmatmul.f32.gmra.mxu0 %v1182
      %v1291 = vpop.f32.mrf.mxu0
      %v1292 = vadd.f32 0.0, %v1291
      %1293 = vmatmul.f32.gmra.mxu0 %v1185
      %v1294 = vpop.f32.mrf.mxu0
      %v1295 = vadd.f32 0.0, %v1294
      %1296 = vmatmul.f32.gmra.mxu0 %v1188
      %v1297 = vpop.f32.mrf.mxu0
      %v1298 = vadd.f32 0.0, %v1297
      %1299 = vmatmul.f32.gmra.mxu0 %v1191
      %v1300 = vpop.f32.mrf.mxu0
      %v1301 = vadd.f32 0.0, %v1300
      %1302 = vmatmul.f32.gmra.mxu0 %v1194
      %v1303 = vpop.f32.mrf.mxu0
      %v1304 = vadd.f32 0.0, %v1303
      %1305 = vmatmul.f32.gmra.mxu0 %v1197
      %v1306 = vpop.f32.mrf.mxu0
      %v1307 = vadd.f32 0.0, %v1306
      %1308 = vmatmul.f32.gmra.mxu0 %v1200
      %v1309 = vpop.f32.mrf.mxu0
      %v1310 = vadd.f32 0.0, %v1309
      %1311 = vmatmul.f32.gmra.mxu0 %v1203
      %v1312 = vpop.f32.mrf.mxu0
      %v1313 = vadd.f32 0.0, %v1312
      %1314 = vmatmul.f32.gmra.mxu0 %v1206
      %v1315 = vpop.f32.mrf.mxu0
      %v1316 = vadd.f32 0.0, %v1315
      %1317 = vmatmul.f32.gmra.mxu0 %v1209
      %v1318 = vpop.f32.mrf.mxu0
      %v1319 = vadd.f32 0.0, %v1318
      %1320 = vmatmul.f32.gmra.mxu0 %v1212
      %v1321 = vpop.f32.mrf.mxu0
      %v1322 = vadd.f32 0.0, %v1321
      %1323 = vmatmul.f32.gmra.mxu0 %v1215
      %v1324 = vpop.f32.mrf.mxu0
      %v1325 = vadd.f32 0.0, %v1324
      %1326 = vmatmul.f32.gmra.mxu0 %v1218
      %v1327 = vpop.f32.mrf.mxu0
      %v1328 = vadd.f32 0.0, %v1327
      %1329 = vmatmul.f32.gmra.mxu0 %v1221
      %v1330 = vpop.f32.mrf.mxu0
      %v1331 = vadd.f32 0.0, %v1330
      %1332 = vmatmul.f32.gmra.mxu0 %v1224
      %v1333 = vpop.f32.mrf.mxu0
      %v1334 = vadd.f32 0.0, %v1333
      %1335 = vmatmul.f32.gmra.mxu0 %v1227
      %v1336 = vpop.f32.mrf.mxu0
      %v1337 = vadd.f32 0.0, %v1336
      %1338 = vmatmul.f32.gmra.mxu0 %v1230
      %v1339 = vpop.f32.mrf.mxu0
      %v1340 = vadd.f32 0.0, %v1339
      %1341 = vmatmul.f32.gmra.mxu0 %v1233
      %v1342 = vpop.f32.mrf.mxu0
      %v1343 = vadd.f32 0.0, %v1342
      %1344 = vmatmul.f32.gmra.mxu0 %v1236
      %v1345 = vpop.f32.mrf.mxu0
      %v1346 = vadd.f32 0.0, %v1345
      %1347 = vmatmul.f32.gmra.mxu0 %v1239
      %v1348 = vpop.f32.mrf.mxu0
      %v1349 = vadd.f32 0.0, %v1348
      %1350 = vmatmul.f32.gmra.mxu0 %v1242
      %v1351 = vpop.f32.mrf.mxu0
      %v1352 = vadd.f32 0.0, %v1351
      %1353 = vmatmul.f32.gmra.mxu0 %v1245
      %v1354 = vpop.f32.mrf.mxu0
      %v1355 = vadd.f32 0.0, %v1354
      %1356 = vdwg.mxu0
      %v1357 = vadd.f32 %v1095, %v1268
      %v1358 = vadd.f32 %v1096, %v1271
      %v1359 = vadd.f32 %v1097, %v1274
      %v1360 = vadd.f32 %v1098, %v1277
      %v1361 = vadd.f32 %v1099, %v1280
      %v1362 = vadd.f32 %v1100, %v1283
      %v1363 = vadd.f32 %v1101, %v1286
      %v1364 = vadd.f32 %v1102, %v1289
      %v1365 = vadd.f32 %v1103, %v1292
      %v1366 = vadd.f32 %v1104, %v1295
      %v1367 = vadd.f32 %v1105, %v1298
      %v1368 = vadd.f32 %v1106, %v1301
      %v1369 = vadd.f32 %v1107, %v1304
      %v1370 = vadd.f32 %v1108, %v1307
      %v1371 = vadd.f32 %v1109, %v1310
      %v1372 = vadd.f32 %v1110, %v1313
      %v1373 = vadd.f32 %v1111, %v1316
      %v1374 = vadd.f32 %v1112, %v1319
      %v1375 = vadd.f32 %v1113, %v1322
      %v1376 = vadd.f32 %v1114, %v1325
      %v1377 = vadd.f32 %v1115, %v1328
      %v1378 = vadd.f32 %v1116, %v1331
      %v1379 = vadd.f32 %v1117, %v1334
      %v1380 = vadd.f32 %v1118, %v1337
      %v1381 = vadd.f32 %v1119, %v1340
      %v1382 = vadd.f32 %v1120, %v1343
      %v1383 = vadd.f32 %v1121, %v1346
      %v1384 = vadd.f32 %v1122, %v1349
      %v1385 = vadd.f32 %v1123, %v1352
      %v1386 = vadd.f32 %v1124, %v1355
      %v1387 = vld [vmem:[#allocation2 + $0x20] sm:$0xff]
      %v1388 = vld [vmem:[#allocation2 + $0x28] sm:$0xff]
      %v1389 = vld [vmem:[#allocation2 + $0x30] sm:$0xff]
      %v1390 = vld [vmem:[#allocation2 + $0x38] sm:$0xff]
      %v1391 = vld [vmem:[#allocation2 + $0x40] sm:$0xff]
      %v1392 = vld [vmem:[#allocation2 + $0x48] sm:$0xff]
      %v1393 = vld [vmem:[#allocation2 + $0x50] sm:$0xff]
      %v1394 = vld [vmem:[#allocation2 + $0x58] sm:$0xff]
      %v1395 = vld [vmem:[#allocation2 + $0x60] sm:$0xff]
      %v1396 = vld [vmem:[#allocation2 + $0x68] sm:$0xff]
      %v1397 = vld [vmem:[#allocation2 + $0x70] sm:$0xff]
      %v1398 = vld [vmem:[#allocation2 + $0x78] sm:$0xff]
      %v1399 = vld [vmem:[#allocation2 + $0x80] sm:$0xff]
      %v1400 = vld [vmem:[#allocation2 + $0x88] sm:$0xff]
      %v1401 = vld [vmem:[#allocation2 + $0x90] sm:$0xff]
      %v1402 = vld [vmem:[#allocation2 + $0x98] sm:$0xff]
      %v1403 = vld [vmem:[#allocation2 + $0xa0] sm:$0xff]
      %v1404 = vld [vmem:[#allocation2 + $0xa8] sm:$0xff]
      %v1405 = vld [vmem:[#allocation2 + $0xb0] sm:$0xff]
      %v1406 = vld [vmem:[#allocation2 + $0xb8] sm:$0xff]
      %v1407 = vld [vmem:[#allocation2 + $0xc0] sm:$0xff]
      %v1408 = vld [vmem:[#allocation2 + $0xc8] sm:$0xff]
      %v1409 = vld [vmem:[#allocation2 + $0xd0] sm:$0xff]
      %v1410 = vld [vmem:[#allocation2 + $0xd8] sm:$0xff]
      %v1411 = vld [vmem:[#allocation2 + $0xe0] sm:$0xff]
      %v1412 = vld [vmem:[#allocation2 + $0xe8] sm:$0xff]
      %v1413 = vld [vmem:[#allocation2 + $0xf0] sm:$0xff]
      %v1414 = vld [vmem:[#allocation2 + $0xf8] sm:$0xff]
      %v1415 = vld [vmem:[#allocation2 + $0x100] sm:$0xff]
      %v1416 = vld [vmem:[#allocation2 + $0x108] sm:$0xff]
      %s1417 = scalar_lea.vmem %s2, 16
      %v1418 = vld [vmem:[%s1417] sm:$0xf]
      %v1420 = vsel %vm322, %v1387, 0
      %v1423 = vsel %vm322, %v1388, 0
      %v1426 = vsel %vm322, %v1389, 0
      %v1429 = vsel %vm322, %v1390, 0
      %v1432 = vsel %vm322, %v1391, 0
      %v1435 = vsel %vm322, %v1392, 0
      %v1438 = vsel %vm322, %v1393, 0
      %v1441 = vsel %vm322, %v1394, 0
      %v1444 = vsel %vm322, %v1395, 0
      %v1447 = vsel %vm322, %v1396, 0
      %v1450 = vsel %vm322, %v1397, 0
      %v1453 = vsel %vm322, %v1398, 0
      %v1456 = vsel %vm322, %v1399, 0
      %v1459 = vsel %vm322, %v1400, 0
      %v1462 = vsel %vm322, %v1401, 0
      %v1465 = vsel %vm322, %v1402, 0
      %v1468 = vsel %vm322, %v1403, 0
      %v1471 = vsel %vm322, %v1404, 0
      %v1474 = vsel %vm322, %v1405, 0
      %v1477 = vsel %vm322, %v1406, 0
      %v1480 = vsel %vm322, %v1407, 0
      %v1483 = vsel %vm322, %v1408, 0
      %v1486 = vsel %vm322, %v1409, 0
      %v1489 = vsel %vm322, %v1410, 0
      %v1492 = vsel %vm322, %v1411, 0
      %v1495 = vsel %vm322, %v1412, 0
      %v1498 = vsel %vm322, %v1413, 0
      %v1501 = vsel %vm322, %v1414, 0
      %v1504 = vsel %vm322, %v1415, 0
      %v1507 = vsel %vm322, %v1416, 0
      %v1510 = vsel %vm552, %v1418, 0
      %1512 = vmatpush.msra.mxu0 0.0
      %1513 = vmatpush.msra.mxu0 0.0
      %1514 = vmatpush.msra.mxu0 0.0
      %1515 = vmatpush.msra.mxu0 0.0
      %1516 = vmatpush.msra.mxu0 0.0
      %1517 = vmatpush.msra.mxu0 0.0
      %1518 = vmatpush.msra.mxu0 0.0
      %1519 = vmatpush.msra.mxu0 0.0
      %1520 = vmatpush.msra.mxu0 0.0
      %1521 = vmatpush.msra.mxu0 0.0
      %1522 = vmatpush.msra.mxu0 0.0
      %1523 = vmatpush.msra.mxu0 0.0
      %1524 = vmatpush.msra.mxu0 0.0
      %1525 = vmatpush.msra.mxu0 0.0
      %1526 = vmatpush.msra.mxu0 0.0
      %1527 = vmatpush.msra.mxu0 %v1510
      %1528 = vmatmul.f32.gmra.mxu0 %v1420
      %v1529 = vpop.f32.mrf.mxu0
      %v1530 = vadd.f32 0.0, %v1529
      %1531 = vmatmul.f32.gmra.mxu0 %v1423
      %v1532 = vpop.f32.mrf.mxu0
      %v1533 = vadd.f32 0.0, %v1532
      %1534 = vmatmul.f32.gmra.mxu0 %v1426
      %v1535 = vpop.f32.mrf.mxu0
      %v1536 = vadd.f32 0.0, %v1535
      %1537 = vmatmul.f32.gmra.mxu0 %v1429
      %v1538 = vpop.f32.mrf.mxu0
      %v1539 = vadd.f32 0.0, %v1538
      %1540 = vmatmul.f32.gmra.mxu0 %v1432
      %v1541 = vpop.f32.mrf.mxu0
      %v1542 = vadd.f32 0.0, %v1541
      %1543 = vmatmul.f32.gmra.mxu0 %v1435
      %v1544 = vpop.f32.mrf.mxu0
      %v1545 = vadd.f32 0.0, %v1544
      %1546 = vmatmul.f32.gmra.mxu0 %v1438
      %v1547 = vpop.f32.mrf.mxu0
      %v1548 = vadd.f32 0.0, %v1547
      %1549 = vmatmul.f32.gmra.mxu0 %v1441
      %v1550 = vpop.f32.mrf.mxu0
      %v1551 = vadd.f32 0.0, %v1550
      %1552 = vmatmul.f32.gmra.mxu0 %v1444
      %v1553 = vpop.f32.mrf.mxu0
      %v1554 = vadd.f32 0.0, %v1553
      %1555 = vmatmul.f32.gmra.mxu0 %v1447
      %v1556 = vpop.f32.mrf.mxu0
      %v1557 = vadd.f32 0.0, %v1556
      %1558 = vmatmul.f32.gmra.mxu0 %v1450
      %v1559 = vpop.f32.mrf.mxu0
      %v1560 = vadd.f32 0.0, %v1559
      %1561 = vmatmul.f32.gmra.mxu0 %v1453
      %v1562 = vpop.f32.mrf.mxu0
      %v1563 = vadd.f32 0.0, %v1562
      %1564 = vmatmul.f32.gmra.mxu0 %v1456
      %v1565 = vpop.f32.mrf.mxu0
      %v1566 = vadd.f32 0.0, %v1565
      %1567 = vmatmul.f32.gmra.mxu0 %v1459
      %v1568 = vpop.f32.mrf.mxu0
      %v1569 = vadd.f32 0.0, %v1568
      %1570 = vmatmul.f32.gmra.mxu0 %v1462
      %v1571 = vpop.f32.mrf.mxu0
      %v1572 = vadd.f32 0.0, %v1571
      %1573 = vmatmul.f32.gmra.mxu0 %v1465
      %v1574 = vpop.f32.mrf.mxu0
      %v1575 = vadd.f32 0.0, %v1574
      %1576 = vmatmul.f32.gmra.mxu0 %v1468
      %v1577 = vpop.f32.mrf.mxu0
      %v1578 = vadd.f32 0.0, %v1577
      %1579 = vmatmul.f32.gmra.mxu0 %v1471
      %v1580 = vpop.f32.mrf.mxu0
      %v1581 = vadd.f32 0.0, %v1580
      %1582 = vmatmul.f32.gmra.mxu0 %v1474
      %v1583 = vpop.f32.mrf.mxu0
      %v1584 = vadd.f32 0.0, %v1583
      %1585 = vmatmul.f32.gmra.mxu0 %v1477
      %v1586 = vpop.f32.mrf.mxu0
      %v1587 = vadd.f32 0.0, %v1586
      %1588 = vmatmul.f32.gmra.mxu0 %v1480
      %v1589 = vpop.f32.mrf.mxu0
      %v1590 = vadd.f32 0.0, %v1589
      %1591 = vmatmul.f32.gmra.mxu0 %v1483
      %v1592 = vpop.f32.mrf.mxu0
      %v1593 = vadd.f32 0.0, %v1592
      %1594 = vmatmul.f32.gmra.mxu0 %v1486
      %v1595 = vpop.f32.mrf.mxu0
      %v1596 = vadd.f32 0.0, %v1595
      %1597 = vmatmul.f32.gmra.mxu0 %v1489
      %v1598 = vpop.f32.mrf.mxu0
      %v1599 = vadd.f32 0.0, %v1598
      %1600 = vmatmul.f32.gmra.mxu0 %v1492
      %v1601 = vpop.f32.mrf.mxu0
      %v1602 = vadd.f32 0.0, %v1601
      %1603 = vmatmul.f32.gmra.mxu0 %v1495
      %v1604 = vpop.f32.mrf.mxu0
      %v1605 = vadd.f32 0.0, %v1604
      %1606 = vmatmul.f32.gmra.mxu0 %v1498
      %v1607 = vpop.f32.mrf.mxu0
      %v1608 = vadd.f32 0.0, %v1607
      %1609 = vmatmul.f32.gmra.mxu0 %v1501
      %v1610 = vpop.f32.mrf.mxu0
      %v1611 = vadd.f32 0.0, %v1610
      %1612 = vmatmul.f32.gmra.mxu0 %v1504
      %v1613 = vpop.f32.mrf.mxu0
      %v1614 = vadd.f32 0.0, %v1613
      %1615 = vmatmul.f32.gmra.mxu0 %v1507
      %v1616 = vpop.f32.mrf.mxu0
      %v1617 = vadd.f32 0.0, %v1616
      %1618 = vdwg.mxu0
      %v1619 = vadd.f32 %v1357, %v1530
      %v1620 = vadd.f32 %v1358, %v1533
      %v1621 = vadd.f32 %v1359, %v1536
      %v1622 = vadd.f32 %v1360, %v1539
      %v1623 = vadd.f32 %v1361, %v1542
      %v1624 = vadd.f32 %v1362, %v1545
      %v1625 = vadd.f32 %v1363, %v1548
      %v1626 = vadd.f32 %v1364, %v1551
      %v1627 = vadd.f32 %v1365, %v1554
      %v1628 = vadd.f32 %v1366, %v1557
      %v1629 = vadd.f32 %v1367, %v1560
      %v1630 = vadd.f32 %v1368, %v1563
      %v1631 = vadd.f32 %v1369, %v1566
      %v1632 = vadd.f32 %v1370, %v1569
      %v1633 = vadd.f32 %v1371, %v1572
      %v1634 = vadd.f32 %v1372, %v1575
      %v1635 = vadd.f32 %v1373, %v1578
      %v1636 = vadd.f32 %v1374, %v1581
      %v1637 = vadd.f32 %v1375, %v1584
      %v1638 = vadd.f32 %v1376, %v1587
      %v1639 = vadd.f32 %v1377, %v1590
      %v1640 = vadd.f32 %v1378, %v1593
      %v1641 = vadd.f32 %v1379, %v1596
      %v1642 = vadd.f32 %v1380, %v1599
      %v1643 = vadd.f32 %v1381, %v1602
      %v1644 = vadd.f32 %v1382, %v1605
      %v1645 = vadd.f32 %v1383, %v1608
      %v1646 = vadd.f32 %v1384, %v1611
      %v1647 = vadd.f32 %v1385, %v1614
      %v1648 = vadd.f32 %v1386, %v1617
      %v1649 = vld [vmem:[#allocation2 + $0x21] sm:$0xff]
      %v1650 = vld [vmem:[#allocation2 + $0x29] sm:$0xff]
      %v1651 = vld [vmem:[#allocation2 + $0x31] sm:$0xff]
      %v1652 = vld [vmem:[#allocation2 + $0x39] sm:$0xff]
      %v1653 = vld [vmem:[#allocation2 + $0x41] sm:$0xff]
      %v1654 = vld [vmem:[#allocation2 + $0x49] sm:$0xff]
      %v1655 = vld [vmem:[#allocation2 + $0x51] sm:$0xff]
      %v1656 = vld [vmem:[#allocation2 + $0x59] sm:$0xff]
      %v1657 = vld [vmem:[#allocation2 + $0x61] sm:$0xff]
      %v1658 = vld [vmem:[#allocation2 + $0x69] sm:$0xff]
      %v1659 = vld [vmem:[#allocation2 + $0x71] sm:$0xff]
      %v1660 = vld [vmem:[#allocation2 + $0x79] sm:$0xff]
      %v1661 = vld [vmem:[#allocation2 + $0x81] sm:$0xff]
      %v1662 = vld [vmem:[#allocation2 + $0x89] sm:$0xff]
      %v1663 = vld [vmem:[#allocation2 + $0x91] sm:$0xff]
      %v1664 = vld [vmem:[#allocation2 + $0x99] sm:$0xff]
      %v1665 = vld [vmem:[#allocation2 + $0xa1] sm:$0xff]
      %v1666 = vld [vmem:[#allocation2 + $0xa9] sm:$0xff]
      %v1667 = vld [vmem:[#allocation2 + $0xb1] sm:$0xff]
      %v1668 = vld [vmem:[#allocation2 + $0xb9] sm:$0xff]
      %v1669 = vld [vmem:[#allocation2 + $0xc1] sm:$0xff]
      %v1670 = vld [vmem:[#allocation2 + $0xc9] sm:$0xff]
      %v1671 = vld [vmem:[#allocation2 + $0xd1] sm:$0xff]
      %v1672 = vld [vmem:[#allocation2 + $0xd9] sm:$0xff]
      %v1673 = vld [vmem:[#allocation2 + $0xe1] sm:$0xff]
      %v1674 = vld [vmem:[#allocation2 + $0xe9] sm:$0xff]
      %v1675 = vld [vmem:[#allocation2 + $0xf1] sm:$0xff]
      %v1676 = vld [vmem:[#allocation2 + $0xf9] sm:$0xff]
      %v1677 = vld [vmem:[#allocation2 + $0x101] sm:$0xff]
      %v1678 = vld [vmem:[#allocation2 + $0x109] sm:$0xff]
      %s1679 = scalar_lea.vmem %s2, 20
      %v1680 = vld [vmem:[%s1679] sm:$0xf]
      %v1682 = vsel %vm322, %v1649, 0
      %v1685 = vsel %vm322, %v1650, 0
      %v1688 = vsel %vm322, %v1651, 0
      %v1691 = vsel %vm322, %v1652, 0
      %v1694 = vsel %vm322, %v1653, 0
      %v1697 = vsel %vm322, %v1654, 0
      %v1700 = vsel %vm322, %v1655, 0
      %v1703 = vsel %vm322, %v1656, 0
      %v1706 = vsel %vm322, %v1657, 0
      %v1709 = vsel %vm322, %v1658, 0
      %v1712 = vsel %vm322, %v1659, 0
      %v1715 = vsel %vm322, %v1660, 0
      %v1718 = vsel %vm322, %v1661, 0
      %v1721 = vsel %vm322, %v1662, 0
      %v1724 = vsel %vm322, %v1663, 0
      %v1727 = vsel %vm322, %v1664, 0
      %v1730 = vsel %vm322, %v1665, 0
      %v1733 = vsel %vm322, %v1666, 0
      %v1736 = vsel %vm322, %v1667, 0
      %v1739 = vsel %vm322, %v1668, 0
      %v1742 = vsel %vm322, %v1669, 0
      %v1745 = vsel %vm322, %v1670, 0
      %v1748 = vsel %vm322, %v1671, 0
      %v1751 = vsel %vm322, %v1672, 0
      %v1754 = vsel %vm322, %v1673, 0
      %v1757 = vsel %vm322, %v1674, 0
      %v1760 = vsel %vm322, %v1675, 0
      %v1763 = vsel %vm322, %v1676, 0
      %v1766 = vsel %vm322, %v1677, 0
      %v1769 = vsel %vm322, %v1678, 0
      %v1772 = vsel %vm552, %v1680, 0
      %1774 = vmatpush.msra.mxu0 0.0
      %1775 = vmatpush.msra.mxu0 0.0
      %1776 = vmatpush.msra.mxu0 0.0
      %1777 = vmatpush.msra.mxu0 0.0
      %1778 = vmatpush.msra.mxu0 0.0
      %1779 = vmatpush.msra.mxu0 0.0
      %1780 = vmatpush.msra.mxu0 0.0
      %1781 = vmatpush.msra.mxu0 0.0
      %1782 = vmatpush.msra.mxu0 0.0
      %1783 = vmatpush.msra.mxu0 0.0
      %1784 = vmatpush.msra.mxu0 0.0
      %1785 = vmatpush.msra.mxu0 0.0
      %1786 = vmatpush.msra.mxu0 0.0
      %1787 = vmatpush.msra.mxu0 0.0
      %1788 = vmatpush.msra.mxu0 0.0
      %1789 = vmatpush.msra.mxu0 %v1772
      %1790 = vmatmul.f32.gmra.mxu0 %v1682
      %v1791 = vpop.f32.mrf.mxu0
      %v1792 = vadd.f32 0.0, %v1791
      %1793 = vmatmul.f32.gmra.mxu0 %v1685
      %v1794 = vpop.f32.mrf.mxu0
      %v1795 = vadd.f32 0.0, %v1794
      %1796 = vmatmul.f32.gmra.mxu0 %v1688
      %v1797 = vpop.f32.mrf.mxu0
      %v1798 = vadd.f32 0.0, %v1797
      %1799 = vmatmul.f32.gmra.mxu0 %v1691
      %v1800 = vpop.f32.mrf.mxu0
      %v1801 = vadd.f32 0.0, %v1800
      %1802 = vmatmul.f32.gmra.mxu0 %v1694
      %v1803 = vpop.f32.mrf.mxu0
      %v1804 = vadd.f32 0.0, %v1803
      %1805 = vmatmul.f32.gmra.mxu0 %v1697
      %v1806 = vpop.f32.mrf.mxu0
      %v1807 = vadd.f32 0.0, %v1806
      %1808 = vmatmul.f32.gmra.mxu0 %v1700
      %v1809 = vpop.f32.mrf.mxu0
      %v1810 = vadd.f32 0.0, %v1809
      %1811 = vmatmul.f32.gmra.mxu0 %v1703
      %v1812 = vpop.f32.mrf.mxu0
      %v1813 = vadd.f32 0.0, %v1812
      %1814 = vmatmul.f32.gmra.mxu0 %v1706
      %v1815 = vpop.f32.mrf.mxu0
      %v1816 = vadd.f32 0.0, %v1815
      %1817 = vmatmul.f32.gmra.mxu0 %v1709
      %v1818 = vpop.f32.mrf.mxu0
      %v1819 = vadd.f32 0.0, %v1818
      %1820 = vmatmul.f32.gmra.mxu0 %v1712
      %v1821 = vpop.f32.mrf.mxu0
      %v1822 = vadd.f32 0.0, %v1821
      %1823 = vmatmul.f32.gmra.mxu0 %v1715
      %v1824 = vpop.f32.mrf.mxu0
      %v1825 = vadd.f32 0.0, %v1824
      %1826 = vmatmul.f32.gmra.mxu0 %v1718
      %v1827 = vpop.f32.mrf.mxu0
      %v1828 = vadd.f32 0.0, %v1827
      %1829 = vmatmul.f32.gmra.mxu0 %v1721
      %v1830 = vpop.f32.mrf.mxu0
      %v1831 = vadd.f32 0.0, %v1830
      %1832 = vmatmul.f32.gmra.mxu0 %v1724
      %v1833 = vpop.f32.mrf.mxu0
      %v1834 = vadd.f32 0.0, %v1833
      %1835 = vmatmul.f32.gmra.mxu0 %v1727
      %v1836 = vpop.f32.mrf.mxu0
      %v1837 = vadd.f32 0.0, %v1836
      %1838 = vmatmul.f32.gmra.mxu0 %v1730
      %v1839 = vpop.f32.mrf.mxu0
      %v1840 = vadd.f32 0.0, %v1839
      %1841 = vmatmul.f32.gmra.mxu0 %v1733
      %v1842 = vpop.f32.mrf.mxu0
      %v1843 = vadd.f32 0.0, %v1842
      %1844 = vmatmul.f32.gmra.mxu0 %v1736
      %v1845 = vpop.f32.mrf.mxu0
      %v1846 = vadd.f32 0.0, %v1845
      %1847 = vmatmul.f32.gmra.mxu0 %v1739
      %v1848 = vpop.f32.mrf.mxu0
      %v1849 = vadd.f32 0.0, %v1848
      %1850 = vmatmul.f32.gmra.mxu0 %v1742
      %v1851 = vpop.f32.mrf.mxu0
      %v1852 = vadd.f32 0.0, %v1851
      %1853 = vmatmul.f32.gmra.mxu0 %v1745
      %v1854 = vpop.f32.mrf.mxu0
      %v1855 = vadd.f32 0.0, %v1854
      %1856 = vmatmul.f32.gmra.mxu0 %v1748
      %v1857 = vpop.f32.mrf.mxu0
      %v1858 = vadd.f32 0.0, %v1857
      %1859 = vmatmul.f32.gmra.mxu0 %v1751
      %v1860 = vpop.f32.mrf.mxu0
      %v1861 = vadd.f32 0.0, %v1860
      %1862 = vmatmul.f32.gmra.mxu0 %v1754
      %v1863 = vpop.f32.mrf.mxu0
      %v1864 = vadd.f32 0.0, %v1863
      %1865 = vmatmul.f32.gmra.mxu0 %v1757
      %v1866 = vpop.f32.mrf.mxu0
      %v1867 = vadd.f32 0.0, %v1866
      %1868 = vmatmul.f32.gmra.mxu0 %v1760
      %v1869 = vpop.f32.mrf.mxu0
      %v1870 = vadd.f32 0.0, %v1869
      %1871 = vmatmul.f32.gmra.mxu0 %v1763
      %v1872 = vpop.f32.mrf.mxu0
      %v1873 = vadd.f32 0.0, %v1872
      %1874 = vmatmul.f32.gmra.mxu0 %v1766
      %v1875 = vpop.f32.mrf.mxu0
      %v1876 = vadd.f32 0.0, %v1875
      %1877 = vmatmul.f32.gmra.mxu0 %v1769
      %v1878 = vpop.f32.mrf.mxu0
      %v1879 = vadd.f32 0.0, %v1878
      %1880 = vdwg.mxu0
      %v1881 = vadd.f32 %v1619, %v1792
      %v1882 = vadd.f32 %v1620, %v1795
      %v1883 = vadd.f32 %v1621, %v1798
      %v1884 = vadd.f32 %v1622, %v1801
      %v1885 = vadd.f32 %v1623, %v1804
      %v1886 = vadd.f32 %v1624, %v1807
      %v1887 = vadd.f32 %v1625, %v1810
      %v1888 = vadd.f32 %v1626, %v1813
      %v1889 = vadd.f32 %v1627, %v1816
      %v1890 = vadd.f32 %v1628, %v1819
      %v1891 = vadd.f32 %v1629, %v1822
      %v1892 = vadd.f32 %v1630, %v1825
      %v1893 = vadd.f32 %v1631, %v1828
      %v1894 = vadd.f32 %v1632, %v1831
      %v1895 = vadd.f32 %v1633, %v1834
      %v1896 = vadd.f32 %v1634, %v1837
      %v1897 = vadd.f32 %v1635, %v1840
      %v1898 = vadd.f32 %v1636, %v1843
      %v1899 = vadd.f32 %v1637, %v1846
      %v1900 = vadd.f32 %v1638, %v1849
      %v1901 = vadd.f32 %v1639, %v1852
      %v1902 = vadd.f32 %v1640, %v1855
      %v1903 = vadd.f32 %v1641, %v1858
      %v1904 = vadd.f32 %v1642, %v1861
      %v1905 = vadd.f32 %v1643, %v1864
      %v1906 = vadd.f32 %v1644, %v1867
      %v1907 = vadd.f32 %v1645, %v1870
      %v1908 = vadd.f32 %v1646, %v1873
      %v1909 = vadd.f32 %v1647, %v1876
      %v1910 = vadd.f32 %v1648, %v1879
      %v1911 = vld [vmem:[#allocation2 + $0x37] sm:$0xff]
      %v1912 = vld [vmem:[#allocation2 + $0x3f] sm:$0xff]
      %v1913 = vld [vmem:[#allocation2 + $0x47] sm:$0xff]
      %v1914 = vld [vmem:[#allocation2 + $0x4f] sm:$0xff]
      %v1915 = vld [vmem:[#allocation2 + $0x57] sm:$0xff]
      %v1916 = vld [vmem:[#allocation2 + $0x5f] sm:$0xff]
      %v1917 = vld [vmem:[#allocation2 + $0x67] sm:$0xff]
      %v1918 = vld [vmem:[#allocation2 + $0x6f] sm:$0xff]
      %v1919 = vld [vmem:[#allocation2 + $0x77] sm:$0xff]
      %v1920 = vld [vmem:[#allocation2 + $0x7f] sm:$0xff]
      %v1921 = vld [vmem:[#allocation2 + $0x87] sm:$0xff]
      %v1922 = vld [vmem:[#allocation2 + $0x8f] sm:$0xff]
      %v1923 = vld [vmem:[#allocation2 + $0x97] sm:$0xff]
      %v1924 = vld [vmem:[#allocation2 + $0x9f] sm:$0xff]
      %v1925 = vld [vmem:[#allocation2 + $0xa7] sm:$0xff]
      %v1926 = vld [vmem:[#allocation2 + $0xaf] sm:$0xff]
      %v1927 = vld [vmem:[#allocation2 + $0xb7] sm:$0xff]
      %v1928 = vld [vmem:[#allocation2 + $0xbf] sm:$0xff]
      %v1929 = vld [vmem:[#allocation2 + $0xc7] sm:$0xff]
      %v1930 = vld [vmem:[#allocation2 + $0xcf] sm:$0xff]
      %v1931 = vld [vmem:[#allocation2 + $0xd7] sm:$0xff]
      %v1932 = vld [vmem:[#allocation2 + $0xdf] sm:$0xff]
      %v1933 = vld [vmem:[#allocation2 + $0xe7] sm:$0xff]
      %v1934 = vld [vmem:[#allocation2 + $0xef] sm:$0xff]
      %v1935 = vld [vmem:[#allocation2 + $0xf7] sm:$0xff]
      %v1936 = vld [vmem:[#allocation2 + $0xff] sm:$0xff]
      %v1937 = vld [vmem:[#allocation2 + $0x107] sm:$0xff]
      %v1938 = vld [vmem:[#allocation2 + $0x10f] sm:$0xff]
      %v1939 = vld [vmem:[#allocation2 + $0x117] sm:$0xff]
      %v1940 = vld [vmem:[#allocation2 + $0x11f] sm:$0xff]
      %s1941 = scalar_lea.vmem %s2, 24
      %v1942 = vld [vmem:[%s1941] sm:$0xf]
      %v1944 = vsel %vm322, %v1911, 0
      %v1947 = vsel %vm322, %v1912, 0
      %v1950 = vsel %vm322, %v1913, 0
      %v1953 = vsel %vm322, %v1914, 0
      %v1956 = vsel %vm322, %v1915, 0
      %v1959 = vsel %vm322, %v1916, 0
      %v1962 = vsel %vm322, %v1917, 0
      %v1965 = vsel %vm322, %v1918, 0
      %v1968 = vsel %vm322, %v1919, 0
      %v1971 = vsel %vm322, %v1920, 0
      %v1974 = vsel %vm322, %v1921, 0
      %v1977 = vsel %vm322, %v1922, 0
      %v1980 = vsel %vm322, %v1923, 0
      %v1983 = vsel %vm322, %v1924, 0
      %v1986 = vsel %vm322, %v1925, 0
      %v1989 = vsel %vm322, %v1926, 0
      %v1992 = vsel %vm322, %v1927, 0
      %v1995 = vsel %vm322, %v1928, 0
      %v1998 = vsel %vm322, %v1929, 0
      %v2001 = vsel %vm322, %v1930, 0
      %v2004 = vsel %vm322, %v1931, 0
      %v2007 = vsel %vm322, %v1932, 0
      %v2010 = vsel %vm322, %v1933, 0
      %v2013 = vsel %vm322, %v1934, 0
      %v2016 = vsel %vm322, %v1935, 0
      %v2019 = vsel %vm322, %v1936, 0
      %v2022 = vsel %vm322, %v1937, 0
      %v2025 = vsel %vm322, %v1938, 0
      %v2028 = vsel %vm322, %v1939, 0
      %v2031 = vsel %vm322, %v1940, 0
      %v2034 = vsel %vm552, %v1942, 0
      %2036 = vmatpush.msra.mxu0 0.0
      %2037 = vmatpush.msra.mxu0 0.0
      %2038 = vmatpush.msra.mxu0 0.0
      %2039 = vmatpush.msra.mxu0 0.0
      %2040 = vmatpush.msra.mxu0 0.0
      %2041 = vmatpush.msra.mxu0 0.0
      %2042 = vmatpush.msra.mxu0 0.0
      %2043 = vmatpush.msra.mxu0 0.0
      %2044 = vmatpush.msra.mxu0 0.0
      %2045 = vmatpush.msra.mxu0 0.0
      %2046 = vmatpush.msra.mxu0 0.0
      %2047 = vmatpush.msra.mxu0 0.0
      %2048 = vmatpush.msra.mxu0 0.0
      %2049 = vmatpush.msra.mxu0 0.0
      %2050 = vmatpush.msra.mxu0 0.0
      %2051 = vmatpush.msra.mxu0 %v2034
      %2052 = vmatmul.f32.gmra.mxu0 %v1944
      %v2053 = vpop.f32.mrf.mxu0
      %v2054 = vadd.f32 0.0, %v2053
      %2055 = vmatmul.f32.gmra.mxu0 %v1947
      %v2056 = vpop.f32.mrf.mxu0
      %v2057 = vadd.f32 0.0, %v2056
      %2058 = vmatmul.f32.gmra.mxu0 %v1950
      %v2059 = vpop.f32.mrf.mxu0
      %v2060 = vadd.f32 0.0, %v2059
      %2061 = vmatmul.f32.gmra.mxu0 %v1953
      %v2062 = vpop.f32.mrf.mxu0
      %v2063 = vadd.f32 0.0, %v2062
      %2064 = vmatmul.f32.gmra.mxu0 %v1956
      %v2065 = vpop.f32.mrf.mxu0
      %v2066 = vadd.f32 0.0, %v2065
      %2067 = vmatmul.f32.gmra.mxu0 %v1959
      %v2068 = vpop.f32.mrf.mxu0
      %v2069 = vadd.f32 0.0, %v2068
      %2070 = vmatmul.f32.gmra.mxu0 %v1962
      %v2071 = vpop.f32.mrf.mxu0
      %v2072 = vadd.f32 0.0, %v2071
      %2073 = vmatmul.f32.gmra.mxu0 %v1965
      %v2074 = vpop.f32.mrf.mxu0
      %v2075 = vadd.f32 0.0, %v2074
      %2076 = vmatmul.f32.gmra.mxu0 %v1968
      %v2077 = vpop.f32.mrf.mxu0
      %v2078 = vadd.f32 0.0, %v2077
      %2079 = vmatmul.f32.gmra.mxu0 %v1971
      %v2080 = vpop.f32.mrf.mxu0
      %v2081 = vadd.f32 0.0, %v2080
      %2082 = vmatmul.f32.gmra.mxu0 %v1974
      %v2083 = vpop.f32.mrf.mxu0
      %v2084 = vadd.f32 0.0, %v2083
      %2085 = vmatmul.f32.gmra.mxu0 %v1977
      %v2086 = vpop.f32.mrf.mxu0
      %v2087 = vadd.f32 0.0, %v2086
      %2088 = vmatmul.f32.gmra.mxu0 %v1980
      %v2089 = vpop.f32.mrf.mxu0
      %v2090 = vadd.f32 0.0, %v2089
      %2091 = vmatmul.f32.gmra.mxu0 %v1983
      %v2092 = vpop.f32.mrf.mxu0
      %v2093 = vadd.f32 0.0, %v2092
      %2094 = vmatmul.f32.gmra.mxu0 %v1986
      %v2095 = vpop.f32.mrf.mxu0
      %v2096 = vadd.f32 0.0, %v2095
      %2097 = vmatmul.f32.gmra.mxu0 %v1989
      %v2098 = vpop.f32.mrf.mxu0
      %v2099 = vadd.f32 0.0, %v2098
      %2100 = vmatmul.f32.gmra.mxu0 %v1992
      %v2101 = vpop.f32.mrf.mxu0
      %v2102 = vadd.f32 0.0, %v2101
      %2103 = vmatmul.f32.gmra.mxu0 %v1995
      %v2104 = vpop.f32.mrf.mxu0
      %v2105 = vadd.f32 0.0, %v2104
      %2106 = vmatmul.f32.gmra.mxu0 %v1998
      %v2107 = vpop.f32.mrf.mxu0
      %v2108 = vadd.f32 0.0, %v2107
      %2109 = vmatmul.f32.gmra.mxu0 %v2001
      %v2110 = vpop.f32.mrf.mxu0
      %v2111 = vadd.f32 0.0, %v2110
      %2112 = vmatmul.f32.gmra.mxu0 %v2004
      %v2113 = vpop.f32.mrf.mxu0
      %v2114 = vadd.f32 0.0, %v2113
      %2115 = vmatmul.f32.gmra.mxu0 %v2007
      %v2116 = vpop.f32.mrf.mxu0
      %v2117 = vadd.f32 0.0, %v2116
      %2118 = vmatmul.f32.gmra.mxu0 %v2010
      %v2119 = vpop.f32.mrf.mxu0
      %v2120 = vadd.f32 0.0, %v2119
      %2121 = vmatmul.f32.gmra.mxu0 %v2013
      %v2122 = vpop.f32.mrf.mxu0
      %v2123 = vadd.f32 0.0, %v2122
      %2124 = vmatmul.f32.gmra.mxu0 %v2016
      %v2125 = vpop.f32.mrf.mxu0
      %v2126 = vadd.f32 0.0, %v2125
      %2127 = vmatmul.f32.gmra.mxu0 %v2019
      %v2128 = vpop.f32.mrf.mxu0
      %v2129 = vadd.f32 0.0, %v2128
      %2130 = vmatmul.f32.gmra.mxu0 %v2022
      %v2131 = vpop.f32.mrf.mxu0
      %v2132 = vadd.f32 0.0, %v2131
      %2133 = vmatmul.f32.gmra.mxu0 %v2025
      %v2134 = vpop.f32.mrf.mxu0
      %v2135 = vadd.f32 0.0, %v2134
      %2136 = vmatmul.f32.gmra.mxu0 %v2028
      %v2137 = vpop.f32.mrf.mxu0
      %v2138 = vadd.f32 0.0, %v2137
      %2139 = vmatmul.f32.gmra.mxu0 %v2031
      %v2140 = vpop.f32.mrf.mxu0
      %v2141 = vadd.f32 0.0, %v2140
      %2142 = vdwg.mxu0
      %v2143 = vadd.f32 %v1881, %v2054
      %v2144 = vadd.f32 %v1882, %v2057
      %v2145 = vadd.f32 %v1883, %v2060
      %v2146 = vadd.f32 %v1884, %v2063
      %v2147 = vadd.f32 %v1885, %v2066
      %v2148 = vadd.f32 %v1886, %v2069
      %v2149 = vadd.f32 %v1887, %v2072
      %v2150 = vadd.f32 %v1888, %v2075
      %v2151 = vadd.f32 %v1889, %v2078
      %v2152 = vadd.f32 %v1890, %v2081
      %v2153 = vadd.f32 %v1891, %v2084
      %v2154 = vadd.f32 %v1892, %v2087
      %v2155 = vadd.f32 %v1893, %v2090
      %v2156 = vadd.f32 %v1894, %v2093
      %v2157 = vadd.f32 %v1895, %v2096
      %v2158 = vadd.f32 %v1896, %v2099
      %v2159 = vadd.f32 %v1897, %v2102
      %v2160 = vadd.f32 %v1898, %v2105
      %v2161 = vadd.f32 %v1899, %v2108
      %v2162 = vadd.f32 %v1900, %v2111
      %v2163 = vadd.f32 %v1901, %v2114
      %v2164 = vadd.f32 %v1902, %v2117
      %v2165 = vadd.f32 %v1903, %v2120
      %v2166 = vadd.f32 %v1904, %v2123
      %v2167 = vadd.f32 %v1905, %v2126
      %v2168 = vadd.f32 %v1906, %v2129
      %v2169 = vadd.f32 %v1907, %v2132
      %v2170 = vadd.f32 %v1908, %v2135
      %v2171 = vadd.f32 %v1909, %v2138
      %v2172 = vadd.f32 %v1910, %v2141
      %v2173 = vld [vmem:[#allocation2 + $0x38] sm:$0xff]
      %v2174 = vld [vmem:[#allocation2 + $0x40] sm:$0xff]
      %v2175 = vld [vmem:[#allocation2 + $0x48] sm:$0xff]
      %v2176 = vld [vmem:[#allocation2 + $0x50] sm:$0xff]
      %v2177 = vld [vmem:[#allocation2 + $0x58] sm:$0xff]
      %v2178 = vld [vmem:[#allocation2 + $0x60] sm:$0xff]
      %v2179 = vld [vmem:[#allocation2 + $0x68] sm:$0xff]
      %v2180 = vld [vmem:[#allocation2 + $0x70] sm:$0xff]
      %v2181 = vld [vmem:[#allocation2 + $0x78] sm:$0xff]
      %v2182 = vld [vmem:[#allocation2 + $0x80] sm:$0xff]
      %v2183 = vld [vmem:[#allocation2 + $0x88] sm:$0xff]
      %v2184 = vld [vmem:[#allocation2 + $0x90] sm:$0xff]
      %v2185 = vld [vmem:[#allocation2 + $0x98] sm:$0xff]
      %v2186 = vld [vmem:[#allocation2 + $0xa0] sm:$0xff]
      %v2187 = vld [vmem:[#allocation2 + $0xa8] sm:$0xff]
      %v2188 = vld [vmem:[#allocation2 + $0xb0] sm:$0xff]
      %v2189 = vld [vmem:[#allocation2 + $0xb8] sm:$0xff]
      %v2190 = vld [vmem:[#allocation2 + $0xc0] sm:$0xff]
      %v2191 = vld [vmem:[#allocation2 + $0xc8] sm:$0xff]
      %v2192 = vld [vmem:[#allocation2 + $0xd0] sm:$0xff]
      %v2193 = vld [vmem:[#allocation2 + $0xd8] sm:$0xff]
      %v2194 = vld [vmem:[#allocation2 + $0xe0] sm:$0xff]
      %v2195 = vld [vmem:[#allocation2 + $0xe8] sm:$0xff]
      %v2196 = vld [vmem:[#allocation2 + $0xf0] sm:$0xff]
      %v2197 = vld [vmem:[#allocation2 + $0xf8] sm:$0xff]
      %v2198 = vld [vmem:[#allocation2 + $0x100] sm:$0xff]
      %v2199 = vld [vmem:[#allocation2 + $0x108] sm:$0xff]
      %v2200 = vld [vmem:[#allocation2 + $0x110] sm:$0xff]
      %v2201 = vld [vmem:[#allocation2 + $0x118] sm:$0xff]
      %v2202 = vld [vmem:[#allocation2 + $0x120] sm:$0xff]
      %s2203 = scalar_lea.vmem %s2, 28
      %v2204 = vld [vmem:[%s2203] sm:$0xf]
      %v2206 = vsel %vm322, %v2173, 0
      %v2209 = vsel %vm322, %v2174, 0
      %v2212 = vsel %vm322, %v2175, 0
      %v2215 = vsel %vm322, %v2176, 0
      %v2218 = vsel %vm322, %v2177, 0
      %v2221 = vsel %vm322, %v2178, 0
      %v2224 = vsel %vm322, %v2179, 0
      %v2227 = vsel %vm322, %v2180, 0
      %v2230 = vsel %vm322, %v2181, 0
      %v2233 = vsel %vm322, %v2182, 0
      %v2236 = vsel %vm322, %v2183, 0
      %v2239 = vsel %vm322, %v2184, 0
      %v2242 = vsel %vm322, %v2185, 0
      %v2245 = vsel %vm322, %v2186, 0
      %v2248 = vsel %vm322, %v2187, 0
      %v2251 = vsel %vm322, %v2188, 0
      %v2254 = vsel %vm322, %v2189, 0
      %v2257 = vsel %vm322, %v2190, 0
      %v2260 = vsel %vm322, %v2191, 0
      %v2263 = vsel %vm322, %v2192, 0
      %v2266 = vsel %vm322, %v2193, 0
      %v2269 = vsel %vm322, %v2194, 0
      %v2272 = vsel %vm322, %v2195, 0
      %v2275 = vsel %vm322, %v2196, 0
      %v2278 = vsel %vm322, %v2197, 0
      %v2281 = vsel %vm322, %v2198, 0
      %v2284 = vsel %vm322, %v2199, 0
      %v2287 = vsel %vm322, %v2200, 0
      %v2290 = vsel %vm322, %v2201, 0
      %v2293 = vsel %vm322, %v2202, 0
      %v2296 = vsel %vm552, %v2204, 0
      %2298 = vmatpush.msra.mxu0 0.0
      %2299 = vmatpush.msra.mxu0 0.0
      %2300 = vmatpush.msra.mxu0 0.0
      %2301 = vmatpush.msra.mxu0 0.0
      %2302 = vmatpush.msra.mxu0 0.0
      %2303 = vmatpush.msra.mxu0 0.0
      %2304 = vmatpush.msra.mxu0 0.0
      %2305 = vmatpush.msra.mxu0 0.0
      %2306 = vmatpush.msra.mxu0 0.0
      %2307 = vmatpush.msra.mxu0 0.0
      %2308 = vmatpush.msra.mxu0 0.0
      %2309 = vmatpush.msra.mxu0 0.0
      %2310 = vmatpush.msra.mxu0 0.0
      %2311 = vmatpush.msra.mxu0 0.0
      %2312 = vmatpush.msra.mxu0 0.0
      %2313 = vmatpush.msra.mxu0 %v2296
      %2314 = vmatmul.f32.gmra.mxu0 %v2206
      %v2315 = vpop.f32.mrf.mxu0
      %v2316 = vadd.f32 0.0, %v2315
      %2317 = vmatmul.f32.gmra.mxu0 %v2209
      %v2318 = vpop.f32.mrf.mxu0
      %v2319 = vadd.f32 0.0, %v2318
      %2320 = vmatmul.f32.gmra.mxu0 %v2212
      %v2321 = vpop.f32.mrf.mxu0
      %v2322 = vadd.f32 0.0, %v2321
      %2323 = vmatmul.f32.gmra.mxu0 %v2215
      %v2324 = vpop.f32.mrf.mxu0
      %v2325 = vadd.f32 0.0, %v2324
      %2326 = vmatmul.f32.gmra.mxu0 %v2218
      %v2327 = vpop.f32.mrf.mxu0
      %v2328 = vadd.f32 0.0, %v2327
      %2329 = vmatmul.f32.gmra.mxu0 %v2221
      %v2330 = vpop.f32.mrf.mxu0
      %v2331 = vadd.f32 0.0, %v2330
      %2332 = vmatmul.f32.gmra.mxu0 %v2224
      %v2333 = vpop.f32.mrf.mxu0
      %v2334 = vadd.f32 0.0, %v2333
      %2335 = vmatmul.f32.gmra.mxu0 %v2227
      %v2336 = vpop.f32.mrf.mxu0
      %v2337 = vadd.f32 0.0, %v2336
      %2338 = vmatmul.f32.gmra.mxu0 %v2230
      %v2339 = vpop.f32.mrf.mxu0
      %v2340 = vadd.f32 0.0, %v2339
      %2341 = vmatmul.f32.gmra.mxu0 %v2233
      %v2342 = vpop.f32.mrf.mxu0
      %v2343 = vadd.f32 0.0, %v2342
      %2344 = vmatmul.f32.gmra.mxu0 %v2236
      %v2345 = vpop.f32.mrf.mxu0
      %v2346 = vadd.f32 0.0, %v2345
      %2347 = vmatmul.f32.gmra.mxu0 %v2239
      %v2348 = vpop.f32.mrf.mxu0
      %v2349 = vadd.f32 0.0, %v2348
      %2350 = vmatmul.f32.gmra.mxu0 %v2242
      %v2351 = vpop.f32.mrf.mxu0
      %v2352 = vadd.f32 0.0, %v2351
      %2353 = vmatmul.f32.gmra.mxu0 %v2245
      %v2354 = vpop.f32.mrf.mxu0
      %v2355 = vadd.f32 0.0, %v2354
      %2356 = vmatmul.f32.gmra.mxu0 %v2248
      %v2357 = vpop.f32.mrf.mxu0
      %v2358 = vadd.f32 0.0, %v2357
      %2359 = vmatmul.f32.gmra.mxu0 %v2251
      %v2360 = vpop.f32.mrf.mxu0
      %v2361 = vadd.f32 0.0, %v2360
      %2362 = vmatmul.f32.gmra.mxu0 %v2254
      %v2363 = vpop.f32.mrf.mxu0
      %v2364 = vadd.f32 0.0, %v2363
      %2365 = vmatmul.f32.gmra.mxu0 %v2257
      %v2366 = vpop.f32.mrf.mxu0
      %v2367 = vadd.f32 0.0, %v2366
      %2368 = vmatmul.f32.gmra.mxu0 %v2260
      %v2369 = vpop.f32.mrf.mxu0
      %v2370 = vadd.f32 0.0, %v2369
      %2371 = vmatmul.f32.gmra.mxu0 %v2263
      %v2372 = vpop.f32.mrf.mxu0
      %v2373 = vadd.f32 0.0, %v2372
      %2374 = vmatmul.f32.gmra.mxu0 %v2266
      %v2375 = vpop.f32.mrf.mxu0
      %v2376 = vadd.f32 0.0, %v2375
      %2377 = vmatmul.f32.gmra.mxu0 %v2269
      %v2378 = vpop.f32.mrf.mxu0
      %v2379 = vadd.f32 0.0, %v2378
      %2380 = vmatmul.f32.gmra.mxu0 %v2272
      %v2381 = vpop.f32.mrf.mxu0
      %v2382 = vadd.f32 0.0, %v2381
      %2383 = vmatmul.f32.gmra.mxu0 %v2275
      %v2384 = vpop.f32.mrf.mxu0
      %v2385 = vadd.f32 0.0, %v2384
      %2386 = vmatmul.f32.gmra.mxu0 %v2278
      %v2387 = vpop.f32.mrf.mxu0
      %v2388 = vadd.f32 0.0, %v2387
      %2389 = vmatmul.f32.gmra.mxu0 %v2281
      %v2390 = vpop.f32.mrf.mxu0
      %v2391 = vadd.f32 0.0, %v2390
      %2392 = vmatmul.f32.gmra.mxu0 %v2284
      %v2393 = vpop.f32.mrf.mxu0
      %v2394 = vadd.f32 0.0, %v2393
      %2395 = vmatmul.f32.gmra.mxu0 %v2287
      %v2396 = vpop.f32.mrf.mxu0
      %v2397 = vadd.f32 0.0, %v2396
      %2398 = vmatmul.f32.gmra.mxu0 %v2290
      %v2399 = vpop.f32.mrf.mxu0
      %v2400 = vadd.f32 0.0, %v2399
      %2401 = vmatmul.f32.gmra.mxu0 %v2293
      %v2402 = vpop.f32.mrf.mxu0
      %v2403 = vadd.f32 0.0, %v2402
      %2404 = vdwg.mxu0
      %v2405 = vadd.f32 %v2143, %v2316
      %v2406 = vadd.f32 %v2144, %v2319
      %v2407 = vadd.f32 %v2145, %v2322
      %v2408 = vadd.f32 %v2146, %v2325
      %v2409 = vadd.f32 %v2147, %v2328
      %v2410 = vadd.f32 %v2148, %v2331
      %v2411 = vadd.f32 %v2149, %v2334
      %v2412 = vadd.f32 %v2150, %v2337
      %v2413 = vadd.f32 %v2151, %v2340
      %v2414 = vadd.f32 %v2152, %v2343
      %v2415 = vadd.f32 %v2153, %v2346
      %v2416 = vadd.f32 %v2154, %v2349
      %v2417 = vadd.f32 %v2155, %v2352
      %v2418 = vadd.f32 %v2156, %v2355
      %v2419 = vadd.f32 %v2157, %v2358
      %v2420 = vadd.f32 %v2158, %v2361
      %v2421 = vadd.f32 %v2159, %v2364
      %v2422 = vadd.f32 %v2160, %v2367
      %v2423 = vadd.f32 %v2161, %v2370
      %v2424 = vadd.f32 %v2162, %v2373
      %v2425 = vadd.f32 %v2163, %v2376
      %v2426 = vadd.f32 %v2164, %v2379
      %v2427 = vadd.f32 %v2165, %v2382
      %v2428 = vadd.f32 %v2166, %v2385
      %v2429 = vadd.f32 %v2167, %v2388
      %v2430 = vadd.f32 %v2168, %v2391
      %v2431 = vadd.f32 %v2169, %v2394
      %v2432 = vadd.f32 %v2170, %v2397
      %v2433 = vadd.f32 %v2171, %v2400
      %v2434 = vadd.f32 %v2172, %v2403
      %v2435 = vld [vmem:[#allocation2 + $0x39] sm:$0xff]
      %v2436 = vld [vmem:[#allocation2 + $0x41] sm:$0xff]
      %v2437 = vld [vmem:[#allocation2 + $0x49] sm:$0xff]
      %v2438 = vld [vmem:[#allocation2 + $0x51] sm:$0xff]
      %v2439 = vld [vmem:[#allocation2 + $0x59] sm:$0xff]
      %v2440 = vld [vmem:[#allocation2 + $0x61] sm:$0xff]
      %v2441 = vld [vmem:[#allocation2 + $0x69] sm:$0xff]
      %v2442 = vld [vmem:[#allocation2 + $0x71] sm:$0xff]
      %v2443 = vld [vmem:[#allocation2 + $0x79] sm:$0xff]
      %v2444 = vld [vmem:[#allocation2 + $0x81] sm:$0xff]
      %v2445 = vld [vmem:[#allocation2 + $0x89] sm:$0xff]
      %v2446 = vld [vmem:[#allocation2 + $0x91] sm:$0xff]
      %v2447 = vld [vmem:[#allocation2 + $0x99] sm:$0xff]
      %v2448 = vld [vmem:[#allocation2 + $0xa1] sm:$0xff]
      %v2449 = vld [vmem:[#allocation2 + $0xa9] sm:$0xff]
      %v2450 = vld [vmem:[#allocation2 + $0xb1] sm:$0xff]
      %v2451 = vld [vmem:[#allocation2 + $0xb9] sm:$0xff]
      %v2452 = vld [vmem:[#allocation2 + $0xc1] sm:$0xff]
      %v2453 = vld [vmem:[#allocation2 + $0xc9] sm:$0xff]
      %v2454 = vld [vmem:[#allocation2 + $0xd1] sm:$0xff]
      %v2455 = vld [vmem:[#allocation2 + $0xd9] sm:$0xff]
      %v2456 = vld [vmem:[#allocation2 + $0xe1] sm:$0xff]
      %v2457 = vld [vmem:[#allocation2 + $0xe9] sm:$0xff]
      %v2458 = vld [vmem:[#allocation2 + $0xf1] sm:$0xff]
      %v2459 = vld [vmem:[#allocation2 + $0xf9] sm:$0xff]
      %v2460 = vld [vmem:[#allocation2 + $0x101] sm:$0xff]
      %v2461 = vld [vmem:[#allocation2 + $0x109] sm:$0xff]
      %v2462 = vld [vmem:[#allocation2 + $0x111] sm:$0xff]
      %v2463 = vld [vmem:[#allocation2 + $0x119] sm:$0xff]
      %v2464 = vld [vmem:[#allocation2 + $0x121] sm:$0xff]
      %s2465 = scalar_lea.vmem %s2, 32
      %v2466 = vld [vmem:[%s2465] sm:$0xf]
      %v2468 = vsel %vm322, %v2435, 0
      %v2471 = vsel %vm322, %v2436, 0
      %v2474 = vsel %vm322, %v2437, 0
      %v2477 = vsel %vm322, %v2438, 0
      %v2480 = vsel %vm322, %v2439, 0
      %v2483 = vsel %vm322, %v2440, 0
      %v2486 = vsel %vm322, %v2441, 0
      %v2489 = vsel %vm322, %v2442, 0
      %v2492 = vsel %vm322, %v2443, 0
      %v2495 = vsel %vm322, %v2444, 0
      %v2498 = vsel %vm322, %v2445, 0
      %v2501 = vsel %vm322, %v2446, 0
      %v2504 = vsel %vm322, %v2447, 0
      %v2507 = vsel %vm322, %v2448, 0
      %v2510 = vsel %vm322, %v2449, 0
      %v2513 = vsel %vm322, %v2450, 0
      %v2516 = vsel %vm322, %v2451, 0
      %v2519 = vsel %vm322, %v2452, 0
      %v2522 = vsel %vm322, %v2453, 0
      %v2525 = vsel %vm322, %v2454, 0
      %v2528 = vsel %vm322, %v2455, 0
      %v2531 = vsel %vm322, %v2456, 0
      %v2534 = vsel %vm322, %v2457, 0
      %v2537 = vsel %vm322, %v2458, 0
      %v2540 = vsel %vm322, %v2459, 0
      %v2543 = vsel %vm322, %v2460, 0
      %v2546 = vsel %vm322, %v2461, 0
      %v2549 = vsel %vm322, %v2462, 0
      %v2552 = vsel %vm322, %v2463, 0
      %v2555 = vsel %vm322, %v2464, 0
      %v2558 = vsel %vm552, %v2466, 0
      %2560 = vmatpush.msra.mxu0 0.0
      %2561 = vmatpush.msra.mxu0 0.0
      %2562 = vmatpush.msra.mxu0 0.0
      %2563 = vmatpush.msra.mxu0 0.0
      %2564 = vmatpush.msra.mxu0 0.0
      %2565 = vmatpush.msra.mxu0 0.0
      %2566 = vmatpush.msra.mxu0 0.0
      %2567 = vmatpush.msra.mxu0 0.0
      %2568 = vmatpush.msra.mxu0 0.0
      %2569 = vmatpush.msra.mxu0 0.0
      %2570 = vmatpush.msra.mxu0 0.0
      %2571 = vmatpush.msra.mxu0 0.0
      %2572 = vmatpush.msra.mxu0 0.0
      %2573 = vmatpush.msra.mxu0 0.0
      %2574 = vmatpush.msra.mxu0 0.0
      %2575 = vmatpush.msra.mxu0 %v2558
      %2576 = vmatmul.f32.gmra.mxu0 %v2468
      %v2577 = vpop.f32.mrf.mxu0
      %v2578 = vadd.f32 0.0, %v2577
      %2579 = vmatmul.f32.gmra.mxu0 %v2471
      %v2580 = vpop.f32.mrf.mxu0
      %v2581 = vadd.f32 0.0, %v2580
      %2582 = vmatmul.f32.gmra.mxu0 %v2474
      %v2583 = vpop.f32.mrf.mxu0
      %v2584 = vadd.f32 0.0, %v2583
      %2585 = vmatmul.f32.gmra.mxu0 %v2477
      %v2586 = vpop.f32.mrf.mxu0
      %v2587 = vadd.f32 0.0, %v2586
      %2588 = vmatmul.f32.gmra.mxu0 %v2480
      %v2589 = vpop.f32.mrf.mxu0
      %v2590 = vadd.f32 0.0, %v2589
      %2591 = vmatmul.f32.gmra.mxu0 %v2483
      %v2592 = vpop.f32.mrf.mxu0
      %v2593 = vadd.f32 0.0, %v2592
      %2594 = vmatmul.f32.gmra.mxu0 %v2486
      %v2595 = vpop.f32.mrf.mxu0
      %v2596 = vadd.f32 0.0, %v2595
      %2597 = vmatmul.f32.gmra.mxu0 %v2489
      %v2598 = vpop.f32.mrf.mxu0
      %v2599 = vadd.f32 0.0, %v2598
      %2600 = vmatmul.f32.gmra.mxu0 %v2492
      %v2601 = vpop.f32.mrf.mxu0
      %v2602 = vadd.f32 0.0, %v2601
      %2603 = vmatmul.f32.gmra.mxu0 %v2495
      %v2604 = vpop.f32.mrf.mxu0
      %v2605 = vadd.f32 0.0, %v2604
      %2606 = vmatmul.f32.gmra.mxu0 %v2498
      %v2607 = vpop.f32.mrf.mxu0
      %v2608 = vadd.f32 0.0, %v2607
      %2609 = vmatmul.f32.gmra.mxu0 %v2501
      %v2610 = vpop.f32.mrf.mxu0
      %v2611 = vadd.f32 0.0, %v2610
      %2612 = vmatmul.f32.gmra.mxu0 %v2504
      %v2613 = vpop.f32.mrf.mxu0
      %v2614 = vadd.f32 0.0, %v2613
      %2615 = vmatmul.f32.gmra.mxu0 %v2507
      %v2616 = vpop.f32.mrf.mxu0
      %v2617 = vadd.f32 0.0, %v2616
      %2618 = vmatmul.f32.gmra.mxu0 %v2510
      %v2619 = vpop.f32.mrf.mxu0
      %v2620 = vadd.f32 0.0, %v2619
      %2621 = vmatmul.f32.gmra.mxu0 %v2513
      %v2622 = vpop.f32.mrf.mxu0
      %v2623 = vadd.f32 0.0, %v2622
      %2624 = vmatmul.f32.gmra.mxu0 %v2516
      %v2625 = vpop.f32.mrf.mxu0
      %v2626 = vadd.f32 0.0, %v2625
      %2627 = vmatmul.f32.gmra.mxu0 %v2519
      %v2628 = vpop.f32.mrf.mxu0
      %v2629 = vadd.f32 0.0, %v2628
      %2630 = vmatmul.f32.gmra.mxu0 %v2522
      %v2631 = vpop.f32.mrf.mxu0
      %v2632 = vadd.f32 0.0, %v2631
      %2633 = vmatmul.f32.gmra.mxu0 %v2525
      %v2634 = vpop.f32.mrf.mxu0
      %v2635 = vadd.f32 0.0, %v2634
      %2636 = vmatmul.f32.gmra.mxu0 %v2528
      %v2637 = vpop.f32.mrf.mxu0
      %v2638 = vadd.f32 0.0, %v2637
      %2639 = vmatmul.f32.gmra.mxu0 %v2531
      %v2640 = vpop.f32.mrf.mxu0
      %v2641 = vadd.f32 0.0, %v2640
      %2642 = vmatmul.f32.gmra.mxu0 %v2534
      %v2643 = vpop.f32.mrf.mxu0
      %v2644 = vadd.f32 0.0, %v2643
      %2645 = vmatmul.f32.gmra.mxu0 %v2537
      %v2646 = vpop.f32.mrf.mxu0
      %v2647 = vadd.f32 0.0, %v2646
      %2648 = vmatmul.f32.gmra.mxu0 %v2540
      %v2649 = vpop.f32.mrf.mxu0
      %v2650 = vadd.f32 0.0, %v2649
      %2651 = vmatmul.f32.gmra.mxu0 %v2543
      %v2652 = vpop.f32.mrf.mxu0
      %v2653 = vadd.f32 0.0, %v2652
      %2654 = vmatmul.f32.gmra.mxu0 %v2546
      %v2655 = vpop.f32.mrf.mxu0
      %v2656 = vadd.f32 0.0, %v2655
      %2657 = vmatmul.f32.gmra.mxu0 %v2549
      %v2658 = vpop.f32.mrf.mxu0
      %v2659 = vadd.f32 0.0, %v2658
      %2660 = vmatmul.f32.gmra.mxu0 %v2552
      %v2661 = vpop.f32.mrf.mxu0
      %v2662 = vadd.f32 0.0, %v2661
      %2663 = vmatmul.f32.gmra.mxu0 %v2555
      %v2664 = vpop.f32.mrf.mxu0
      %v2665 = vadd.f32 0.0, %v2664
      %2666 = vdwg.mxu0
      %v2667 = vadd.f32 %v2405, %v2578
      %v2668 = vadd.f32 %v2406, %v2581
      %v2669 = vadd.f32 %v2407, %v2584
      %v2670 = vadd.f32 %v2408, %v2587
      %v2671 = vadd.f32 %v2409, %v2590
      %v2672 = vadd.f32 %v2410, %v2593
      %v2673 = vadd.f32 %v2411, %v2596
      %v2674 = vadd.f32 %v2412, %v2599
      %v2675 = vadd.f32 %v2413, %v2602
      %v2676 = vadd.f32 %v2414, %v2605
      %v2677 = vadd.f32 %v2415, %v2608
      %v2678 = vadd.f32 %v2416, %v2611
      %v2679 = vadd.f32 %v2417, %v2614
      %v2680 = vadd.f32 %v2418, %v2617
      %v2681 = vadd.f32 %v2419, %v2620
      %v2682 = vadd.f32 %v2420, %v2623
      %v2683 = vadd.f32 %v2421, %v2626
      %v2684 = vadd.f32 %v2422, %v2629
      %v2685 = vadd.f32 %v2423, %v2632
      %v2686 = vadd.f32 %v2424, %v2635
      %v2687 = vadd.f32 %v2425, %v2638
      %v2688 = vadd.f32 %v2426, %v2641
      %v2689 = vadd.f32 %v2427, %v2644
      %v2690 = vadd.f32 %v2428, %v2647
      %v2691 = vadd.f32 %v2429, %v2650
      %v2692 = vadd.f32 %v2430, %v2653
      %v2693 = vadd.f32 %v2431, %v2656
      %v2694 = vadd.f32 %v2432, %v2659
      %v2695 = vadd.f32 %v2433, %v2662
      %v2696 = vadd.f32 %v2434, %v2665
      %v2697 = vperm.slane %v396, 0
      %v2698 = vadd.f32 %v2667, %v2697
      %v2699 = vadd.f32 %v2668, %v2697
      %v2700 = vadd.f32 %v2669, %v2697
      %v2701 = vadd.f32 %v2670, %v2697
      %v2702 = vadd.f32 %v2671, %v2697
      %v2703 = vadd.f32 %v2672, %v2697
      %v2704 = vadd.f32 %v2673, %v2697
      %v2705 = vadd.f32 %v2674, %v2697
      %v2706 = vadd.f32 %v2675, %v2697
      %v2707 = vadd.f32 %v2676, %v2697
      %v2708 = vadd.f32 %v2677, %v2697
      %v2709 = vadd.f32 %v2678, %v2697
      %v2710 = vadd.f32 %v2679, %v2697
      %v2711 = vadd.f32 %v2680, %v2697
      %v2712 = vadd.f32 %v2681, %v2697
      %v2713 = vadd.f32 %v2682, %v2697
      %v2714 = vadd.f32 %v2683, %v2697
      %v2715 = vadd.f32 %v2684, %v2697
      %v2716 = vadd.f32 %v2685, %v2697
      %v2717 = vadd.f32 %v2686, %v2697
      %v2718 = vadd.f32 %v2687, %v2697
      %v2719 = vadd.f32 %v2688, %v2697
      %v2720 = vadd.f32 %v2689, %v2697
      %v2721 = vadd.f32 %v2690, %v2697
      %v2722 = vadd.f32 %v2691, %v2697
      %v2723 = vadd.f32 %v2692, %v2697
      %v2724 = vadd.f32 %v2693, %v2697
      %v2725 = vadd.f32 %v2694, %v2697
      %v2726 = vadd.f32 %v2695, %v2697
      %v2727 = vadd.f32 %v2696, %v2697
      %v2728 = vmax.f32 %v2698, 0.0
      %v2729 = vmax.f32 %v2699, 0.0
      %v2730 = vmax.f32 %v2700, 0.0
      %v2731 = vmax.f32 %v2701, 0.0
      %v2732 = vmax.f32 %v2702, 0.0
      %v2733 = vmax.f32 %v2703, 0.0
      %v2734 = vmax.f32 %v2704, 0.0
      %v2735 = vmax.f32 %v2705, 0.0
      %v2736 = vmax.f32 %v2706, 0.0
      %v2737 = vmax.f32 %v2707, 0.0
      %v2738 = vmax.f32 %v2708, 0.0
      %v2739 = vmax.f32 %v2709, 0.0
      %v2740 = vmax.f32 %v2710, 0.0
      %v2741 = vmax.f32 %v2711, 0.0
      %v2742 = vmax.f32 %v2712, 0.0
      %v2743 = vmax.f32 %v2713, 0.0
      %v2744 = vmax.f32 %v2714, 0.0
      %v2745 = vmax.f32 %v2715, 0.0
      %v2746 = vmax.f32 %v2716, 0.0
      %v2747 = vmax.f32 %v2717, 0.0
      %v2748 = vmax.f32 %v2718, 0.0
      %v2749 = vmax.f32 %v2719, 0.0
      %v2750 = vmax.f32 %v2720, 0.0
      %v2751 = vmax.f32 %v2721, 0.0
      %v2752 = vmax.f32 %v2722, 0.0
      %v2753 = vmax.f32 %v2723, 0.0
      %v2754 = vmax.f32 %v2724, 0.0
      %v2755 = vmax.f32 %v2725, 0.0
      %v2756 = vmax.f32 %v2726, 0.0
      %v2757 = vmax.f32 %v2727, 0.0
      %v2758 = vlaneseq
      %v2759 = vshrl.u32 %v2758, 7
      %v2760 = vadd.s32 %v2759, 8
      %v2761 = vadd.s32 %v2759, 16
      %v2762 = vadd.s32 %v2759, 24
      %v2763 = vadd.s32 %v2759, 32
      %v2764 = vadd.s32 %v2759, 40
      %v2765 = vadd.s32 %v2759, 48
      %v2766 = vadd.s32 %v2759, 56
      %v2767 = vadd.s32 %v2759, 64
      %v2768 = vadd.s32 %v2759, 72
      %v2769 = vadd.s32 %v2759, 80
      %v2770 = vadd.s32 %v2759, 88
      %v2771 = vadd.s32 %v2759, 96
      %v2772 = vadd.s32 %v2759, 104
      %v2773 = vadd.s32 %v2759, 112
      %v2774 = vadd.s32 %v2759, 120
      %v2775 = vadd.s32 %v2759, 128
      %v2776 = vadd.s32 %v2759, 136
      %v2777 = vadd.s32 %v2759, 144
      %v2778 = vadd.s32 %v2759, 152
      %v2779 = vadd.s32 %v2759, 160
      %v2780 = vadd.s32 %v2759, 168
      %v2781 = vadd.s32 %v2759, 176
      %v2782 = vadd.s32 %v2759, 184
      %v2783 = vadd.s32 %v2759, 192
      %v2784 = vadd.s32 %v2759, 200
      %v2785 = vadd.s32 %v2759, 208
      %v2786 = vadd.s32 %v2759, 216
      %v2787 = vadd.s32 %v2759, 224
      %v2788 = vadd.s32 %v2759, 232
      %vm2789 = vcmp.lt.s32.totalorder %v2759, 0
      %v2790 = vsub.s32 0, %v2759
      %v2791 = vsel %vm2789, %v2790, %v2759
      %v2792 = vand.u32 %v2791, 65535
      %v2793 = vshrl.u32 %v2791, 16
      %v2795 = vmul.u32 %v2792, 43691
      %v2796 = vmul.u32 %v2792, 43690
      %v2797 = vmul.u32 %v2793, 43691
      %v2798 = vmul.u32 %v2793, 43690
      %v2799 = vshll.u32 %v2796, 16
      %v2800 = vshrl.u32 %v2796, 16
      %v2801 = vshll.u32 %v2797, 16
      %v2802 = vshrl.u32 %v2797, 16
      %vm2803 = vc.u32 %v2795, %v2799
      %v2804 = vsel %vm2803, 1, 0
      %v2805 = vadd.s32 %v2795, %v2799
      %v2806 = vadd.s32 %v2798, %v2804
      %vm2807 = vc.u32 %v2805, %v2801
      %v2808 = vsel %vm2807, 1, 0
      %v2809 = vadd.s32 %v2805, %v2801
      %v2810 = vadd.s32 %v2806, %v2808
      %v2811 = vadd.s32 %v2810, %v2800
      %v2812 = vadd.s32 %v2811, %v2802
      %v2813 = vshrl.u32 %v2812, 4
      %v2814 = vmul.u32 %v2813, 24
      %v2815 = vsub.s32 %v2791, %v2814
      %v2816 = vsub.s32 0, %v2815
      %v2817 = vsel %vm2789, %v2816, %v2815
      %vm2818 = vcmp.lt.s32.totalorder %v2760, 0
      %v2819 = vsub.s32 0, %v2760
      %v2820 = vsel %vm2818, %v2819, %v2760
      %v2821 = vand.u32 %v2820, 65535
      %v2822 = vshrl.u32 %v2820, 16
      %v2824 = vmul.u32 %v2821, 43691
      %v2825 = vmul.u32 %v2821, 43690
      %v2826 = vmul.u32 %v2822, 43691
      %v2827 = vmul.u32 %v2822, 43690
      %v2828 = vshll.u32 %v2825, 16
      %v2829 = vshrl.u32 %v2825, 16
      %v2830 = vshll.u32 %v2826, 16
      %v2831 = vshrl.u32 %v2826, 16
      %vm2832 = vc.u32 %v2824, %v2828
      %v2833 = vsel %vm2832, 1, 0
      %v2834 = vadd.s32 %v2824, %v2828
      %v2835 = vadd.s32 %v2827, %v2833
      %vm2836 = vc.u32 %v2834, %v2830
      %v2837 = vsel %vm2836, 1, 0
      %v2838 = vadd.s32 %v2834, %v2830
      %v2839 = vadd.s32 %v2835, %v2837
      %v2840 = vadd.s32 %v2839, %v2829
      %v2841 = vadd.s32 %v2840, %v2831
      %v2842 = vshrl.u32 %v2841, 4
      %v2843 = vmul.u32 %v2842, 24
      %v2844 = vsub.s32 %v2820, %v2843
      %v2845 = vsub.s32 0, %v2844
      %v2846 = vsel %vm2818, %v2845, %v2844
      %vm2847 = vcmp.lt.s32.totalorder %v2761, 0
      %v2848 = vsub.s32 0, %v2761
      %v2849 = vsel %vm2847, %v2848, %v2761
      %v2850 = vand.u32 %v2849, 65535
      %v2851 = vshrl.u32 %v2849, 16
      %v2853 = vmul.u32 %v2850, 43691
      %v2854 = vmul.u32 %v2850, 43690
      %v2855 = vmul.u32 %v2851, 43691
      %v2856 = vmul.u32 %v2851, 43690
      %v2857 = vshll.u32 %v2854, 16
      %v2858 = vshrl.u32 %v2854, 16
      %v2859 = vshll.u32 %v2855, 16
      %v2860 = vshrl.u32 %v2855, 16
      %vm2861 = vc.u32 %v2853, %v2857
      %v2862 = vsel %vm2861, 1, 0
      %v2863 = vadd.s32 %v2853, %v2857
      %v2864 = vadd.s32 %v2856, %v2862
      %vm2865 = vc.u32 %v2863, %v2859
      %v2866 = vsel %vm2865, 1, 0
      %v2867 = vadd.s32 %v2863, %v2859
      %v2868 = vadd.s32 %v2864, %v2866
      %v2869 = vadd.s32 %v2868, %v2858
      %v2870 = vadd.s32 %v2869, %v2860
      %v2871 = vshrl.u32 %v2870, 4
      %v2872 = vmul.u32 %v2871, 24
      %v2873 = vsub.s32 %v2849, %v2872
      %v2874 = vsub.s32 0, %v2873
      %v2875 = vsel %vm2847, %v2874, %v2873
      %vm2876 = vcmp.lt.s32.totalorder %v2762, 0
      %v2877 = vsub.s32 0, %v2762
      %v2878 = vsel %vm2876, %v2877, %v2762
      %v2879 = vand.u32 %v2878, 65535
      %v2880 = vshrl.u32 %v2878, 16
      %v2882 = vmul.u32 %v2879, 43691
      %v2883 = vmul.u32 %v2879, 43690
      %v2884 = vmul.u32 %v2880, 43691
      %v2885 = vmul.u32 %v2880, 43690
      %v2886 = vshll.u32 %v2883, 16
      %v2887 = vshrl.u32 %v2883, 16
      %v2888 = vshll.u32 %v2884, 16
      %v2889 = vshrl.u32 %v2884, 16
      %vm2890 = vc.u32 %v2882, %v2886
      %v2891 = vsel %vm2890, 1, 0
      %v2892 = vadd.s32 %v2882, %v2886
      %v2893 = vadd.s32 %v2885, %v2891
      %vm2894 = vc.u32 %v2892, %v2888
      %v2895 = vsel %vm2894, 1, 0
      %v2896 = vadd.s32 %v2892, %v2888
      %v2897 = vadd.s32 %v2893, %v2895
      %v2898 = vadd.s32 %v2897, %v2887
      %v2899 = vadd.s32 %v2898, %v2889
      %v2900 = vshrl.u32 %v2899, 4
      %v2901 = vmul.u32 %v2900, 24
      %v2902 = vsub.s32 %v2878, %v2901
      %v2903 = vsub.s32 0, %v2902
      %v2904 = vsel %vm2876, %v2903, %v2902
      %vm2905 = vcmp.lt.s32.totalorder %v2763, 0
      %v2906 = vsub.s32 0, %v2763
      %v2907 = vsel %vm2905, %v2906, %v2763
      %v2908 = vand.u32 %v2907, 65535
      %v2909 = vshrl.u32 %v2907, 16
      %v2911 = vmul.u32 %v2908, 43691
      %v2912 = vmul.u32 %v2908, 43690
      %v2913 = vmul.u32 %v2909, 43691
      %v2914 = vmul.u32 %v2909, 43690
      %v2915 = vshll.u32 %v2912, 16
      %v2916 = vshrl.u32 %v2912, 16
      %v2917 = vshll.u32 %v2913, 16
      %v2918 = vshrl.u32 %v2913, 16
      %vm2919 = vc.u32 %v2911, %v2915
      %v2920 = vsel %vm2919, 1, 0
      %v2921 = vadd.s32 %v2911, %v2915
      %v2922 = vadd.s32 %v2914, %v2920
      %vm2923 = vc.u32 %v2921, %v2917
      %v2924 = vsel %vm2923, 1, 0
      %v2925 = vadd.s32 %v2921, %v2917
      %v2926 = vadd.s32 %v2922, %v2924
      %v2927 = vadd.s32 %v2926, %v2916
      %v2928 = vadd.s32 %v2927, %v2918
      %v2929 = vshrl.u32 %v2928, 4
      %v2930 = vmul.u32 %v2929, 24
      %v2931 = vsub.s32 %v2907, %v2930
      %v2932 = vsub.s32 0, %v2931
      %v2933 = vsel %vm2905, %v2932, %v2931
      %vm2934 = vcmp.lt.s32.totalorder %v2764, 0
      %v2935 = vsub.s32 0, %v2764
      %v2936 = vsel %vm2934, %v2935, %v2764
      %v2937 = vand.u32 %v2936, 65535
      %v2938 = vshrl.u32 %v2936, 16
      %v2940 = vmul.u32 %v2937, 43691
      %v2941 = vmul.u32 %v2937, 43690
      %v2942 = vmul.u32 %v2938, 43691
      %v2943 = vmul.u32 %v2938, 43690
      %v2944 = vshll.u32 %v2941, 16
      %v2945 = vshrl.u32 %v2941, 16
      %v2946 = vshll.u32 %v2942, 16
      %v2947 = vshrl.u32 %v2942, 16
      %vm2948 = vc.u32 %v2940, %v2944
      %v2949 = vsel %vm2948, 1, 0
      %v2950 = vadd.s32 %v2940, %v2944
      %v2951 = vadd.s32 %v2943, %v2949
      %vm2952 = vc.u32 %v2950, %v2946
      %v2953 = vsel %vm2952, 1, 0
      %v2954 = vadd.s32 %v2950, %v2946
      %v2955 = vadd.s32 %v2951, %v2953
      %v2956 = vadd.s32 %v2955, %v2945
      %v2957 = vadd.s32 %v2956, %v2947
      %v2958 = vshrl.u32 %v2957, 4
      %v2959 = vmul.u32 %v2958, 24
      %v2960 = vsub.s32 %v2936, %v2959
      %v2961 = vsub.s32 0, %v2960
      %v2962 = vsel %vm2934, %v2961, %v2960
      %vm2963 = vcmp.lt.s32.totalorder %v2765, 0
      %v2964 = vsub.s32 0, %v2765
      %v2965 = vsel %vm2963, %v2964, %v2765
      %v2966 = vand.u32 %v2965, 65535
      %v2967 = vshrl.u32 %v2965, 16
      %v2969 = vmul.u32 %v2966, 43691
      %v2970 = vmul.u32 %v2966, 43690
      %v2971 = vmul.u32 %v2967, 43691
      %v2972 = vmul.u32 %v2967, 43690
      %v2973 = vshll.u32 %v2970, 16
      %v2974 = vshrl.u32 %v2970, 16
      %v2975 = vshll.u32 %v2971, 16
      %v2976 = vshrl.u32 %v2971, 16
      %vm2977 = vc.u32 %v2969, %v2973
      %v2978 = vsel %vm2977, 1, 0
      %v2979 = vadd.s32 %v2969, %v2973
      %v2980 = vadd.s32 %v2972, %v2978
      %vm2981 = vc.u32 %v2979, %v2975
      %v2982 = vsel %vm2981, 1, 0
      %v2983 = vadd.s32 %v2979, %v2975
      %v2984 = vadd.s32 %v2980, %v2982
      %v2985 = vadd.s32 %v2984, %v2974
      %v2986 = vadd.s32 %v2985, %v2976
      %v2987 = vshrl.u32 %v2986, 4
      %v2988 = vmul.u32 %v2987, 24
      %v2989 = vsub.s32 %v2965, %v2988
      %v2990 = vsub.s32 0, %v2989
      %v2991 = vsel %vm2963, %v2990, %v2989
      %vm2992 = vcmp.lt.s32.totalorder %v2766, 0
      %v2993 = vsub.s32 0, %v2766
      %v2994 = vsel %vm2992, %v2993, %v2766
      %v2995 = vand.u32 %v2994, 65535
      %v2996 = vshrl.u32 %v2994, 16
      %v2998 = vmul.u32 %v2995, 43691
      %v2999 = vmul.u32 %v2995, 43690
      %v3000 = vmul.u32 %v2996, 43691
      %v3001 = vmul.u32 %v2996, 43690
      %v3002 = vshll.u32 %v2999, 16
      %v3003 = vshrl.u32 %v2999, 16
      %v3004 = vshll.u32 %v3000, 16
      %v3005 = vshrl.u32 %v3000, 16
      %vm3006 = vc.u32 %v2998, %v3002
      %v3007 = vsel %vm3006, 1, 0
      %v3008 = vadd.s32 %v2998, %v3002
      %v3009 = vadd.s32 %v3001, %v3007
      %vm3010 = vc.u32 %v3008, %v3004
      %v3011 = vsel %vm3010, 1, 0
      %v3012 = vadd.s32 %v3008, %v3004
      %v3013 = vadd.s32 %v3009, %v3011
      %v3014 = vadd.s32 %v3013, %v3003
      %v3015 = vadd.s32 %v3014, %v3005
      %v3016 = vshrl.u32 %v3015, 4
      %v3017 = vmul.u32 %v3016, 24
      %v3018 = vsub.s32 %v2994, %v3017
      %v3019 = vsub.s32 0, %v3018
      %v3020 = vsel %vm2992, %v3019, %v3018
      %vm3021 = vcmp.lt.s32.totalorder %v2767, 0
      %v3022 = vsub.s32 0, %v2767
      %v3023 = vsel %vm3021, %v3022, %v2767
      %v3024 = vand.u32 %v3023, 65535
      %v3025 = vshrl.u32 %v3023, 16
      %v3027 = vmul.u32 %v3024, 43691
      %v3028 = vmul.u32 %v3024, 43690
      %v3029 = vmul.u32 %v3025, 43691
      %v3030 = vmul.u32 %v3025, 43690
      %v3031 = vshll.u32 %v3028, 16
      %v3032 = vshrl.u32 %v3028, 16
      %v3033 = vshll.u32 %v3029, 16
      %v3034 = vshrl.u32 %v3029, 16
      %vm3035 = vc.u32 %v3027, %v3031
      %v3036 = vsel %vm3035, 1, 0
      %v3037 = vadd.s32 %v3027, %v3031
      %v3038 = vadd.s32 %v3030, %v3036
      %vm3039 = vc.u32 %v3037, %v3033
      %v3040 = vsel %vm3039, 1, 0
      %v3041 = vadd.s32 %v3037, %v3033
      %v3042 = vadd.s32 %v3038, %v3040
      %v3043 = vadd.s32 %v3042, %v3032
      %v3044 = vadd.s32 %v3043, %v3034
      %v3045 = vshrl.u32 %v3044, 4
      %v3046 = vmul.u32 %v3045, 24
      %v3047 = vsub.s32 %v3023, %v3046
      %v3048 = vsub.s32 0, %v3047
      %v3049 = vsel %vm3021, %v3048, %v3047
      %vm3050 = vcmp.lt.s32.totalorder %v2768, 0
      %v3051 = vsub.s32 0, %v2768
      %v3052 = vsel %vm3050, %v3051, %v2768
      %v3053 = vand.u32 %v3052, 65535
      %v3054 = vshrl.u32 %v3052, 16
      %v3056 = vmul.u32 %v3053, 43691
      %v3057 = vmul.u32 %v3053, 43690
      %v3058 = vmul.u32 %v3054, 43691
      %v3059 = vmul.u32 %v3054, 43690
      %v3060 = vshll.u32 %v3057, 16
      %v3061 = vshrl.u32 %v3057, 16
      %v3062 = vshll.u32 %v3058, 16
      %v3063 = vshrl.u32 %v3058, 16
      %vm3064 = vc.u32 %v3056, %v3060
      %v3065 = vsel %vm3064, 1, 0
      %v3066 = vadd.s32 %v3056, %v3060
      %v3067 = vadd.s32 %v3059, %v3065
      %vm3068 = vc.u32 %v3066, %v3062
      %v3069 = vsel %vm3068, 1, 0
      %v3070 = vadd.s32 %v3066, %v3062
      %v3071 = vadd.s32 %v3067, %v3069
      %v3072 = vadd.s32 %v3071, %v3061
      %v3073 = vadd.s32 %v3072, %v3063
      %v3074 = vshrl.u32 %v3073, 4
      %v3075 = vmul.u32 %v3074, 24
      %v3076 = vsub.s32 %v3052, %v3075
      %v3077 = vsub.s32 0, %v3076
      %v3078 = vsel %vm3050, %v3077, %v3076
      %vm3079 = vcmp.lt.s32.totalorder %v2769, 0
      %v3080 = vsub.s32 0, %v2769
      %v3081 = vsel %vm3079, %v3080, %v2769
      %v3082 = vand.u32 %v3081, 65535
      %v3083 = vshrl.u32 %v3081, 16
      %v3085 = vmul.u32 %v3082, 43691
      %v3086 = vmul.u32 %v3082, 43690
      %v3087 = vmul.u32 %v3083, 43691
      %v3088 = vmul.u32 %v3083, 43690
      %v3089 = vshll.u32 %v3086, 16
      %v3090 = vshrl.u32 %v3086, 16
      %v3091 = vshll.u32 %v3087, 16
      %v3092 = vshrl.u32 %v3087, 16
      %vm3093 = vc.u32 %v3085, %v3089
      %v3094 = vsel %vm3093, 1, 0
      %v3095 = vadd.s32 %v3085, %v3089
      %v3096 = vadd.s32 %v3088, %v3094
      %vm3097 = vc.u32 %v3095, %v3091
      %v3098 = vsel %vm3097, 1, 0
      %v3099 = vadd.s32 %v3095, %v3091
      %v3100 = vadd.s32 %v3096, %v3098
      %v3101 = vadd.s32 %v3100, %v3090
      %v3102 = vadd.s32 %v3101, %v3092
      %v3103 = vshrl.u32 %v3102, 4
      %v3104 = vmul.u32 %v3103, 24
      %v3105 = vsub.s32 %v3081, %v3104
      %v3106 = vsub.s32 0, %v3105
      %v3107 = vsel %vm3079, %v3106, %v3105
      %vm3108 = vcmp.lt.s32.totalorder %v2770, 0
      %v3109 = vsub.s32 0, %v2770
      %v3110 = vsel %vm3108, %v3109, %v2770
      %v3111 = vand.u32 %v3110, 65535
      %v3112 = vshrl.u32 %v3110, 16
      %v3114 = vmul.u32 %v3111, 43691
      %v3115 = vmul.u32 %v3111, 43690
      %v3116 = vmul.u32 %v3112, 43691
      %v3117 = vmul.u32 %v3112, 43690
      %v3118 = vshll.u32 %v3115, 16
      %v3119 = vshrl.u32 %v3115, 16
      %v3120 = vshll.u32 %v3116, 16
      %v3121 = vshrl.u32 %v3116, 16
      %vm3122 = vc.u32 %v3114, %v3118
      %v3123 = vsel %vm3122, 1, 0
      %v3124 = vadd.s32 %v3114, %v3118
      %v3125 = vadd.s32 %v3117, %v3123
      %vm3126 = vc.u32 %v3124, %v3120
      %v3127 = vsel %vm3126, 1, 0
      %v3128 = vadd.s32 %v3124, %v3120
      %v3129 = vadd.s32 %v3125, %v3127
      %v3130 = vadd.s32 %v3129, %v3119
      %v3131 = vadd.s32 %v3130, %v3121
      %v3132 = vshrl.u32 %v3131, 4
      %v3133 = vmul.u32 %v3132, 24
      %v3134 = vsub.s32 %v3110, %v3133
      %v3135 = vsub.s32 0, %v3134
      %v3136 = vsel %vm3108, %v3135, %v3134
      %vm3137 = vcmp.lt.s32.totalorder %v2771, 0
      %v3138 = vsub.s32 0, %v2771
      %v3139 = vsel %vm3137, %v3138, %v2771
      %v3140 = vand.u32 %v3139, 65535
      %v3141 = vshrl.u32 %v3139, 16
      %v3143 = vmul.u32 %v3140, 43691
      %v3144 = vmul.u32 %v3140, 43690
      %v3145 = vmul.u32 %v3141, 43691
      %v3146 = vmul.u32 %v3141, 43690
      %v3147 = vshll.u32 %v3144, 16
      %v3148 = vshrl.u32 %v3144, 16
      %v3149 = vshll.u32 %v3145, 16
      %v3150 = vshrl.u32 %v3145, 16
      %vm3151 = vc.u32 %v3143, %v3147
      %v3152 = vsel %vm3151, 1, 0
      %v3153 = vadd.s32 %v3143, %v3147
      %v3154 = vadd.s32 %v3146, %v3152
      %vm3155 = vc.u32 %v3153, %v3149
      %v3156 = vsel %vm3155, 1, 0
      %v3157 = vadd.s32 %v3153, %v3149
      %v3158 = vadd.s32 %v3154, %v3156
      %v3159 = vadd.s32 %v3158, %v3148
      %v3160 = vadd.s32 %v3159, %v3150
      %v3161 = vshrl.u32 %v3160, 4
      %v3162 = vmul.u32 %v3161, 24
      %v3163 = vsub.s32 %v3139, %v3162
      %v3164 = vsub.s32 0, %v3163
      %v3165 = vsel %vm3137, %v3164, %v3163
      %vm3166 = vcmp.lt.s32.totalorder %v2772, 0
      %v3167 = vsub.s32 0, %v2772
      %v3168 = vsel %vm3166, %v3167, %v2772
      %v3169 = vand.u32 %v3168, 65535
      %v3170 = vshrl.u32 %v3168, 16
      %v3172 = vmul.u32 %v3169, 43691
      %v3173 = vmul.u32 %v3169, 43690
      %v3174 = vmul.u32 %v3170, 43691
      %v3175 = vmul.u32 %v3170, 43690
      %v3176 = vshll.u32 %v3173, 16
      %v3177 = vshrl.u32 %v3173, 16
      %v3178 = vshll.u32 %v3174, 16
      %v3179 = vshrl.u32 %v3174, 16
      %vm3180 = vc.u32 %v3172, %v3176
      %v3181 = vsel %vm3180, 1, 0
      %v3182 = vadd.s32 %v3172, %v3176
      %v3183 = vadd.s32 %v3175, %v3181
      %vm3184 = vc.u32 %v3182, %v3178
      %v3185 = vsel %vm3184, 1, 0
      %v3186 = vadd.s32 %v3182, %v3178
      %v3187 = vadd.s32 %v3183, %v3185
      %v3188 = vadd.s32 %v3187, %v3177
      %v3189 = vadd.s32 %v3188, %v3179
      %v3190 = vshrl.u32 %v3189, 4
      %v3191 = vmul.u32 %v3190, 24
      %v3192 = vsub.s32 %v3168, %v3191
      %v3193 = vsub.s32 0, %v3192
      %v3194 = vsel %vm3166, %v3193, %v3192
      %vm3195 = vcmp.lt.s32.totalorder %v2773, 0
      %v3196 = vsub.s32 0, %v2773
      %v3197 = vsel %vm3195, %v3196, %v2773
      %v3198 = vand.u32 %v3197, 65535
      %v3199 = vshrl.u32 %v3197, 16
      %v3201 = vmul.u32 %v3198, 43691
      %v3202 = vmul.u32 %v3198, 43690
      %v3203 = vmul.u32 %v3199, 43691
      %v3204 = vmul.u32 %v3199, 43690
      %v3205 = vshll.u32 %v3202, 16
      %v3206 = vshrl.u32 %v3202, 16
      %v3207 = vshll.u32 %v3203, 16
      %v3208 = vshrl.u32 %v3203, 16
      %vm3209 = vc.u32 %v3201, %v3205
      %v3210 = vsel %vm3209, 1, 0
      %v3211 = vadd.s32 %v3201, %v3205
      %v3212 = vadd.s32 %v3204, %v3210
      %vm3213 = vc.u32 %v3211, %v3207
      %v3214 = vsel %vm3213, 1, 0
      %v3215 = vadd.s32 %v3211, %v3207
      %v3216 = vadd.s32 %v3212, %v3214
      %v3217 = vadd.s32 %v3216, %v3206
      %v3218 = vadd.s32 %v3217, %v3208
      %v3219 = vshrl.u32 %v3218, 4
      %v3220 = vmul.u32 %v3219, 24
      %v3221 = vsub.s32 %v3197, %v3220
      %v3222 = vsub.s32 0, %v3221
      %v3223 = vsel %vm3195, %v3222, %v3221
      %vm3224 = vcmp.lt.s32.totalorder %v2774, 0
      %v3225 = vsub.s32 0, %v2774
      %v3226 = vsel %vm3224, %v3225, %v2774
      %v3227 = vand.u32 %v3226, 65535
      %v3228 = vshrl.u32 %v3226, 16
      %v3230 = vmul.u32 %v3227, 43691
      %v3231 = vmul.u32 %v3227, 43690
      %v3232 = vmul.u32 %v3228, 43691
      %v3233 = vmul.u32 %v3228, 43690
      %v3234 = vshll.u32 %v3231, 16
      %v3235 = vshrl.u32 %v3231, 16
      %v3236 = vshll.u32 %v3232, 16
      %v3237 = vshrl.u32 %v3232, 16
      %vm3238 = vc.u32 %v3230, %v3234
      %v3239 = vsel %vm3238, 1, 0
      %v3240 = vadd.s32 %v3230, %v3234
      %v3241 = vadd.s32 %v3233, %v3239
      %vm3242 = vc.u32 %v3240, %v3236
      %v3243 = vsel %vm3242, 1, 0
      %v3244 = vadd.s32 %v3240, %v3236
      %v3245 = vadd.s32 %v3241, %v3243
      %v3246 = vadd.s32 %v3245, %v3235
      %v3247 = vadd.s32 %v3246, %v3237
      %v3248 = vshrl.u32 %v3247, 4
      %v3249 = vmul.u32 %v3248, 24
      %v3250 = vsub.s32 %v3226, %v3249
      %v3251 = vsub.s32 0, %v3250
      %v3252 = vsel %vm3224, %v3251, %v3250
      %vm3253 = vcmp.lt.s32.totalorder %v2775, 0
      %v3254 = vsub.s32 0, %v2775
      %v3255 = vsel %vm3253, %v3254, %v2775
      %v3256 = vand.u32 %v3255, 65535
      %v3257 = vshrl.u32 %v3255, 16
      %v3259 = vmul.u32 %v3256, 43691
      %v3260 = vmul.u32 %v3256, 43690
      %v3261 = vmul.u32 %v3257, 43691
      %v3262 = vmul.u32 %v3257, 43690
      %v3263 = vshll.u32 %v3260, 16
      %v3264 = vshrl.u32 %v3260, 16
      %v3265 = vshll.u32 %v3261, 16
      %v3266 = vshrl.u32 %v3261, 16
      %vm3267 = vc.u32 %v3259, %v3263
      %v3268 = vsel %vm3267, 1, 0
      %v3269 = vadd.s32 %v3259, %v3263
      %v3270 = vadd.s32 %v3262, %v3268
      %vm3271 = vc.u32 %v3269, %v3265
      %v3272 = vsel %vm3271, 1, 0
      %v3273 = vadd.s32 %v3269, %v3265
      %v3274 = vadd.s32 %v3270, %v3272
      %v3275 = vadd.s32 %v3274, %v3264
      %v3276 = vadd.s32 %v3275, %v3266
      %v3277 = vshrl.u32 %v3276, 4
      %v3278 = vmul.u32 %v3277, 24
      %v3279 = vsub.s32 %v3255, %v3278
      %v3280 = vsub.s32 0, %v3279
      %v3281 = vsel %vm3253, %v3280, %v3279
      %vm3282 = vcmp.lt.s32.totalorder %v2776, 0
      %v3283 = vsub.s32 0, %v2776
      %v3284 = vsel %vm3282, %v3283, %v2776
      %v3285 = vand.u32 %v3284, 65535
      %v3286 = vshrl.u32 %v3284, 16
      %v3288 = vmul.u32 %v3285, 43691
      %v3289 = vmul.u32 %v3285, 43690
      %v3290 = vmul.u32 %v3286, 43691
      %v3291 = vmul.u32 %v3286, 43690
      %v3292 = vshll.u32 %v3289, 16
      %v3293 = vshrl.u32 %v3289, 16
      %v3294 = vshll.u32 %v3290, 16
      %v3295 = vshrl.u32 %v3290, 16
      %vm3296 = vc.u32 %v3288, %v3292
      %v3297 = vsel %vm3296, 1, 0
      %v3298 = vadd.s32 %v3288, %v3292
      %v3299 = vadd.s32 %v3291, %v3297
      %vm3300 = vc.u32 %v3298, %v3294
      %v3301 = vsel %vm3300, 1, 0
      %v3302 = vadd.s32 %v3298, %v3294
      %v3303 = vadd.s32 %v3299, %v3301
      %v3304 = vadd.s32 %v3303, %v3293
      %v3305 = vadd.s32 %v3304, %v3295
      %v3306 = vshrl.u32 %v3305, 4
      %v3307 = vmul.u32 %v3306, 24
      %v3308 = vsub.s32 %v3284, %v3307
      %v3309 = vsub.s32 0, %v3308
      %v3310 = vsel %vm3282, %v3309, %v3308
      %vm3311 = vcmp.lt.s32.totalorder %v2777, 0
      %v3312 = vsub.s32 0, %v2777
      %v3313 = vsel %vm3311, %v3312, %v2777
      %v3314 = vand.u32 %v3313, 65535
      %v3315 = vshrl.u32 %v3313, 16
      %v3317 = vmul.u32 %v3314, 43691
      %v3318 = vmul.u32 %v3314, 43690
      %v3319 = vmul.u32 %v3315, 43691
      %v3320 = vmul.u32 %v3315, 43690
      %v3321 = vshll.u32 %v3318, 16
      %v3322 = vshrl.u32 %v3318, 16
      %v3323 = vshll.u32 %v3319, 16
      %v3324 = vshrl.u32 %v3319, 16
      %vm3325 = vc.u32 %v3317, %v3321
      %v3326 = vsel %vm3325, 1, 0
      %v3327 = vadd.s32 %v3317, %v3321
      %v3328 = vadd.s32 %v3320, %v3326
      %vm3329 = vc.u32 %v3327, %v3323
      %v3330 = vsel %vm3329, 1, 0
      %v3331 = vadd.s32 %v3327, %v3323
      %v3332 = vadd.s32 %v3328, %v3330
      %v3333 = vadd.s32 %v3332, %v3322
      %v3334 = vadd.s32 %v3333, %v3324
      %v3335 = vshrl.u32 %v3334, 4
      %v3336 = vmul.u32 %v3335, 24
      %v3337 = vsub.s32 %v3313, %v3336
      %v3338 = vsub.s32 0, %v3337
      %v3339 = vsel %vm3311, %v3338, %v3337
      %vm3340 = vcmp.lt.s32.totalorder %v2778, 0
      %v3341 = vsub.s32 0, %v2778
      %v3342 = vsel %vm3340, %v3341, %v2778
      %v3343 = vand.u32 %v3342, 65535
      %v3344 = vshrl.u32 %v3342, 16
      %v3346 = vmul.u32 %v3343, 43691
      %v3347 = vmul.u32 %v3343, 43690
      %v3348 = vmul.u32 %v3344, 43691
      %v3349 = vmul.u32 %v3344, 43690
      %v3350 = vshll.u32 %v3347, 16
      %v3351 = vshrl.u32 %v3347, 16
      %v3352 = vshll.u32 %v3348, 16
      %v3353 = vshrl.u32 %v3348, 16
      %vm3354 = vc.u32 %v3346, %v3350
      %v3355 = vsel %vm3354, 1, 0
      %v3356 = vadd.s32 %v3346, %v3350
      %v3357 = vadd.s32 %v3349, %v3355
      %vm3358 = vc.u32 %v3356, %v3352
      %v3359 = vsel %vm3358, 1, 0
      %v3360 = vadd.s32 %v3356, %v3352
      %v3361 = vadd.s32 %v3357, %v3359
      %v3362 = vadd.s32 %v3361, %v3351
      %v3363 = vadd.s32 %v3362, %v3353
      %v3364 = vshrl.u32 %v3363, 4
      %v3365 = vmul.u32 %v3364, 24
      %v3366 = vsub.s32 %v3342, %v3365
      %v3367 = vsub.s32 0, %v3366
      %v3368 = vsel %vm3340, %v3367, %v3366
      %vm3369 = vcmp.lt.s32.totalorder %v2779, 0
      %v3370 = vsub.s32 0, %v2779
      %v3371 = vsel %vm3369, %v3370, %v2779
      %v3372 = vand.u32 %v3371, 65535
      %v3373 = vshrl.u32 %v3371, 16
      %v3375 = vmul.u32 %v3372, 43691
      %v3376 = vmul.u32 %v3372, 43690
      %v3377 = vmul.u32 %v3373, 43691
      %v3378 = vmul.u32 %v3373, 43690
      %v3379 = vshll.u32 %v3376, 16
      %v3380 = vshrl.u32 %v3376, 16
      %v3381 = vshll.u32 %v3377, 16
      %v3382 = vshrl.u32 %v3377, 16
      %vm3383 = vc.u32 %v3375, %v3379
      %v3384 = vsel %vm3383, 1, 0
      %v3385 = vadd.s32 %v3375, %v3379
      %v3386 = vadd.s32 %v3378, %v3384
      %vm3387 = vc.u32 %v3385, %v3381
      %v3388 = vsel %vm3387, 1, 0
      %v3389 = vadd.s32 %v3385, %v3381
      %v3390 = vadd.s32 %v3386, %v3388
      %v3391 = vadd.s32 %v3390, %v3380
      %v3392 = vadd.s32 %v3391, %v3382
      %v3393 = vshrl.u32 %v3392, 4
      %v3394 = vmul.u32 %v3393, 24
      %v3395 = vsub.s32 %v3371, %v3394
      %v3396 = vsub.s32 0, %v3395
      %v3397 = vsel %vm3369, %v3396, %v3395
      %vm3398 = vcmp.lt.s32.totalorder %v2780, 0
      %v3399 = vsub.s32 0, %v2780
      %v3400 = vsel %vm3398, %v3399, %v2780
      %v3401 = vand.u32 %v3400, 65535
      %v3402 = vshrl.u32 %v3400, 16
      %v3404 = vmul.u32 %v3401, 43691
      %v3405 = vmul.u32 %v3401, 43690
      %v3406 = vmul.u32 %v3402, 43691
      %v3407 = vmul.u32 %v3402, 43690
      %v3408 = vshll.u32 %v3405, 16
      %v3409 = vshrl.u32 %v3405, 16
      %v3410 = vshll.u32 %v3406, 16
      %v3411 = vshrl.u32 %v3406, 16
      %vm3412 = vc.u32 %v3404, %v3408
      %v3413 = vsel %vm3412, 1, 0
      %v3414 = vadd.s32 %v3404, %v3408
      %v3415 = vadd.s32 %v3407, %v3413
      %vm3416 = vc.u32 %v3414, %v3410
      %v3417 = vsel %vm3416, 1, 0
      %v3418 = vadd.s32 %v3414, %v3410
      %v3419 = vadd.s32 %v3415, %v3417
      %v3420 = vadd.s32 %v3419, %v3409
      %v3421 = vadd.s32 %v3420, %v3411
      %v3422 = vshrl.u32 %v3421, 4
      %v3423 = vmul.u32 %v3422, 24
      %v3424 = vsub.s32 %v3400, %v3423
      %v3425 = vsub.s32 0, %v3424
      %v3426 = vsel %vm3398, %v3425, %v3424
      %vm3427 = vcmp.lt.s32.totalorder %v2781, 0
      %v3428 = vsub.s32 0, %v2781
      %v3429 = vsel %vm3427, %v3428, %v2781
      %v3430 = vand.u32 %v3429, 65535
      %v3431 = vshrl.u32 %v3429, 16
      %v3433 = vmul.u32 %v3430, 43691
      %v3434 = vmul.u32 %v3430, 43690
      %v3435 = vmul.u32 %v3431, 43691
      %v3436 = vmul.u32 %v3431, 43690
      %v3437 = vshll.u32 %v3434, 16
      %v3438 = vshrl.u32 %v3434, 16
      %v3439 = vshll.u32 %v3435, 16
      %v3440 = vshrl.u32 %v3435, 16
      %vm3441 = vc.u32 %v3433, %v3437
      %v3442 = vsel %vm3441, 1, 0
      %v3443 = vadd.s32 %v3433, %v3437
      %v3444 = vadd.s32 %v3436, %v3442
      %vm3445 = vc.u32 %v3443, %v3439
      %v3446 = vsel %vm3445, 1, 0
      %v3447 = vadd.s32 %v3443, %v3439
      %v3448 = vadd.s32 %v3444, %v3446
      %v3449 = vadd.s32 %v3448, %v3438
      %v3450 = vadd.s32 %v3449, %v3440
      %v3451 = vshrl.u32 %v3450, 4
      %v3452 = vmul.u32 %v3451, 24
      %v3453 = vsub.s32 %v3429, %v3452
      %v3454 = vsub.s32 0, %v3453
      %v3455 = vsel %vm3427, %v3454, %v3453
      %vm3456 = vcmp.lt.s32.totalorder %v2782, 0
      %v3457 = vsub.s32 0, %v2782
      %v3458 = vsel %vm3456, %v3457, %v2782
      %v3459 = vand.u32 %v3458, 65535
      %v3460 = vshrl.u32 %v3458, 16
      %v3462 = vmul.u32 %v3459, 43691
      %v3463 = vmul.u32 %v3459, 43690
      %v3464 = vmul.u32 %v3460, 43691
      %v3465 = vmul.u32 %v3460, 43690
      %v3466 = vshll.u32 %v3463, 16
      %v3467 = vshrl.u32 %v3463, 16
      %v3468 = vshll.u32 %v3464, 16
      %v3469 = vshrl.u32 %v3464, 16
      %vm3470 = vc.u32 %v3462, %v3466
      %v3471 = vsel %vm3470, 1, 0
      %v3472 = vadd.s32 %v3462, %v3466
      %v3473 = vadd.s32 %v3465, %v3471
      %vm3474 = vc.u32 %v3472, %v3468
      %v3475 = vsel %vm3474, 1, 0
      %v3476 = vadd.s32 %v3472, %v3468
      %v3477 = vadd.s32 %v3473, %v3475
      %v3478 = vadd.s32 %v3477, %v3467
      %v3479 = vadd.s32 %v3478, %v3469
      %v3480 = vshrl.u32 %v3479, 4
      %v3481 = vmul.u32 %v3480, 24
      %v3482 = vsub.s32 %v3458, %v3481
      %v3483 = vsub.s32 0, %v3482
      %v3484 = vsel %vm3456, %v3483, %v3482
      %vm3485 = vcmp.lt.s32.totalorder %v2783, 0
      %v3486 = vsub.s32 0, %v2783
      %v3487 = vsel %vm3485, %v3486, %v2783
      %v3488 = vand.u32 %v3487, 65535
      %v3489 = vshrl.u32 %v3487, 16
      %v3491 = vmul.u32 %v3488, 43691
      %v3492 = vmul.u32 %v3488, 43690
      %v3493 = vmul.u32 %v3489, 43691
      %v3494 = vmul.u32 %v3489, 43690
      %v3495 = vshll.u32 %v3492, 16
      %v3496 = vshrl.u32 %v3492, 16
      %v3497 = vshll.u32 %v3493, 16
      %v3498 = vshrl.u32 %v3493, 16
      %vm3499 = vc.u32 %v3491, %v3495
      %v3500 = vsel %vm3499, 1, 0
      %v3501 = vadd.s32 %v3491, %v3495
      %v3502 = vadd.s32 %v3494, %v3500
      %vm3503 = vc.u32 %v3501, %v3497
      %v3504 = vsel %vm3503, 1, 0
      %v3505 = vadd.s32 %v3501, %v3497
      %v3506 = vadd.s32 %v3502, %v3504
      %v3507 = vadd.s32 %v3506, %v3496
      %v3508 = vadd.s32 %v3507, %v3498
      %v3509 = vshrl.u32 %v3508, 4
      %v3510 = vmul.u32 %v3509, 24
      %v3511 = vsub.s32 %v3487, %v3510
      %v3512 = vsub.s32 0, %v3511
      %v3513 = vsel %vm3485, %v3512, %v3511
      %vm3514 = vcmp.lt.s32.totalorder %v2784, 0
      %v3515 = vsub.s32 0, %v2784
      %v3516 = vsel %vm3514, %v3515, %v2784
      %v3517 = vand.u32 %v3516, 65535
      %v3518 = vshrl.u32 %v3516, 16
      %v3520 = vmul.u32 %v3517, 43691
      %v3521 = vmul.u32 %v3517, 43690
      %v3522 = vmul.u32 %v3518, 43691
      %v3523 = vmul.u32 %v3518, 43690
      %v3524 = vshll.u32 %v3521, 16
      %v3525 = vshrl.u32 %v3521, 16
      %v3526 = vshll.u32 %v3522, 16
      %v3527 = vshrl.u32 %v3522, 16
      %vm3528 = vc.u32 %v3520, %v3524
      %v3529 = vsel %vm3528, 1, 0
      %v3530 = vadd.s32 %v3520, %v3524
      %v3531 = vadd.s32 %v3523, %v3529
      %vm3532 = vc.u32 %v3530, %v3526
      %v3533 = vsel %vm3532, 1, 0
      %v3534 = vadd.s32 %v3530, %v3526
      %v3535 = vadd.s32 %v3531, %v3533
      %v3536 = vadd.s32 %v3535, %v3525
      %v3537 = vadd.s32 %v3536, %v3527
      %v3538 = vshrl.u32 %v3537, 4
      %v3539 = vmul.u32 %v3538, 24
      %v3540 = vsub.s32 %v3516, %v3539
      %v3541 = vsub.s32 0, %v3540
      %v3542 = vsel %vm3514, %v3541, %v3540
      %vm3543 = vcmp.lt.s32.totalorder %v2785, 0
      %v3544 = vsub.s32 0, %v2785
      %v3545 = vsel %vm3543, %v3544, %v2785
      %v3546 = vand.u32 %v3545, 65535
      %v3547 = vshrl.u32 %v3545, 16
      %v3549 = vmul.u32 %v3546, 43691
      %v3550 = vmul.u32 %v3546, 43690
      %v3551 = vmul.u32 %v3547, 43691
      %v3552 = vmul.u32 %v3547, 43690
      %v3553 = vshll.u32 %v3550, 16
      %v3554 = vshrl.u32 %v3550, 16
      %v3555 = vshll.u32 %v3551, 16
      %v3556 = vshrl.u32 %v3551, 16
      %vm3557 = vc.u32 %v3549, %v3553
      %v3558 = vsel %vm3557, 1, 0
      %v3559 = vadd.s32 %v3549, %v3553
      %v3560 = vadd.s32 %v3552, %v3558
      %vm3561 = vc.u32 %v3559, %v3555
      %v3562 = vsel %vm3561, 1, 0
      %v3563 = vadd.s32 %v3559, %v3555
      %v3564 = vadd.s32 %v3560, %v3562
      %v3565 = vadd.s32 %v3564, %v3554
      %v3566 = vadd.s32 %v3565, %v3556
      %v3567 = vshrl.u32 %v3566, 4
      %v3568 = vmul.u32 %v3567, 24
      %v3569 = vsub.s32 %v3545, %v3568
      %v3570 = vsub.s32 0, %v3569
      %v3571 = vsel %vm3543, %v3570, %v3569
      %vm3572 = vcmp.lt.s32.totalorder %v2786, 0
      %v3573 = vsub.s32 0, %v2786
      %v3574 = vsel %vm3572, %v3573, %v2786
      %v3575 = vand.u32 %v3574, 65535
      %v3576 = vshrl.u32 %v3574, 16
      %v3578 = vmul.u32 %v3575, 43691
      %v3579 = vmul.u32 %v3575, 43690
      %v3580 = vmul.u32 %v3576, 43691
      %v3581 = vmul.u32 %v3576, 43690
      %v3582 = vshll.u32 %v3579, 16
      %v3583 = vshrl.u32 %v3579, 16
      %v3584 = vshll.u32 %v3580, 16
      %v3585 = vshrl.u32 %v3580, 16
      %vm3586 = vc.u32 %v3578, %v3582
      %v3587 = vsel %vm3586, 1, 0
      %v3588 = vadd.s32 %v3578, %v3582
      %v3589 = vadd.s32 %v3581, %v3587
      %vm3590 = vc.u32 %v3588, %v3584
      %v3591 = vsel %vm3590, 1, 0
      %v3592 = vadd.s32 %v3588, %v3584
      %v3593 = vadd.s32 %v3589, %v3591
      %v3594 = vadd.s32 %v3593, %v3583
      %v3595 = vadd.s32 %v3594, %v3585
      %v3596 = vshrl.u32 %v3595, 4
      %v3597 = vmul.u32 %v3596, 24
      %v3598 = vsub.s32 %v3574, %v3597
      %v3599 = vsub.s32 0, %v3598
      %v3600 = vsel %vm3572, %v3599, %v3598
      %vm3601 = vcmp.lt.s32.totalorder %v2787, 0
      %v3602 = vsub.s32 0, %v2787
      %v3603 = vsel %vm3601, %v3602, %v2787
      %v3604 = vand.u32 %v3603, 65535
      %v3605 = vshrl.u32 %v3603, 16
      %v3607 = vmul.u32 %v3604, 43691
      %v3608 = vmul.u32 %v3604, 43690
      %v3609 = vmul.u32 %v3605, 43691
      %v3610 = vmul.u32 %v3605, 43690
      %v3611 = vshll.u32 %v3608, 16
      %v3612 = vshrl.u32 %v3608, 16
      %v3613 = vshll.u32 %v3609, 16
      %v3614 = vshrl.u32 %v3609, 16
      %vm3615 = vc.u32 %v3607, %v3611
      %v3616 = vsel %vm3615, 1, 0
      %v3617 = vadd.s32 %v3607, %v3611
      %v3618 = vadd.s32 %v3610, %v3616
      %vm3619 = vc.u32 %v3617, %v3613
      %v3620 = vsel %vm3619, 1, 0
      %v3621 = vadd.s32 %v3617, %v3613
      %v3622 = vadd.s32 %v3618, %v3620
      %v3623 = vadd.s32 %v3622, %v3612
      %v3624 = vadd.s32 %v3623, %v3614
      %v3625 = vshrl.u32 %v3624, 4
      %v3626 = vmul.u32 %v3625, 24
      %v3627 = vsub.s32 %v3603, %v3626
      %v3628 = vsub.s32 0, %v3627
      %v3629 = vsel %vm3601, %v3628, %v3627
      %vm3630 = vcmp.lt.s32.totalorder %v2788, 0
      %v3631 = vsub.s32 0, %v2788
      %v3632 = vsel %vm3630, %v3631, %v2788
      %v3633 = vand.u32 %v3632, 65535
      %v3634 = vshrl.u32 %v3632, 16
      %v3636 = vmul.u32 %v3633, 43691
      %v3637 = vmul.u32 %v3633, 43690
      %v3638 = vmul.u32 %v3634, 43691
      %v3639 = vmul.u32 %v3634, 43690
      %v3640 = vshll.u32 %v3637, 16
      %v3641 = vshrl.u32 %v3637, 16
      %v3642 = vshll.u32 %v3638, 16
      %v3643 = vshrl.u32 %v3638, 16
      %vm3644 = vc.u32 %v3636, %v3640
      %v3645 = vsel %vm3644, 1, 0
      %v3646 = vadd.s32 %v3636, %v3640
      %v3647 = vadd.s32 %v3639, %v3645
      %vm3648 = vc.u32 %v3646, %v3642
      %v3649 = vsel %vm3648, 1, 0
      %v3650 = vadd.s32 %v3646, %v3642
      %v3651 = vadd.s32 %v3647, %v3649
      %v3652 = vadd.s32 %v3651, %v3641
      %v3653 = vadd.s32 %v3652, %v3643
      %v3654 = vshrl.u32 %v3653, 4
      %v3655 = vmul.u32 %v3654, 24
      %v3656 = vsub.s32 %v3632, %v3655
      %v3657 = vsub.s32 0, %v3656
      %v3658 = vsel %vm3630, %v3657, %v3656
      %vm3659 = vcmp.ne.s32.totalorder %v2817, 0
      %vm3660 = vcmp.ne.s32.totalorder %v2846, 0
      %vm3661 = vcmp.ne.s32.totalorder %v2875, 0
      %vm3662 = vcmp.ne.s32.totalorder %v2904, 0
      %vm3663 = vcmp.ne.s32.totalorder %v2933, 0
      %vm3664 = vcmp.ne.s32.totalorder %v2962, 0
      %vm3665 = vcmp.ne.s32.totalorder %v2991, 0
      %vm3666 = vcmp.ne.s32.totalorder %v3020, 0
      %vm3667 = vcmp.ne.s32.totalorder %v3049, 0
      %vm3668 = vcmp.ne.s32.totalorder %v3078, 0
      %vm3669 = vcmp.ne.s32.totalorder %v3107, 0
      %vm3670 = vcmp.ne.s32.totalorder %v3136, 0
      %vm3671 = vcmp.ne.s32.totalorder %v3165, 0
      %vm3672 = vcmp.ne.s32.totalorder %v3194, 0
      %vm3673 = vcmp.ne.s32.totalorder %v3223, 0
      %vm3674 = vcmp.ne.s32.totalorder %v3252, 0
      %vm3675 = vcmp.ne.s32.totalorder %v3281, 0
      %vm3676 = vcmp.ne.s32.totalorder %v3310, 0
      %vm3677 = vcmp.ne.s32.totalorder %v3339, 0
      %vm3678 = vcmp.ne.s32.totalorder %v3368, 0
      %vm3679 = vcmp.ne.s32.totalorder %v3397, 0
      %vm3680 = vcmp.ne.s32.totalorder %v3426, 0
      %vm3681 = vcmp.ne.s32.totalorder %v3455, 0
      %vm3682 = vcmp.ne.s32.totalorder %v3484, 0
      %vm3683 = vcmp.ne.s32.totalorder %v3513, 0
      %vm3684 = vcmp.ne.s32.totalorder %v3542, 0
      %vm3685 = vcmp.ne.s32.totalorder %v3571, 0
      %vm3686 = vcmp.ne.s32.totalorder %v3600, 0
      %vm3687 = vcmp.ne.s32.totalorder %v3629, 0
      %vm3688 = vcmp.ne.s32.totalorder %v3658, 0
      %vm3689 = vcmp.lt.s32.totalorder %v2817, 0
      %vm3690 = vcmp.lt.s32.totalorder %v2846, 0
      %vm3691 = vcmp.lt.s32.totalorder %v2875, 0
      %vm3692 = vcmp.lt.s32.totalorder %v2904, 0
      %vm3693 = vcmp.lt.s32.totalorder %v2933, 0
      %vm3694 = vcmp.lt.s32.totalorder %v2962, 0
      %vm3695 = vcmp.lt.s32.totalorder %v2991, 0
      %vm3696 = vcmp.lt.s32.totalorder %v3020, 0
      %vm3697 = vcmp.lt.s32.totalorder %v3049, 0
      %vm3698 = vcmp.lt.s32.totalorder %v3078, 0
      %vm3699 = vcmp.lt.s32.totalorder %v3107, 0
      %vm3700 = vcmp.lt.s32.totalorder %v3136, 0
      %vm3701 = vcmp.lt.s32.totalorder %v3165, 0
      %vm3702 = vcmp.lt.s32.totalorder %v3194, 0
      %vm3703 = vcmp.lt.s32.totalorder %v3223, 0
      %vm3704 = vcmp.lt.s32.totalorder %v3252, 0
      %vm3705 = vcmp.lt.s32.totalorder %v3281, 0
      %vm3706 = vcmp.lt.s32.totalorder %v3310, 0
      %vm3707 = vcmp.lt.s32.totalorder %v3339, 0
      %vm3708 = vcmp.lt.s32.totalorder %v3368, 0
      %vm3709 = vcmp.lt.s32.totalorder %v3397, 0
      %vm3710 = vcmp.lt.s32.totalorder %v3426, 0
      %vm3711 = vcmp.lt.s32.totalorder %v3455, 0
      %vm3712 = vcmp.lt.s32.totalorder %v3484, 0
      %vm3713 = vcmp.lt.s32.totalorder %v3513, 0
      %vm3714 = vcmp.lt.s32.totalorder %v3542, 0
      %vm3715 = vcmp.lt.s32.totalorder %v3571, 0
      %vm3716 = vcmp.lt.s32.totalorder %v3600, 0
      %vm3717 = vcmp.lt.s32.totalorder %v3629, 0
      %vm3718 = vcmp.lt.s32.totalorder %v3658, 0
      %vm3719 = vmand %vm3689, %vm3659
      %vm3720 = vmand %vm3690, %vm3660
      %vm3721 = vmand %vm3691, %vm3661
      %vm3722 = vmand %vm3692, %vm3662
      %vm3723 = vmand %vm3693, %vm3663
      %vm3724 = vmand %vm3694, %vm3664
      %vm3725 = vmand %vm3695, %vm3665
      %vm3726 = vmand %vm3696, %vm3666
      %vm3727 = vmand %vm3697, %vm3667
      %vm3728 = vmand %vm3698, %vm3668
      %vm3729 = vmand %vm3699, %vm3669
      %vm3730 = vmand %vm3700, %vm3670
      %vm3731 = vmand %vm3701, %vm3671
      %vm3732 = vmand %vm3702, %vm3672
      %vm3733 = vmand %vm3703, %vm3673
      %vm3734 = vmand %vm3704, %vm3674
      %vm3735 = vmand %vm3705, %vm3675
      %vm3736 = vmand %vm3706, %vm3676
      %vm3737 = vmand %vm3707, %vm3677
      %vm3738 = vmand %vm3708, %vm3678
      %vm3739 = vmand %vm3709, %vm3679
      %vm3740 = vmand %vm3710, %vm3680
      %vm3741 = vmand %vm3711, %vm3681
      %vm3742 = vmand %vm3712, %vm3682
      %vm3743 = vmand %vm3713, %vm3683
      %vm3744 = vmand %vm3714, %vm3684
      %vm3745 = vmand %vm3715, %vm3685
      %vm3746 = vmand %vm3716, %vm3686
      %vm3747 = vmand %vm3717, %vm3687
      %vm3748 = vmand %vm3718, %vm3688
      %v3749 = vadd.s32 %v2817, 24
      %v3750 = vadd.s32 %v2846, 24
      %v3751 = vadd.s32 %v2875, 24
      %v3752 = vadd.s32 %v2904, 24
      %v3753 = vadd.s32 %v2933, 24
      %v3754 = vadd.s32 %v2962, 24
      %v3755 = vadd.s32 %v2991, 24
      %v3756 = vadd.s32 %v3020, 24
      %v3757 = vadd.s32 %v3049, 24
      %v3758 = vadd.s32 %v3078, 24
      %v3759 = vadd.s32 %v3107, 24
      %v3760 = vadd.s32 %v3136, 24
      %v3761 = vadd.s32 %v3165, 24
      %v3762 = vadd.s32 %v3194, 24
      %v3763 = vadd.s32 %v3223, 24
      %v3764 = vadd.s32 %v3252, 24
      %v3765 = vadd.s32 %v3281, 24
      %v3766 = vadd.s32 %v3310, 24
      %v3767 = vadd.s32 %v3339, 24
      %v3768 = vadd.s32 %v3368, 24
      %v3769 = vadd.s32 %v3397, 24
      %v3770 = vadd.s32 %v3426, 24
      %v3771 = vadd.s32 %v3455, 24
      %v3772 = vadd.s32 %v3484, 24
      %v3773 = vadd.s32 %v3513, 24
      %v3774 = vadd.s32 %v3542, 24
      %v3775 = vadd.s32 %v3571, 24
      %v3776 = vadd.s32 %v3600, 24
      %v3777 = vadd.s32 %v3629, 24
      %v3778 = vadd.s32 %v3658, 24
      %v3779 = vsel %vm3719, %v3749, %v2817
      %v3780 = vsel %vm3720, %v3750, %v2846
      %v3781 = vsel %vm3721, %v3751, %v2875
      %v3782 = vsel %vm3722, %v3752, %v2904
      %v3783 = vsel %vm3723, %v3753, %v2933
      %v3784 = vsel %vm3724, %v3754, %v2962
      %v3785 = vsel %vm3725, %v3755, %v2991
      %v3786 = vsel %vm3726, %v3756, %v3020
      %v3787 = vsel %vm3727, %v3757, %v3049
      %v3788 = vsel %vm3728, %v3758, %v3078
      %v3789 = vsel %vm3729, %v3759, %v3107
      %v3790 = vsel %vm3730, %v3760, %v3136
      %v3791 = vsel %vm3731, %v3761, %v3165
      %v3792 = vsel %vm3732, %v3762, %v3194
      %v3793 = vsel %vm3733, %v3763, %v3223
      %v3794 = vsel %vm3734, %v3764, %v3252
      %v3795 = vsel %vm3735, %v3765, %v3281
      %v3796 = vsel %vm3736, %v3766, %v3310
      %v3797 = vsel %vm3737, %v3767, %v3339
      %v3798 = vsel %vm3738, %v3768, %v3368
      %v3799 = vsel %vm3739, %v3769, %v3397
      %v3800 = vsel %vm3740, %v3770, %v3426
      %v3801 = vsel %vm3741, %v3771, %v3455
      %v3802 = vsel %vm3742, %v3772, %v3484
      %v3803 = vsel %vm3743, %v3773, %v3513
      %v3804 = vsel %vm3744, %v3774, %v3542
      %v3805 = vsel %vm3745, %v3775, %v3571
      %v3806 = vsel %vm3746, %v3776, %v3600
      %v3807 = vsel %vm3747, %v3777, %v3629
      %v3808 = vsel %vm3748, %v3778, %v3658
      %vm3809 = vcmp.lt.s32.totalorder %v3779, 16
      %vm3810 = vcmp.lt.s32.totalorder %v3780, 16
      %vm3811 = vcmp.lt.s32.totalorder %v3781, 16
      %vm3812 = vcmp.lt.s32.totalorder %v3782, 16
      %vm3813 = vcmp.lt.s32.totalorder %v3783, 16
      %vm3814 = vcmp.lt.s32.totalorder %v3784, 16
      %vm3815 = vcmp.lt.s32.totalorder %v3785, 16
      %vm3816 = vcmp.lt.s32.totalorder %v3786, 16
      %vm3817 = vcmp.lt.s32.totalorder %v3787, 16
      %vm3818 = vcmp.lt.s32.totalorder %v3788, 16
      %vm3819 = vcmp.lt.s32.totalorder %v3789, 16
      %vm3820 = vcmp.lt.s32.totalorder %v3790, 16
      %vm3821 = vcmp.lt.s32.totalorder %v3791, 16
      %vm3822 = vcmp.lt.s32.totalorder %v3792, 16
      %vm3823 = vcmp.lt.s32.totalorder %v3793, 16
      %vm3824 = vcmp.lt.s32.totalorder %v3794, 16
      %vm3825 = vcmp.lt.s32.totalorder %v3795, 16
      %vm3826 = vcmp.lt.s32.totalorder %v3796, 16
      %vm3827 = vcmp.lt.s32.totalorder %v3797, 16
      %vm3828 = vcmp.lt.s32.totalorder %v3798, 16
      %vm3829 = vcmp.lt.s32.totalorder %v3799, 16
      %vm3830 = vcmp.lt.s32.totalorder %v3800, 16
      %vm3831 = vcmp.lt.s32.totalorder %v3801, 16
      %vm3832 = vcmp.lt.s32.totalorder %v3802, 16
      %vm3833 = vcmp.lt.s32.totalorder %v3803, 16
      %vm3834 = vcmp.lt.s32.totalorder %v3804, 16
      %vm3835 = vcmp.lt.s32.totalorder %v3805, 16
      %vm3836 = vcmp.lt.s32.totalorder %v3806, 16
      %vm3837 = vcmp.lt.s32.totalorder %v3807, 16
      %vm3838 = vcmp.lt.s32.totalorder %v3808, 16
      %v3839 = vsel %vm3809, 1, 0
      %v3840 = vsel %vm3810, 1, 0
      %v3841 = vsel %vm3811, 1, 0
      %v3842 = vsel %vm3812, 1, 0
      %v3843 = vsel %vm3813, 1, 0
      %v3844 = vsel %vm3814, 1, 0
      %v3845 = vsel %vm3815, 1, 0
      %v3846 = vsel %vm3816, 1, 0
      %v3847 = vsel %vm3817, 1, 0
      %v3848 = vsel %vm3818, 1, 0
      %v3849 = vsel %vm3819, 1, 0
      %v3850 = vsel %vm3820, 1, 0
      %v3851 = vsel %vm3821, 1, 0
      %v3852 = vsel %vm3822, 1, 0
      %v3853 = vsel %vm3823, 1, 0
      %v3854 = vsel %vm3824, 1, 0
      %v3855 = vsel %vm3825, 1, 0
      %v3856 = vsel %vm3826, 1, 0
      %v3857 = vsel %vm3827, 1, 0
      %v3858 = vsel %vm3828, 1, 0
      %v3859 = vsel %vm3829, 1, 0
      %v3860 = vsel %vm3830, 1, 0
      %v3861 = vsel %vm3831, 1, 0
      %v3862 = vsel %vm3832, 1, 0
      %v3863 = vsel %vm3833, 1, 0
      %v3864 = vsel %vm3834, 1, 0
      %v3865 = vsel %vm3835, 1, 0
      %v3866 = vsel %vm3836, 1, 0
      %v3867 = vsel %vm3837, 1, 0
      %v3868 = vsel %vm3838, 1, 0
      %vm3869 = vcmp.eq.s32.totalorder %v3839, 1
      %vm3870 = vcmp.eq.s32.totalorder %v3840, 1
      %vm3871 = vcmp.eq.s32.totalorder %v3841, 1
      %vm3872 = vcmp.eq.s32.totalorder %v3842, 1
      %vm3873 = vcmp.eq.s32.totalorder %v3843, 1
      %vm3874 = vcmp.eq.s32.totalorder %v3844, 1
      %vm3875 = vcmp.eq.s32.totalorder %v3845, 1
      %vm3876 = vcmp.eq.s32.totalorder %v3846, 1
      %vm3877 = vcmp.eq.s32.totalorder %v3847, 1
      %vm3878 = vcmp.eq.s32.totalorder %v3848, 1
      %vm3879 = vcmp.eq.s32.totalorder %v3849, 1
      %vm3880 = vcmp.eq.s32.totalorder %v3850, 1
      %vm3881 = vcmp.eq.s32.totalorder %v3851, 1
      %vm3882 = vcmp.eq.s32.totalorder %v3852, 1
      %vm3883 = vcmp.eq.s32.totalorder %v3853, 1
      %vm3884 = vcmp.eq.s32.totalorder %v3854, 1
      %vm3885 = vcmp.eq.s32.totalorder %v3855, 1
      %vm3886 = vcmp.eq.s32.totalorder %v3856, 1
      %vm3887 = vcmp.eq.s32.totalorder %v3857, 1
      %vm3888 = vcmp.eq.s32.totalorder %v3858, 1
      %vm3889 = vcmp.eq.s32.totalorder %v3859, 1
      %vm3890 = vcmp.eq.s32.totalorder %v3860, 1
      %vm3891 = vcmp.eq.s32.totalorder %v3861, 1
      %vm3892 = vcmp.eq.s32.totalorder %v3862, 1
      %vm3893 = vcmp.eq.s32.totalorder %v3863, 1
      %vm3894 = vcmp.eq.s32.totalorder %v3864, 1
      %vm3895 = vcmp.eq.s32.totalorder %v3865, 1
      %vm3896 = vcmp.eq.s32.totalorder %v3866, 1
      %vm3897 = vcmp.eq.s32.totalorder %v3867, 1
      %vm3898 = vcmp.eq.s32.totalorder %v3868, 1
      %v3899 = vsel %vm3869, %v2728, 0.0
      %v3900 = vsel %vm3870, %v2729, 0.0
      %v3901 = vsel %vm3871, %v2730, 0.0
      %v3902 = vsel %vm3872, %v2731, 0.0
      %v3903 = vsel %vm3873, %v2732, 0.0
      %v3904 = vsel %vm3874, %v2733, 0.0
      %v3905 = vsel %vm3875, %v2734, 0.0
      %v3906 = vsel %vm3876, %v2735, 0.0
      %v3907 = vsel %vm3877, %v2736, 0.0
      %v3908 = vsel %vm3878, %v2737, 0.0
      %v3909 = vsel %vm3879, %v2738, 0.0
      %v3910 = vsel %vm3880, %v2739, 0.0
      %v3911 = vsel %vm3881, %v2740, 0.0
      %v3912 = vsel %vm3882, %v2741, 0.0
      %v3913 = vsel %vm3883, %v2742, 0.0
      %v3914 = vsel %vm3884, %v2743, 0.0
      %v3915 = vsel %vm3885, %v2744, 0.0
      %v3916 = vsel %vm3886, %v2745, 0.0
      %v3917 = vsel %vm3887, %v2746, 0.0
      %v3918 = vsel %vm3888, %v2747, 0.0
      %v3919 = vsel %vm3889, %v2748, 0.0
      %v3920 = vsel %vm3890, %v2749, 0.0
      %v3921 = vsel %vm3891, %v2750, 0.0
      %v3922 = vsel %vm3892, %v2751, 0.0
      %v3923 = vsel %vm3893, %v2752, 0.0
      %v3924 = vsel %vm3894, %v2753, 0.0
      %v3925 = vsel %vm3895, %v2754, 0.0
      %v3926 = vsel %vm3896, %v2755, 0.0
      %v3927 = vsel %vm3897, %v2756, 0.0
      %v3928 = vsel %vm3898, %v2757, 0.0
      %3929 = vst.msk [vmem:[#allocation2 + $0x8] sm:$0xff] %vm322, %v3899
      %3930 = vst.msk [vmem:[#allocation2 + $0x10] sm:$0xff] %vm322, %v3900
      %3931 = vst.msk [vmem:[#allocation2 + $0x18] sm:$0xff] %vm322, %v3901
      %3932 = vst.msk [vmem:[#allocation2 + $0x20] sm:$0xff] %vm322, %v3902
      %3933 = vst.msk [vmem:[#allocation2 + $0x28] sm:$0xff] %vm322, %v3903
      %3934 = vst.msk [vmem:[#allocation2 + $0x30] sm:$0xff] %vm322, %v3904
      %3935 = vst.msk [vmem:[#allocation2 + $0x38] sm:$0xff] %vm322, %v3905
      %3936 = vst.msk [vmem:[#allocation2 + $0x40] sm:$0xff] %vm322, %v3906
      %3937 = vst.msk [vmem:[#allocation2 + $0x48] sm:$0xff] %vm322, %v3907
      %3938 = vst.msk [vmem:[#allocation2 + $0x50] sm:$0xff] %vm322, %v3908
      %3939 = vst.msk [vmem:[#allocation2 + $0x58] sm:$0xff] %vm322, %v3909
      %3940 = vst.msk [vmem:[#allocation2 + $0x60] sm:$0xff] %vm322, %v3910
      %3941 = vst.msk [vmem:[#allocation2 + $0x68] sm:$0xff] %vm322, %v3911
      %3942 = vst.msk [vmem:[#allocation2 + $0x70] sm:$0xff] %vm322, %v3912
      %3943 = vst.msk [vmem:[#allocation2 + $0x78] sm:$0xff] %vm322, %v3913
      %3944 = vst.msk [vmem:[#allocation2 + $0x80] sm:$0xff] %vm322, %v3914
      %3945 = vst.msk [vmem:[#allocation2 + $0x88] sm:$0xff] %vm322, %v3915
      %3946 = vst.msk [vmem:[#allocation2 + $0x90] sm:$0xff] %vm322, %v3916
      %3947 = vst.msk [vmem:[#allocation2 + $0x98] sm:$0xff] %vm322, %v3917
      %3948 = vst.msk [vmem:[#allocation2 + $0xa0] sm:$0xff] %vm322, %v3918
      %3949 = vst.msk [vmem:[#allocation2 + $0xa8] sm:$0xff] %vm322, %v3919
      %3950 = vst.msk [vmem:[#allocation2 + $0xb0] sm:$0xff] %vm322, %v3920
      %3951 = vst.msk [vmem:[#allocation2 + $0xb8] sm:$0xff] %vm322, %v3921
      %3952 = vst.msk [vmem:[#allocation2 + $0xc0] sm:$0xff] %vm322, %v3922
      %3953 = vst.msk [vmem:[#allocation2 + $0xc8] sm:$0xff] %vm322, %v3923
      %3954 = vst.msk [vmem:[#allocation2 + $0xd0] sm:$0xff] %vm322, %v3924
      %3955 = vst.msk [vmem:[#allocation2 + $0xd8] sm:$0xff] %vm322, %v3925
      %3956 = vst.msk [vmem:[#allocation2 + $0xe0] sm:$0xff] %vm322, %v3926
      %3957 = vst.msk [vmem:[#allocation2 + $0xe8] sm:$0xff] %vm322, %v3927
      %3958 = vst.msk [vmem:[#allocation2 + $0xf0] sm:$0xff] %vm322, %v3928
      %p3959 = scmp.eq.s32.totalorder %s22, 0
      // Predicated region
      $region45: #{tpu_custom_call.1} parent=43 // pred_check
        %p3960 = pneg %p3959
      $region46: #{tpu_custom_call.1} parent=43 // pred_check_branch
        %3962 = sbr.rel (%p3960) target = $region48
      $region47: #{tpu_custom_call.1} parent=43 // pred_region
        %3963 = vst.msk [vmem:[#allocation2 + $0x8] sm:$0xff] %vm322, 0.0
        %3964 = vst.msk [vmem:[#allocation2 + $0x10] sm:$0xff] %vm322, 0.0
        %3965 = vst.msk [vmem:[#allocation2 + $0x18] sm:$0xff] %vm322, 0.0
      $region48: #{tpu_custom_call.1} parent=43 // pred_fallthru
        _
      %p3966 = scmp.eq.s32.totalorder %s22, 1
      // Predicated region
      $region49: #{tpu_custom_call.1} parent=43 // pred_check
        %p3967 = pneg %p3966
      $region50: #{tpu_custom_call.1} parent=43 // pred_check_branch
        %3969 = sbr.rel (%p3967) target = $region52
      $region51: #{tpu_custom_call.1} parent=43 // pred_region
        %3970 = vst.msk [vmem:[#allocation2 + $0xe0] sm:$0xff] %vm322, 0.0
        %3971 = vst.msk [vmem:[#allocation2 + $0xe8] sm:$0xff] %vm322, 0.0
        %3972 = vst.msk [vmem:[#allocation2 + $0xf0] sm:$0xff] %vm322, 0.0
      $region52: #{tpu_custom_call.1} parent=43 // pred_fallthru
        _
      %v3973 = vld [vmem:[#allocation2 + $0x7] sm:$0xff]
      %v3974 = vld [vmem:[#allocation2 + $0xf] sm:$0xff]
      %v3975 = vld [vmem:[#allocation2 + $0x17] sm:$0xff]
      %v3976 = vld [vmem:[#allocation2 + $0x1f] sm:$0xff]
      %v3977 = vld [vmem:[#allocation2 + $0x27] sm:$0xff]
      %v3978 = vld [vmem:[#allocation2 + $0x2f] sm:$0xff]
      %v3979 = vld [vmem:[#allocation2 + $0x37] sm:$0xff]
      %v3980 = vld [vmem:[#allocation2 + $0x3f] sm:$0xff]
      %v3981 = vld [vmem:[#allocation2 + $0x47] sm:$0xff]
      %v3982 = vld [vmem:[#allocation2 + $0x4f] sm:$0xff]
      %v3983 = vld [vmem:[#allocation2 + $0x57] sm:$0xff]
      %v3984 = vld [vmem:[#allocation2 + $0x5f] sm:$0xff]
      %v3985 = vld [vmem:[#allocation2 + $0x67] sm:$0xff]
      %v3986 = vld [vmem:[#allocation2 + $0x6f] sm:$0xff]
      %v3987 = vld [vmem:[#allocation2 + $0x77] sm:$0xff]
      %v3988 = vld [vmem:[#allocation2 + $0x7f] sm:$0xff]
      %v3989 = vld [vmem:[#allocation2 + $0x87] sm:$0xff]
      %v3990 = vld [vmem:[#allocation2 + $0x8f] sm:$0xff]
      %v3991 = vld [vmem:[#allocation2 + $0x97] sm:$0xff]
      %v3992 = vld [vmem:[#allocation2 + $0x9f] sm:$0xff]
      %v3993 = vld [vmem:[#allocation2 + $0xa7] sm:$0xff]
      %v3994 = vld [vmem:[#allocation2 + $0xaf] sm:$0xff]
      %v3995 = vld [vmem:[#allocation2 + $0xb7] sm:$0xff]
      %v3996 = vld [vmem:[#allocation2 + $0xbf] sm:$0xff]
      %v3997 = vperm.slane %v397, 0
      %v3998 = vmul.f32 %v3973, %v3997
      %v3999 = vmul.f32 %v3974, %v3997
      %v4000 = vmul.f32 %v3975, %v3997
      %v4001 = vmul.f32 %v3976, %v3997
      %v4002 = vmul.f32 %v3977, %v3997
      %v4003 = vmul.f32 %v3978, %v3997
      %v4004 = vmul.f32 %v3979, %v3997
      %v4005 = vmul.f32 %v3980, %v3997
      %v4006 = vmul.f32 %v3981, %v3997
      %v4007 = vmul.f32 %v3982, %v3997
      %v4008 = vmul.f32 %v3983, %v3997
      %v4009 = vmul.f32 %v3984, %v3997
      %v4010 = vmul.f32 %v3985, %v3997
      %v4011 = vmul.f32 %v3986, %v3997
      %v4012 = vmul.f32 %v3987, %v3997
      %v4013 = vmul.f32 %v3988, %v3997
      %v4014 = vmul.f32 %v3989, %v3997
      %v4015 = vmul.f32 %v3990, %v3997
      %v4016 = vmul.f32 %v3991, %v3997
      %v4017 = vmul.f32 %v3992, %v3997
      %v4018 = vmul.f32 %v3993, %v3997
      %v4019 = vmul.f32 %v3994, %v3997
      %v4020 = vmul.f32 %v3995, %v3997
      %v4021 = vmul.f32 %v3996, %v3997
      %v4022 = vld [vmem:[#allocation2 + $0x8] sm:$0xff]
      %v4023 = vld [vmem:[#allocation2 + $0x10] sm:$0xff]
      %v4024 = vld [vmem:[#allocation2 + $0x18] sm:$0xff]
      %v4025 = vld [vmem:[#allocation2 + $0x20] sm:$0xff]
      %v4026 = vld [vmem:[#allocation2 + $0x28] sm:$0xff]
      %v4027 = vld [vmem:[#allocation2 + $0x30] sm:$0xff]
      %v4028 = vld [vmem:[#allocation2 + $0x38] sm:$0xff]
      %v4029 = vld [vmem:[#allocation2 + $0x40] sm:$0xff]
      %v4030 = vld [vmem:[#allocation2 + $0x48] sm:$0xff]
      %v4031 = vld [vmem:[#allocation2 + $0x50] sm:$0xff]
      %v4032 = vld [vmem:[#allocation2 + $0x58] sm:$0xff]
      %v4033 = vld [vmem:[#allocation2 + $0x60] sm:$0xff]
      %v4034 = vld [vmem:[#allocation2 + $0x68] sm:$0xff]
      %v4035 = vld [vmem:[#allocation2 + $0x70] sm:$0xff]
      %v4036 = vld [vmem:[#allocation2 + $0x78] sm:$0xff]
      %v4037 = vld [vmem:[#allocation2 + $0x80] sm:$0xff]
      %v4038 = vld [vmem:[#allocation2 + $0x88] sm:$0xff]
      %v4039 = vld [vmem:[#allocation2 + $0x90] sm:$0xff]
      %v4040 = vld [vmem:[#allocation2 + $0x98] sm:$0xff]
      %v4041 = vld [vmem:[#allocation2 + $0xa0] sm:$0xff]
      %v4042 = vld [vmem:[#allocation2 + $0xa8] sm:$0xff]
      %v4043 = vld [vmem:[#allocation2 + $0xb0] sm:$0xff]
      %v4044 = vld [vmem:[#allocation2 + $0xb8] sm:$0xff]
      %v4045 = vld [vmem:[#allocation2 + $0xc0] sm:$0xff]
      %v4046 = vperm.slane %v397, 1
      %v4047 = vmul.f32 %v4022, %v4046
      %v4048 = vmul.f32 %v4023, %v4046
      %v4049 = vmul.f32 %v4024, %v4046
      %v4050 = vmul.f32 %v4025, %v4046
      %v4051 = vmul.f32 %v4026, %v4046
      %v4052 = vmul.f32 %v4027, %v4046
      %v4053 = vmul.f32 %v4028, %v4046
      %v4054 = vmul.f32 %v4029, %v4046
      %v4055 = vmul.f32 %v4030, %v4046
      %v4056 = vmul.f32 %v4031, %v4046
      %v4057 = vmul.f32 %v4032, %v4046
      %v4058 = vmul.f32 %v4033, %v4046
      %v4059 = vmul.f32 %v4034, %v4046
      %v4060 = vmul.f32 %v4035, %v4046
      %v4061 = vmul.f32 %v4036, %v4046
      %v4062 = vmul.f32 %v4037, %v4046
      %v4063 = vmul.f32 %v4038, %v4046
      %v4064 = vmul.f32 %v4039, %v4046
      %v4065 = vmul.f32 %v4040, %v4046
      %v4066 = vmul.f32 %v4041, %v4046
      %v4067 = vmul.f32 %v4042, %v4046
      %v4068 = vmul.f32 %v4043, %v4046
      %v4069 = vmul.f32 %v4044, %v4046
      %v4070 = vmul.f32 %v4045, %v4046
      %v4071 = vadd.f32 %v3998, %v4047
      %v4072 = vadd.f32 %v3999, %v4048
      %v4073 = vadd.f32 %v4000, %v4049
      %v4074 = vadd.f32 %v4001, %v4050
      %v4075 = vadd.f32 %v4002, %v4051
      %v4076 = vadd.f32 %v4003, %v4052
      %v4077 = vadd.f32 %v4004, %v4053
      %v4078 = vadd.f32 %v4005, %v4054
      %v4079 = vadd.f32 %v4006, %v4055
      %v4080 = vadd.f32 %v4007, %v4056
      %v4081 = vadd.f32 %v4008, %v4057
      %v4082 = vadd.f32 %v4009, %v4058
      %v4083 = vadd.f32 %v4010, %v4059
      %v4084 = vadd.f32 %v4011, %v4060
      %v4085 = vadd.f32 %v4012, %v4061
      %v4086 = vadd.f32 %v4013, %v4062
      %v4087 = vadd.f32 %v4014, %v4063
      %v4088 = vadd.f32 %v4015, %v4064
      %v4089 = vadd.f32 %v4016, %v4065
      %v4090 = vadd.f32 %v4017, %v4066
      %v4091 = vadd.f32 %v4018, %v4067
      %v4092 = vadd.f32 %v4019, %v4068
      %v4093 = vadd.f32 %v4020, %v4069
      %v4094 = vadd.f32 %v4021, %v4070
      %v4095 = vld [vmem:[#allocation2 + $0x9] sm:$0xff]
      %v4096 = vld [vmem:[#allocation2 + $0x11] sm:$0xff]
      %v4097 = vld [vmem:[#allocation2 + $0x19] sm:$0xff]
      %v4098 = vld [vmem:[#allocation2 + $0x21] sm:$0xff]
      %v4099 = vld [vmem:[#allocation2 + $0x29] sm:$0xff]
      %v4100 = vld [vmem:[#allocation2 + $0x31] sm:$0xff]
      %v4101 = vld [vmem:[#allocation2 + $0x39] sm:$0xff]
      %v4102 = vld [vmem:[#allocation2 + $0x41] sm:$0xff]
      %v4103 = vld [vmem:[#allocation2 + $0x49] sm:$0xff]
      %v4104 = vld [vmem:[#allocation2 + $0x51] sm:$0xff]
      %v4105 = vld [vmem:[#allocation2 + $0x59] sm:$0xff]
      %v4106 = vld [vmem:[#allocation2 + $0x61] sm:$0xff]
      %v4107 = vld [vmem:[#allocation2 + $0x69] sm:$0xff]
      %v4108 = vld [vmem:[#allocation2 + $0x71] sm:$0xff]
      %v4109 = vld [vmem:[#allocation2 + $0x79] sm:$0xff]
      %v4110 = vld [vmem:[#allocation2 + $0x81] sm:$0xff]
      %v4111 = vld [vmem:[#allocation2 + $0x89] sm:$0xff]
      %v4112 = vld [vmem:[#allocation2 + $0x91] sm:$0xff]
      %v4113 = vld [vmem:[#allocation2 + $0x99] sm:$0xff]
      %v4114 = vld [vmem:[#allocation2 + $0xa1] sm:$0xff]
      %v4115 = vld [vmem:[#allocation2 + $0xa9] sm:$0xff]
      %v4116 = vld [vmem:[#allocation2 + $0xb1] sm:$0xff]
      %v4117 = vld [vmem:[#allocation2 + $0xb9] sm:$0xff]
      %v4118 = vld [vmem:[#allocation2 + $0xc1] sm:$0xff]
      %v4119 = vperm.slane %v397, 2
      %v4120 = vmul.f32 %v4095, %v4119
      %v4121 = vmul.f32 %v4096, %v4119
      %v4122 = vmul.f32 %v4097, %v4119
      %v4123 = vmul.f32 %v4098, %v4119
      %v4124 = vmul.f32 %v4099, %v4119
      %v4125 = vmul.f32 %v4100, %v4119
      %v4126 = vmul.f32 %v4101, %v4119
      %v4127 = vmul.f32 %v4102, %v4119
      %v4128 = vmul.f32 %v4103, %v4119
      %v4129 = vmul.f32 %v4104, %v4119
      %v4130 = vmul.f32 %v4105, %v4119
      %v4131 = vmul.f32 %v4106, %v4119
      %v4132 = vmul.f32 %v4107, %v4119
      %v4133 = vmul.f32 %v4108, %v4119
      %v4134 = vmul.f32 %v4109, %v4119
      %v4135 = vmul.f32 %v4110, %v4119
      %v4136 = vmul.f32 %v4111, %v4119
      %v4137 = vmul.f32 %v4112, %v4119
      %v4138 = vmul.f32 %v4113, %v4119
      %v4139 = vmul.f32 %v4114, %v4119
      %v4140 = vmul.f32 %v4115, %v4119
      %v4141 = vmul.f32 %v4116, %v4119
      %v4142 = vmul.f32 %v4117, %v4119
      %v4143 = vmul.f32 %v4118, %v4119
      %v4144 = vadd.f32 %v4071, %v4120
      %v4145 = vadd.f32 %v4072, %v4121
      %v4146 = vadd.f32 %v4073, %v4122
      %v4147 = vadd.f32 %v4074, %v4123
      %v4148 = vadd.f32 %v4075, %v4124
      %v4149 = vadd.f32 %v4076, %v4125
      %v4150 = vadd.f32 %v4077, %v4126
      %v4151 = vadd.f32 %v4078, %v4127
      %v4152 = vadd.f32 %v4079, %v4128
      %v4153 = vadd.f32 %v4080, %v4129
      %v4154 = vadd.f32 %v4081, %v4130
      %v4155 = vadd.f32 %v4082, %v4131
      %v4156 = vadd.f32 %v4083, %v4132
      %v4157 = vadd.f32 %v4084, %v4133
      %v4158 = vadd.f32 %v4085, %v4134
      %v4159 = vadd.f32 %v4086, %v4135
      %v4160 = vadd.f32 %v4087, %v4136
      %v4161 = vadd.f32 %v4088, %v4137
      %v4162 = vadd.f32 %v4089, %v4138
      %v4163 = vadd.f32 %v4090, %v4139
      %v4164 = vadd.f32 %v4091, %v4140
      %v4165 = vadd.f32 %v4092, %v4141
      %v4166 = vadd.f32 %v4093, %v4142
      %v4167 = vadd.f32 %v4094, %v4143
      %v4168 = vld [vmem:[#allocation2 + $0xc7] sm:$0xff]
      %v4169 = vld [vmem:[#allocation2 + $0xcf] sm:$0xff]
      %v4170 = vld [vmem:[#allocation2 + $0xd7] sm:$0xff]
      %v4171 = vperm.slane %v397, 3
      %v4172 = vmul.f32 %v3976, %v4171
      %v4173 = vmul.f32 %v3977, %v4171
      %v4174 = vmul.f32 %v3978, %v4171
      %v4175 = vmul.f32 %v3979, %v4171
      %v4176 = vmul.f32 %v3980, %v4171
      %v4177 = vmul.f32 %v3981, %v4171
      %v4178 = vmul.f32 %v3982, %v4171
      %v4179 = vmul.f32 %v3983, %v4171
      %v4180 = vmul.f32 %v3984, %v4171
      %v4181 = vmul.f32 %v3985, %v4171
      %v4182 = vmul.f32 %v3986, %v4171
      %v4183 = vmul.f32 %v3987, %v4171
      %v4184 = vmul.f32 %v3988, %v4171
      %v4185 = vmul.f32 %v3989, %v4171
      %v4186 = vmul.f32 %v3990, %v4171
      %v4187 = vmul.f32 %v3991, %v4171
      %v4188 = vmul.f32 %v3992, %v4171
      %v4189 = vmul.f32 %v3993, %v4171
      %v4190 = vmul.f32 %v3994, %v4171
      %v4191 = vmul.f32 %v3995, %v4171
      %v4192 = vmul.f32 %v3996, %v4171
      %v4193 = vmul.f32 %v4168, %v4171
      %v4194 = vmul.f32 %v4169, %v4171
      %v4195 = vmul.f32 %v4170, %v4171
      %v4196 = vadd.f32 %v4144, %v4172
      %v4197 = vadd.f32 %v4145, %v4173
      %v4198 = vadd.f32 %v4146, %v4174
      %v4199 = vadd.f32 %v4147, %v4175
      %v4200 = vadd.f32 %v4148, %v4176
      %v4201 = vadd.f32 %v4149, %v4177
      %v4202 = vadd.f32 %v4150, %v4178
      %v4203 = vadd.f32 %v4151, %v4179
      %v4204 = vadd.f32 %v4152, %v4180
      %v4205 = vadd.f32 %v4153, %v4181
      %v4206 = vadd.f32 %v4154, %v4182
      %v4207 = vadd.f32 %v4155, %v4183
      %v4208 = vadd.f32 %v4156, %v4184
      %v4209 = vadd.f32 %v4157, %v4185
      %v4210 = vadd.f32 %v4158, %v4186
      %v4211 = vadd.f32 %v4159, %v4187
      %v4212 = vadd.f32 %v4160, %v4188
      %v4213 = vadd.f32 %v4161, %v4189
      %v4214 = vadd.f32 %v4162, %v4190
      %v4215 = vadd.f32 %v4163, %v4191
      %v4216 = vadd.f32 %v4164, %v4192
      %v4217 = vadd.f32 %v4165, %v4193
      %v4218 = vadd.f32 %v4166, %v4194
      %v4219 = vadd.f32 %v4167, %v4195
      %v4220 = vld [vmem:[#allocation2 + $0xc8] sm:$0xff]
      %v4221 = vld [vmem:[#allocation2 + $0xd0] sm:$0xff]
      %v4222 = vld [vmem:[#allocation2 + $0xd8] sm:$0xff]
      %v4223 = vperm.slane %v397, 4
      %v4224 = vmul.f32 %v4025, %v4223
      %v4225 = vmul.f32 %v4026, %v4223
      %v4226 = vmul.f32 %v4027, %v4223
      %v4227 = vmul.f32 %v4028, %v4223
      %v4228 = vmul.f32 %v4029, %v4223
      %v4229 = vmul.f32 %v4030, %v4223
      %v4230 = vmul.f32 %v4031, %v4223
      %v4231 = vmul.f32 %v4032, %v4223
      %v4232 = vmul.f32 %v4033, %v4223
      %v4233 = vmul.f32 %v4034, %v4223
      %v4234 = vmul.f32 %v4035, %v4223
      %v4235 = vmul.f32 %v4036, %v4223
      %v4236 = vmul.f32 %v4037, %v4223
      %v4237 = vmul.f32 %v4038, %v4223
      %v4238 = vmul.f32 %v4039, %v4223
      %v4239 = vmul.f32 %v4040, %v4223
      %v4240 = vmul.f32 %v4041, %v4223
      %v4241 = vmul.f32 %v4042, %v4223
      %v4242 = vmul.f32 %v4043, %v4223
      %v4243 = vmul.f32 %v4044, %v4223
      %v4244 = vmul.f32 %v4045, %v4223
      %v4245 = vmul.f32 %v4220, %v4223
      %v4246 = vmul.f32 %v4221, %v4223
      %v4247 = vmul.f32 %v4222, %v4223
      %v4248 = vadd.f32 %v4196, %v4224
      %v4249 = vadd.f32 %v4197, %v4225
      %v4250 = vadd.f32 %v4198, %v4226
      %v4251 = vadd.f32 %v4199, %v4227
      %v4252 = vadd.f32 %v4200, %v4228
      %v4253 = vadd.f32 %v4201, %v4229
      %v4254 = vadd.f32 %v4202, %v4230
      %v4255 = vadd.f32 %v4203, %v4231
      %v4256 = vadd.f32 %v4204, %v4232
      %v4257 = vadd.f32 %v4205, %v4233
      %v4258 = vadd.f32 %v4206, %v4234
      %v4259 = vadd.f32 %v4207, %v4235
      %v4260 = vadd.f32 %v4208, %v4236
      %v4261 = vadd.f32 %v4209, %v4237
      %v4262 = vadd.f32 %v4210, %v4238
      %v4263 = vadd.f32 %v4211, %v4239
      %v4264 = vadd.f32 %v4212, %v4240
      %v4265 = vadd.f32 %v4213, %v4241
      %v4266 = vadd.f32 %v4214, %v4242
      %v4267 = vadd.f32 %v4215, %v4243
      %v4268 = vadd.f32 %v4216, %v4244
      %v4269 = vadd.f32 %v4217, %v4245
      %v4270 = vadd.f32 %v4218, %v4246
      %v4271 = vadd.f32 %v4219, %v4247
      %v4272 = vld [vmem:[#allocation2 + $0xc9] sm:$0xff]
      %v4273 = vld [vmem:[#allocation2 + $0xd1] sm:$0xff]
      %v4274 = vld [vmem:[#allocation2 + $0xd9] sm:$0xff]
      %v4275 = vperm.slane %v397, 5
      %v4276 = vmul.f32 %v4098, %v4275
      %v4277 = vmul.f32 %v4099, %v4275
      %v4278 = vmul.f32 %v4100, %v4275
      %v4279 = vmul.f32 %v4101, %v4275
      %v4280 = vmul.f32 %v4102, %v4275
      %v4281 = vmul.f32 %v4103, %v4275
      %v4282 = vmul.f32 %v4104, %v4275
      %v4283 = vmul.f32 %v4105, %v4275
      %v4284 = vmul.f32 %v4106, %v4275
      %v4285 = vmul.f32 %v4107, %v4275
      %v4286 = vmul.f32 %v4108, %v4275
      %v4287 = vmul.f32 %v4109, %v4275
      %v4288 = vmul.f32 %v4110, %v4275
      %v4289 = vmul.f32 %v4111, %v4275
      %v4290 = vmul.f32 %v4112, %v4275
      %v4291 = vmul.f32 %v4113, %v4275
      %v4292 = vmul.f32 %v4114, %v4275
      %v4293 = vmul.f32 %v4115, %v4275
      %v4294 = vmul.f32 %v4116, %v4275
      %v4295 = vmul.f32 %v4117, %v4275
      %v4296 = vmul.f32 %v4118, %v4275
      %v4297 = vmul.f32 %v4272, %v4275
      %v4298 = vmul.f32 %v4273, %v4275
      %v4299 = vmul.f32 %v4274, %v4275
      %v4300 = vadd.f32 %v4248, %v4276
      %v4301 = vadd.f32 %v4249, %v4277
      %v4302 = vadd.f32 %v4250, %v4278
      %v4303 = vadd.f32 %v4251, %v4279
      %v4304 = vadd.f32 %v4252, %v4280
      %v4305 = vadd.f32 %v4253, %v4281
      %v4306 = vadd.f32 %v4254, %v4282
      %v4307 = vadd.f32 %v4255, %v4283
      %v4308 = vadd.f32 %v4256, %v4284
      %v4309 = vadd.f32 %v4257, %v4285
      %v4310 = vadd.f32 %v4258, %v4286
      %v4311 = vadd.f32 %v4259, %v4287
      %v4312 = vadd.f32 %v4260, %v4288
      %v4313 = vadd.f32 %v4261, %v4289
      %v4314 = vadd.f32 %v4262, %v4290
      %v4315 = vadd.f32 %v4263, %v4291
      %v4316 = vadd.f32 %v4264, %v4292
      %v4317 = vadd.f32 %v4265, %v4293
      %v4318 = vadd.f32 %v4266, %v4294
      %v4319 = vadd.f32 %v4267, %v4295
      %v4320 = vadd.f32 %v4268, %v4296
      %v4321 = vadd.f32 %v4269, %v4297
      %v4322 = vadd.f32 %v4270, %v4298
      %v4323 = vadd.f32 %v4271, %v4299
      %v4324 = vld [vmem:[#allocation2 + $0xdf] sm:$0xff]
      %v4325 = vld [vmem:[#allocation2 + $0xe7] sm:$0xff]
      %v4326 = vld [vmem:[#allocation2 + $0xef] sm:$0xff]
      %v4327 = vperm.slane %v397, 6
      %v4328 = vmul.f32 %v3979, %v4327
      %v4329 = vmul.f32 %v3980, %v4327
      %v4330 = vmul.f32 %v3981, %v4327
      %v4331 = vmul.f32 %v3982, %v4327
      %v4332 = vmul.f32 %v3983, %v4327
      %v4333 = vmul.f32 %v3984, %v4327
      %v4334 = vmul.f32 %v3985, %v4327
      %v4335 = vmul.f32 %v3986, %v4327
      %v4336 = vmul.f32 %v3987, %v4327
      %v4337 = vmul.f32 %v3988, %v4327
      %v4338 = vmul.f32 %v3989, %v4327
      %v4339 = vmul.f32 %v3990, %v4327
      %v4340 = vmul.f32 %v3991, %v4327
      %v4341 = vmul.f32 %v3992, %v4327
      %v4342 = vmul.f32 %v3993, %v4327
      %v4343 = vmul.f32 %v3994, %v4327
      %v4344 = vmul.f32 %v3995, %v4327
      %v4345 = vmul.f32 %v3996, %v4327
      %v4346 = vmul.f32 %v4168, %v4327
      %v4347 = vmul.f32 %v4169, %v4327
      %v4348 = vmul.f32 %v4170, %v4327
      %v4349 = vmul.f32 %v4324, %v4327
      %v4350 = vmul.f32 %v4325, %v4327
      %v4351 = vmul.f32 %v4326, %v4327
      %v4352 = vadd.f32 %v4300, %v4328
      %v4353 = vadd.f32 %v4301, %v4329
      %v4354 = vadd.f32 %v4302, %v4330
      %v4355 = vadd.f32 %v4303, %v4331
      %v4356 = vadd.f32 %v4304, %v4332
      %v4357 = vadd.f32 %v4305, %v4333
      %v4358 = vadd.f32 %v4306, %v4334
      %v4359 = vadd.f32 %v4307, %v4335
      %v4360 = vadd.f32 %v4308, %v4336
      %v4361 = vadd.f32 %v4309, %v4337
      %v4362 = vadd.f32 %v4310, %v4338
      %v4363 = vadd.f32 %v4311, %v4339
      %v4364 = vadd.f32 %v4312, %v4340
      %v4365 = vadd.f32 %v4313, %v4341
      %v4366 = vadd.f32 %v4314, %v4342
      %v4367 = vadd.f32 %v4315, %v4343
      %v4368 = vadd.f32 %v4316, %v4344
      %v4369 = vadd.f32 %v4317, %v4345
      %v4370 = vadd.f32 %v4318, %v4346
      %v4371 = vadd.f32 %v4319, %v4347
      %v4372 = vadd.f32 %v4320, %v4348
      %v4373 = vadd.f32 %v4321, %v4349
      %v4374 = vadd.f32 %v4322, %v4350
      %v4375 = vadd.f32 %v4323, %v4351
      %v4376 = vld [vmem:[#allocation2 + $0xe0] sm:$0xff]
      %v4377 = vld [vmem:[#allocation2 + $0xe8] sm:$0xff]
      %v4378 = vld [vmem:[#allocation2 + $0xf0] sm:$0xff]
      %v4379 = vperm.slane %v397, 7
      %v4380 = vmul.f32 %v4028, %v4379
      %v4381 = vmul.f32 %v4029, %v4379
      %v4382 = vmul.f32 %v4030, %v4379
      %v4383 = vmul.f32 %v4031, %v4379
      %v4384 = vmul.f32 %v4032, %v4379
      %v4385 = vmul.f32 %v4033, %v4379
      %v4386 = vmul.f32 %v4034, %v4379
      %v4387 = vmul.f32 %v4035, %v4379
      %v4388 = vmul.f32 %v4036, %v4379
      %v4389 = vmul.f32 %v4037, %v4379
      %v4390 = vmul.f32 %v4038, %v4379
      %v4391 = vmul.f32 %v4039, %v4379
      %v4392 = vmul.f32 %v4040, %v4379
      %v4393 = vmul.f32 %v4041, %v4379
      %v4394 = vmul.f32 %v4042, %v4379
      %v4395 = vmul.f32 %v4043, %v4379
      %v4396 = vmul.f32 %v4044, %v4379
      %v4397 = vmul.f32 %v4045, %v4379
      %v4398 = vmul.f32 %v4220, %v4379
      %v4399 = vmul.f32 %v4221, %v4379
      %v4400 = vmul.f32 %v4222, %v4379
      %v4401 = vmul.f32 %v4376, %v4379
      %v4402 = vmul.f32 %v4377, %v4379
      %v4403 = vmul.f32 %v4378, %v4379
      %v4404 = vadd.f32 %v4352, %v4380
      %v4405 = vadd.f32 %v4353, %v4381
      %v4406 = vadd.f32 %v4354, %v4382
      %v4407 = vadd.f32 %v4355, %v4383
      %v4408 = vadd.f32 %v4356, %v4384
      %v4409 = vadd.f32 %v4357, %v4385
      %v4410 = vadd.f32 %v4358, %v4386
      %v4411 = vadd.f32 %v4359, %v4387
      %v4412 = vadd.f32 %v4360, %v4388
      %v4413 = vadd.f32 %v4361, %v4389
      %v4414 = vadd.f32 %v4362, %v4390
      %v4415 = vadd.f32 %v4363, %v4391
      %v4416 = vadd.f32 %v4364, %v4392
      %v4417 = vadd.f32 %v4365, %v4393
      %v4418 = vadd.f32 %v4366, %v4394
      %v4419 = vadd.f32 %v4367, %v4395
      %v4420 = vadd.f32 %v4368, %v4396
      %v4421 = vadd.f32 %v4369, %v4397
      %v4422 = vadd.f32 %v4370, %v4398
      %v4423 = vadd.f32 %v4371, %v4399
      %v4424 = vadd.f32 %v4372, %v4400
      %v4425 = vadd.f32 %v4373, %v4401
      %v4426 = vadd.f32 %v4374, %v4402
      %v4427 = vadd.f32 %v4375, %v4403
      %v4428 = vld [vmem:[#allocation2 + $0xe1] sm:$0xff]
      %v4429 = vld [vmem:[#allocation2 + $0xe9] sm:$0xff]
      %v4430 = vld [vmem:[#allocation2 + $0xf1] sm:$0xff]
      %v4431 = vperm.slane %v398, 0
      %v4432 = vmul.f32 %v4101, %v4431
      %v4433 = vmul.f32 %v4102, %v4431
      %v4434 = vmul.f32 %v4103, %v4431
      %v4435 = vmul.f32 %v4104, %v4431
      %v4436 = vmul.f32 %v4105, %v4431
      %v4437 = vmul.f32 %v4106, %v4431
      %v4438 = vmul.f32 %v4107, %v4431
      %v4439 = vmul.f32 %v4108, %v4431
      %v4440 = vmul.f32 %v4109, %v4431
      %v4441 = vmul.f32 %v4110, %v4431
      %v4442 = vmul.f32 %v4111, %v4431
      %v4443 = vmul.f32 %v4112, %v4431
      %v4444 = vmul.f32 %v4113, %v4431
      %v4445 = vmul.f32 %v4114, %v4431
      %v4446 = vmul.f32 %v4115, %v4431
      %v4447 = vmul.f32 %v4116, %v4431
      %v4448 = vmul.f32 %v4117, %v4431
      %v4449 = vmul.f32 %v4118, %v4431
      %v4450 = vmul.f32 %v4272, %v4431
      %v4451 = vmul.f32 %v4273, %v4431
      %v4452 = vmul.f32 %v4274, %v4431
      %v4453 = vmul.f32 %v4428, %v4431
      %v4454 = vmul.f32 %v4429, %v4431
      %v4455 = vmul.f32 %v4430, %v4431
      %v4456 = vadd.f32 %v4404, %v4432
      %v4457 = vadd.f32 %v4405, %v4433
      %v4458 = vadd.f32 %v4406, %v4434
      %v4459 = vadd.f32 %v4407, %v4435
      %v4460 = vadd.f32 %v4408, %v4436
      %v4461 = vadd.f32 %v4409, %v4437
      %v4462 = vadd.f32 %v4410, %v4438
      %v4463 = vadd.f32 %v4411, %v4439
      %v4464 = vadd.f32 %v4412, %v4440
      %v4465 = vadd.f32 %v4413, %v4441
      %v4466 = vadd.f32 %v4414, %v4442
      %v4467 = vadd.f32 %v4415, %v4443
      %v4468 = vadd.f32 %v4416, %v4444
      %v4469 = vadd.f32 %v4417, %v4445
      %v4470 = vadd.f32 %v4418, %v4446
      %v4471 = vadd.f32 %v4419, %v4447
      %v4472 = vadd.f32 %v4420, %v4448
      %v4473 = vadd.f32 %v4421, %v4449
      %v4474 = vadd.f32 %v4422, %v4450
      %v4475 = vadd.f32 %v4423, %v4451
      %v4476 = vadd.f32 %v4424, %v4452
      %v4477 = vadd.f32 %v4425, %v4453
      %v4478 = vadd.f32 %v4426, %v4454
      %v4479 = vadd.f32 %v4427, %v4455
      %v4480 = vperm.slane %v396, 1
      %v4481 = vadd.f32 %v4456, %v4480
      %v4482 = vadd.f32 %v4457, %v4480
      %v4483 = vadd.f32 %v4458, %v4480
      %v4484 = vadd.f32 %v4459, %v4480
      %v4485 = vadd.f32 %v4460, %v4480
      %v4486 = vadd.f32 %v4461, %v4480
      %v4487 = vadd.f32 %v4462, %v4480
      %v4488 = vadd.f32 %v4463, %v4480
      %v4489 = vadd.f32 %v4464, %v4480
      %v4490 = vadd.f32 %v4465, %v4480
      %v4491 = vadd.f32 %v4466, %v4480
      %v4492 = vadd.f32 %v4467, %v4480
      %v4493 = vadd.f32 %v4468, %v4480
      %v4494 = vadd.f32 %v4469, %v4480
      %v4495 = vadd.f32 %v4470, %v4480
      %v4496 = vadd.f32 %v4471, %v4480
      %v4497 = vadd.f32 %v4472, %v4480
      %v4498 = vadd.f32 %v4473, %v4480
      %v4499 = vadd.f32 %v4474, %v4480
      %v4500 = vadd.f32 %v4475, %v4480
      %v4501 = vadd.f32 %v4476, %v4480
      %v4502 = vadd.f32 %v4477, %v4480
      %v4503 = vadd.f32 %v4478, %v4480
      %v4504 = vadd.f32 %v4479, %v4480
      %v4505 = vmax.f32 %v4481, 0.0
      %v4506 = vmax.f32 %v4482, 0.0
      %v4507 = vmax.f32 %v4483, 0.0
      %v4508 = vmax.f32 %v4484, 0.0
      %v4509 = vmax.f32 %v4485, 0.0
      %v4510 = vmax.f32 %v4486, 0.0
      %v4511 = vmax.f32 %v4487, 0.0
      %v4512 = vmax.f32 %v4488, 0.0
      %v4513 = vmax.f32 %v4489, 0.0
      %v4514 = vmax.f32 %v4490, 0.0
      %v4515 = vmax.f32 %v4491, 0.0
      %v4516 = vmax.f32 %v4492, 0.0
      %v4517 = vmax.f32 %v4493, 0.0
      %v4518 = vmax.f32 %v4494, 0.0
      %v4519 = vmax.f32 %v4495, 0.0
      %v4520 = vmax.f32 %v4496, 0.0
      %v4521 = vmax.f32 %v4497, 0.0
      %v4522 = vmax.f32 %v4498, 0.0
      %v4523 = vmax.f32 %v4499, 0.0
      %v4524 = vmax.f32 %v4500, 0.0
      %v4525 = vmax.f32 %v4501, 0.0
      %v4526 = vmax.f32 %v4502, 0.0
      %v4527 = vmax.f32 %v4503, 0.0
      %v4528 = vmax.f32 %v4504, 0.0
      %v4529 = vld [vmem:[%s4] sm:$0xf]
      %v4530 = vperm.slane %v396, 2
      %v4532 = vsel %vm322, %v4505, 0
      %v4535 = vsel %vm322, %v4506, 0
      %v4538 = vsel %vm322, %v4507, 0
      %v4541 = vsel %vm322, %v4508, 0
      %v4544 = vsel %vm322, %v4509, 0
      %v4547 = vsel %vm322, %v4510, 0
      %v4550 = vsel %vm322, %v4511, 0
      %v4553 = vsel %vm322, %v4512, 0
      %v4556 = vsel %vm322, %v4513, 0
      %v4559 = vsel %vm322, %v4514, 0
      %v4562 = vsel %vm322, %v4515, 0
      %v4565 = vsel %vm322, %v4516, 0
      %v4568 = vsel %vm322, %v4517, 0
      %v4571 = vsel %vm322, %v4518, 0
      %v4574 = vsel %vm322, %v4519, 0
      %v4577 = vsel %vm322, %v4520, 0
      %v4580 = vsel %vm322, %v4521, 0
      %v4583 = vsel %vm322, %v4522, 0
      %v4586 = vsel %vm322, %v4523, 0
      %v4589 = vsel %vm322, %v4524, 0
      %v4592 = vsel %vm322, %v4525, 0
      %v4595 = vsel %vm322, %v4526, 0
      %v4598 = vsel %vm322, %v4527, 0
      %v4601 = vsel %vm322, %v4528, 0
      %v4604 = vsel %vm552, %v4529, 0
      %4606 = vmatpush.msra.mxu0 0.0
      %4607 = vmatpush.msra.mxu0 0.0
      %4608 = vmatpush.msra.mxu0 0.0
      %4609 = vmatpush.msra.mxu0 0.0
      %4610 = vmatpush.msra.mxu0 0.0
      %4611 = vmatpush.msra.mxu0 0.0
      %4612 = vmatpush.msra.mxu0 0.0
      %4613 = vmatpush.msra.mxu0 0.0
      %4614 = vmatpush.msra.mxu0 0.0
      %4615 = vmatpush.msra.mxu0 0.0
      %4616 = vmatpush.msra.mxu0 0.0
      %4617 = vmatpush.msra.mxu0 0.0
      %4618 = vmatpush.msra.mxu0 0.0
      %4619 = vmatpush.msra.mxu0 0.0
      %4620 = vmatpush.msra.mxu0 0.0
      %4621 = vmatpush.msra.mxu0 %v4604
      %4622 = vmatmul.f32.gmra.mxu0 %v4532
      %v4623 = vpop.f32.mrf.mxu0
      %v4624 = vadd.f32 %v4530, %v4623
      %4625 = vmatmul.f32.gmra.mxu0 %v4535
      %v4626 = vpop.f32.mrf.mxu0
      %v4627 = vadd.f32 %v4530, %v4626
      %4628 = vmatmul.f32.gmra.mxu0 %v4538
      %v4629 = vpop.f32.mrf.mxu0
      %v4630 = vadd.f32 %v4530, %v4629
      %4631 = vmatmul.f32.gmra.mxu0 %v4541
      %v4632 = vpop.f32.mrf.mxu0
      %v4633 = vadd.f32 %v4530, %v4632
      %4634 = vmatmul.f32.gmra.mxu0 %v4544
      %v4635 = vpop.f32.mrf.mxu0
      %v4636 = vadd.f32 %v4530, %v4635
      %4637 = vmatmul.f32.gmra.mxu0 %v4547
      %v4638 = vpop.f32.mrf.mxu0
      %v4639 = vadd.f32 %v4530, %v4638
      %4640 = vmatmul.f32.gmra.mxu0 %v4550
      %v4641 = vpop.f32.mrf.mxu0
      %v4642 = vadd.f32 %v4530, %v4641
      %4643 = vmatmul.f32.gmra.mxu0 %v4553
      %v4644 = vpop.f32.mrf.mxu0
      %v4645 = vadd.f32 %v4530, %v4644
      %4646 = vmatmul.f32.gmra.mxu0 %v4556
      %v4647 = vpop.f32.mrf.mxu0
      %v4648 = vadd.f32 %v4530, %v4647
      %4649 = vmatmul.f32.gmra.mxu0 %v4559
      %v4650 = vpop.f32.mrf.mxu0
      %v4651 = vadd.f32 %v4530, %v4650
      %4652 = vmatmul.f32.gmra.mxu0 %v4562
      %v4653 = vpop.f32.mrf.mxu0
      %v4654 = vadd.f32 %v4530, %v4653
      %4655 = vmatmul.f32.gmra.mxu0 %v4565
      %v4656 = vpop.f32.mrf.mxu0
      %v4657 = vadd.f32 %v4530, %v4656
      %4658 = vmatmul.f32.gmra.mxu0 %v4568
      %v4659 = vpop.f32.mrf.mxu0
      %v4660 = vadd.f32 %v4530, %v4659
      %4661 = vmatmul.f32.gmra.mxu0 %v4571
      %v4662 = vpop.f32.mrf.mxu0
      %v4663 = vadd.f32 %v4530, %v4662
      %4664 = vmatmul.f32.gmra.mxu0 %v4574
      %v4665 = vpop.f32.mrf.mxu0
      %v4666 = vadd.f32 %v4530, %v4665
      %4667 = vmatmul.f32.gmra.mxu0 %v4577
      %v4668 = vpop.f32.mrf.mxu0
      %v4669 = vadd.f32 %v4530, %v4668
      %4670 = vmatmul.f32.gmra.mxu0 %v4580
      %v4671 = vpop.f32.mrf.mxu0
      %v4672 = vadd.f32 %v4530, %v4671
      %4673 = vmatmul.f32.gmra.mxu0 %v4583
      %v4674 = vpop.f32.mrf.mxu0
      %v4675 = vadd.f32 %v4530, %v4674
      %4676 = vmatmul.f32.gmra.mxu0 %v4586
      %v4677 = vpop.f32.mrf.mxu0
      %v4678 = vadd.f32 %v4530, %v4677
      %4679 = vmatmul.f32.gmra.mxu0 %v4589
      %v4680 = vpop.f32.mrf.mxu0
      %v4681 = vadd.f32 %v4530, %v4680
      %4682 = vmatmul.f32.gmra.mxu0 %v4592
      %v4683 = vpop.f32.mrf.mxu0
      %v4684 = vadd.f32 %v4530, %v4683
      %4685 = vmatmul.f32.gmra.mxu0 %v4595
      %v4686 = vpop.f32.mrf.mxu0
      %v4687 = vadd.f32 %v4530, %v4686
      %4688 = vmatmul.f32.gmra.mxu0 %v4598
      %v4689 = vpop.f32.mrf.mxu0
      %v4690 = vadd.f32 %v4530, %v4689
      %4691 = vmatmul.f32.gmra.mxu0 %v4601
      %v4692 = vpop.f32.mrf.mxu0
      %v4693 = vadd.f32 %v4530, %v4692
      %4694 = vdwg.mxu0
      %v4695 = vld [vmem:[%s303] sm:$0xff]
      %v4696 = vld [vmem:[%s303 + $0x8] sm:$0xff]
      %v4697 = vld [vmem:[%s303 + $0x10] sm:$0xff]
      %v4698 = vld [vmem:[%s303 + $0x18] sm:$0xff]
      %v4699 = vld [vmem:[%s303 + $0x20] sm:$0xff]
      %v4700 = vld [vmem:[%s303 + $0x28] sm:$0xff]
      %v4701 = vld [vmem:[%s303 + $0x30] sm:$0xff]
      %v4702 = vld [vmem:[%s303 + $0x38] sm:$0xff]
      %v4703 = vld [vmem:[%s303 + $0x40] sm:$0xff]
      %v4704 = vld [vmem:[%s303 + $0x48] sm:$0xff]
      %v4705 = vld [vmem:[%s303 + $0x50] sm:$0xff]
      %v4706 = vld [vmem:[%s303 + $0x58] sm:$0xff]
      %v4707 = vld [vmem:[%s303 + $0x60] sm:$0xff]
      %v4708 = vld [vmem:[%s303 + $0x68] sm:$0xff]
      %v4709 = vld [vmem:[%s303 + $0x70] sm:$0xff]
      %v4710 = vld [vmem:[%s303 + $0x78] sm:$0xff]
      %v4711 = vld [vmem:[%s303 + $0x80] sm:$0xff]
      %v4712 = vld [vmem:[%s303 + $0x88] sm:$0xff]
      %v4713 = vld [vmem:[%s303 + $0x90] sm:$0xff]
      %v4714 = vld [vmem:[%s303 + $0x98] sm:$0xff]
      %v4715 = vld [vmem:[%s303 + $0xa0] sm:$0xff]
      %v4716 = vld [vmem:[%s303 + $0xa8] sm:$0xff]
      %v4717 = vld [vmem:[%s303 + $0xb0] sm:$0xff]
      %v4718 = vld [vmem:[%s303 + $0xb8] sm:$0xff]
      %v4719 = vadd.f32 %v4624, %v4695
      %v4720 = vadd.f32 %v4627, %v4696
      %v4721 = vadd.f32 %v4630, %v4697
      %v4722 = vadd.f32 %v4633, %v4698
      %v4723 = vadd.f32 %v4636, %v4699
      %v4724 = vadd.f32 %v4639, %v4700
      %v4725 = vadd.f32 %v4642, %v4701
      %v4726 = vadd.f32 %v4645, %v4702
      %v4727 = vadd.f32 %v4648, %v4703
      %v4728 = vadd.f32 %v4651, %v4704
      %v4729 = vadd.f32 %v4654, %v4705
      %v4730 = vadd.f32 %v4657, %v4706
      %v4731 = vadd.f32 %v4660, %v4707
      %v4732 = vadd.f32 %v4663, %v4708
      %v4733 = vadd.f32 %v4666, %v4709
      %v4734 = vadd.f32 %v4669, %v4710
      %v4735 = vadd.f32 %v4672, %v4711
      %v4736 = vadd.f32 %v4675, %v4712
      %v4737 = vadd.f32 %v4678, %v4713
      %v4738 = vadd.f32 %v4681, %v4714
      %v4739 = vadd.f32 %v4684, %v4715
      %v4740 = vadd.f32 %v4687, %v4716
      %v4741 = vadd.f32 %v4690, %v4717
      %v4742 = vadd.f32 %v4693, %v4718
      %v4743 = vmax.f32 %v4719, 0.0
      %v4744 = vmax.f32 %v4720, 0.0
      %v4745 = vmax.f32 %v4721, 0.0
      %v4746 = vmax.f32 %v4722, 0.0
      %v4747 = vmax.f32 %v4723, 0.0
      %v4748 = vmax.f32 %v4724, 0.0
      %v4749 = vmax.f32 %v4725, 0.0
      %v4750 = vmax.f32 %v4726, 0.0
      %v4751 = vmax.f32 %v4727, 0.0
      %v4752 = vmax.f32 %v4728, 0.0
      %v4753 = vmax.f32 %v4729, 0.0
      %v4754 = vmax.f32 %v4730, 0.0
      %v4755 = vmax.f32 %v4731, 0.0
      %v4756 = vmax.f32 %v4732, 0.0
      %v4757 = vmax.f32 %v4733, 0.0
      %v4758 = vmax.f32 %v4734, 0.0
      %v4759 = vmax.f32 %v4735, 0.0
      %v4760 = vmax.f32 %v4736, 0.0
      %v4761 = vmax.f32 %v4737, 0.0
      %v4762 = vmax.f32 %v4738, 0.0
      %v4763 = vmax.f32 %v4739, 0.0
      %v4764 = vmax.f32 %v4740, 0.0
      %v4765 = vmax.f32 %v4741, 0.0
      %v4766 = vmax.f32 %v4742, 0.0
      %4767 = vst.msk [vmem:[%s321] sm:$0xff] %vm322, %v4743
      %4768 = vst.msk [vmem:[%s321 + $0x8] sm:$0xff] %vm322, %v4744
      %4769 = vst.msk [vmem:[%s321 + $0x10] sm:$0xff] %vm322, %v4745
      %4770 = vst.msk [vmem:[%s321 + $0x18] sm:$0xff] %vm322, %v4746
      %4771 = vst.msk [vmem:[%s321 + $0x20] sm:$0xff] %vm322, %v4747
      %4772 = vst.msk [vmem:[%s321 + $0x28] sm:$0xff] %vm322, %v4748
      %4773 = vst.msk [vmem:[%s321 + $0x30] sm:$0xff] %vm322, %v4749
      %4774 = vst.msk [vmem:[%s321 + $0x38] sm:$0xff] %vm322, %v4750
      %4775 = vst.msk [vmem:[%s321 + $0x40] sm:$0xff] %vm322, %v4751
      %4776 = vst.msk [vmem:[%s321 + $0x48] sm:$0xff] %vm322, %v4752
      %4777 = vst.msk [vmem:[%s321 + $0x50] sm:$0xff] %vm322, %v4753
      %4778 = vst.msk [vmem:[%s321 + $0x58] sm:$0xff] %vm322, %v4754
      %4779 = vst.msk [vmem:[%s321 + $0x60] sm:$0xff] %vm322, %v4755
      %4780 = vst.msk [vmem:[%s321 + $0x68] sm:$0xff] %vm322, %v4756
      %4781 = vst.msk [vmem:[%s321 + $0x70] sm:$0xff] %vm322, %v4757
      %4782 = vst.msk [vmem:[%s321 + $0x78] sm:$0xff] %vm322, %v4758
      %4783 = vst.msk [vmem:[%s321 + $0x80] sm:$0xff] %vm322, %v4759
      %4784 = vst.msk [vmem:[%s321 + $0x88] sm:$0xff] %vm322, %v4760
      %4785 = vst.msk [vmem:[%s321 + $0x90] sm:$0xff] %vm322, %v4761
      %4786 = vst.msk [vmem:[%s321 + $0x98] sm:$0xff] %vm322, %v4762
      %4787 = vst.msk [vmem:[%s321 + $0xa0] sm:$0xff] %vm322, %v4763
      %4788 = vst.msk [vmem:[%s321 + $0xa8] sm:$0xff] %vm322, %v4764
      %4789 = vst.msk [vmem:[%s321 + $0xb0] sm:$0xff] %vm322, %v4765
      %4790 = vst.msk [vmem:[%s321 + $0xb8] sm:$0xff] %vm322, %v4766
      %p4791 = scmp.lt.s32.totalorder %s21, 1
      %s4792 = scalar_select %p4791, %s21, 1
      %p4793 = scmp.lt.s32.totalorder %s22, 1
      %s4794 = scalar_select %p4793, %s22, 1
      %s4795 = smul.addr %s4794, 24
      %s4796 = smul.addr %s4792, 48
      %s4797 = sadd.s32 %s4795, %s4796
      %s4798 = smul.addr %s4797, 8
      %s4799 = scalar_lea.vmem %s6, %s4798
      // Predicated region
      $region53: #{tpu_custom_call.1} parent=43 // pred_check
        %p4800 = pneg %p189
      $region54: #{tpu_custom_call.1} parent=43 // pred_check_branch
        %4802 = sbr.rel (%p4800) target = $region56
      $region55: #{tpu_custom_call.1} parent=43 // pred_region
        _
      $region56: #{tpu_custom_call.1} parent=43 // pred_fallthru
        _
    $region44: #{tpu_custom_call.1} parent=5 // pred_fallthru
      _
    %p4803 = scmp.le.s32.totalorder 2, %s12
    // Predicated region
    $region57: #{tpu_custom_call.1} parent=5 // pred_check
      %p4804 = pneg %p4803
    $region58: #{tpu_custom_call.1} parent=5 // pred_check_branch
      %4806 = sbr.rel (%p4804) target = $region60
    $region59: #{tpu_custom_call.1} parent=5 // pred_region
      %s4807 = ssub.s32 %s12, 2
      // Predicated region
      $region61: #{tpu_custom_call.1} parent=59 // pred_check
        %p4808 = pneg %p195
      $region62: #{tpu_custom_call.1} parent=59 // pred_check_branch
        %4810 = sbr.rel (%p4808) target = $region64
      $region63: #{tpu_custom_call.1} parent=59 // pred_region
        %p4811 = scmp.lt.s32.totalorder %s23, 1
        %s4812 = scalar_select %p4811, %s23, 1
        %p4813 = scmp.lt.s32.totalorder %s24, 1
        %s4814 = scalar_select %p4813, %s24, 1
        %s4815 = smul.addr %s4814, 24
        %s4816 = smul.addr %s4812, 48
        %s4817 = sadd.s32 %s4815, %s4816
        %s4818 = smul.addr %s4817, 8
        %s4819 = scalar_lea.vmem %s6, %s4818
      $region64: #{tpu_custom_call.1} parent=59 // pred_fallthru
        _
    $region60: #{tpu_custom_call.1} parent=5 // pred_fallthru
      _
  $region6: #{tpu_custom_call.1} parent=0 // loop_footer
    %s16 = sadd.s32 1, %s12
  $region7: #{tpu_custom_call.1} parent=0 // loop_footer_branch
    %11 = sbr.rel target = $region3
  $region8: #{tpu_custom_call.1} parent=0 // loop_exit
    _

</llo_original>
